<compile_context>
chip_gen: v6e
topology: v6e:2x2x1
jax: 0.10.0
libtpu: 0.0.40
codegen_flags: <defaults>
</compile_context>

<pallas_src>
import math

import jax
import jax.numpy as jnp
from jax import lax
from jax.experimental import pallas as pl
from jax.experimental.pallas import tpu as pltpu


DROPOUT_P = 0.4


def _attn_kernel(q_ref, k_ref, v_ref, mask_ref, u_ref, o_ref):
    """One (head, query-tile) slice per grid step.

    q_ref  : [TQ, D]
    k_ref  : [S,  D]
    v_ref  : [S,  D]
    mask_ref, u_ref : [TQ, S]
    o_ref  : [TQ, D]
    """
    d = q_ref.shape[-1]
    inv_sqrt_d = jnp.float32(1.0 / math.sqrt(d))

    # scores: contract over D on both operands (no explicit k.T / XLU transpose)
    s = lax.dot_general(
        q_ref[...], k_ref[...],
        dimension_numbers=(((1,), (1,)), ((), ())),
        preferred_element_type=jnp.float32,
    )
    s = s * inv_sqrt_d + mask_ref[...]

    # numerically stable, *unnormalized* softmax (normalization deferred)
    s = s - jnp.max(s, axis=-1, keepdims=True)
    p = jnp.exp(s)
    l = jnp.sum(p, axis=-1, keepdims=True)          # [TQ, 1] row sums

    # dropout keep decision straight from the precomputed uniforms
    keep = u_ref[...] >= jnp.float32(DROPOUT_P)
    p = jnp.where(keep, p, 0.0)

    # second matmul on the unnormalized, dropped weights
    out = jnp.dot(p, v_ref[...], preferred_element_type=jnp.float32)

    # fold softmax normalization + dropout survivor scale into one row-wise mul
    scale = pl.reciprocal(l, approx=True) * jnp.float32(1.0 / (1.0 - DROPOUT_P))
    o_ref[...] = (out * scale).astype(o_ref.dtype)


def _pick_q_tile(s):
    for t in (256, 192, 128, 64, 32, 16, 8):
        if s % t == 0:
            return t
    return s


@jax.jit
def attention_dropout(query, key, value, attn_mask, dropout_u):
    """query/key/value: [B, H, S, D]; attn_mask: [1, 1, S, S];
    dropout_u: uniform(0,1) randoms of shape [B, H, S, S]."""
    B, H, S, D = query.shape
    BH = B * H

    q = query.reshape(BH, S, D)
    k = key.reshape(BH, S, D)
    v = value.reshape(BH, S, D)
    mask2d = attn_mask.reshape(S, S)
    u = dropout_u.reshape(BH, S, S)

    TQ = _pick_q_tile(S)
    n_q = S // TQ

    out = pl.pallas_call(
        _attn_kernel,
        out_shape=jax.ShapeDtypeStruct((BH, S, D), query.dtype),
        grid=(BH, n_q),
        in_specs=[
            pl.BlockSpec((None, TQ, D), lambda h, qi: (h, qi, 0)),  # q tile
            pl.BlockSpec((None, S, D), lambda h, qi: (h, 0, 0)),    # k (full, per head)
            pl.BlockSpec((None, S, D), lambda h, qi: (h, 0, 0)),    # v (full, per head)
            pl.BlockSpec((TQ, S), lambda h, qi: (qi, 0)),           # mask tile
            pl.BlockSpec((None, TQ, S), lambda h, qi: (h, qi, 0)),  # dropout randoms
        ],
        out_specs=pl.BlockSpec((None, TQ, D), lambda h, qi: (h, qi, 0)),
        compiler_params=pltpu.CompilerParams(
            # no cross-iteration state -> fully parallel; lets v7x shard across both TCs
            dimension_semantics=("parallel", "parallel"),
        ),
    )(q, k, v, mask2d, u)

    return out.reshape(B, H, S, D)


def reference_attention_dropout(query, key, value, attn_mask, dropout_u):
    """Pure-JAX reference using the SAME dropout uniforms."""
    d = query.shape[-1]
    qk = jnp.einsum("bhqd,bhkd->bhqk", query, key) / math.sqrt(d)
    qk = qk + attn_mask
    attn = jax.nn.softmax(qk, axis=-1)
    keep = dropout_u >= DROPOUT_P
    attn = jnp.where(keep, attn / (1.0 - DROPOUT_P), 0.0)
    return jnp.einsum("bhqk,bhkd->bhqd", attn, value)


if __name__ == "__main__":
    # Shapes from the module: q/k/v [1, 5, 384, 640], mask [1, 1, 384, 384]
    B, H, S, D = 1, 5, 384, 640
    k0, k1, k2, k3, k4 = jax.random.split(jax.random.PRNGKey(0), 5)
    query = jax.random.normal(k0, (B, H, S, D), dtype=jnp.float32)
    key = jax.random.normal(k1, (B, H, S, D), dtype=jnp.float32)
    value = jax.random.normal(k2, (B, H, S, D), dtype=jnp.float32)
    attn_mask = jax.random.normal(k3, (1, 1, S, S), dtype=jnp.float32)
    dropout_u = jax.random.uniform(k4, (B, H, S, S), dtype=jnp.float32)

    out = attention_dropout(query, key, value, attn_mask, dropout_u)
    out = jax.block_until_ready(out)

    assert out.shape == (B, H, S, D), out.shape
    assert bool(jnp.isfinite(out).all())

    # Exact-semantics check against a pure-JAX reference that uses the same
    # dropout uniforms (only difference: approx reciprocal + op reordering).
    ref = reference_attention_dropout(query, key, value, attn_mask, dropout_u)
    rel = float(jnp.linalg.norm(out - ref) / (jnp.linalg.norm(ref) + 1e-6))
    assert rel < 1e-2, rel

    print("KERNEL_OK")
</pallas_src>

<mosaic_0001>
module attributes {stable_mosaic.version = 11 : i64} {
  func.func @_attn_kernel(%arg0: i32, %arg1: i32, %arg2: memref<1x192x640xf32, #tpu.memory_space<vmem>>, %arg3: memref<1x384x640xf32, #tpu.memory_space<vmem>>, %arg4: memref<1x384x640xf32, #tpu.memory_space<vmem>>, %arg5: memref<192x384xf32, #tpu.memory_space<vmem>>, %arg6: memref<1x192x384xf32, #tpu.memory_space<vmem>>, %arg7: memref<1x192x640xf32, #tpu.memory_space<vmem>>) attributes {dimension_semantics = [#tpu.dimension_semantics<parallel>, #tpu.dimension_semantics<parallel>], iteration_bounds = array<i64: 5, 2>, scalar_prefetch = 0 : i64, scratch_operands = 0 : i64, tpu.core_type = #tpu.core_type<tc>, window_params = [{transform_indices = @transform_0, window_bounds = array<i64: 1, 192, 640>}, {transform_indices = @transform_1, window_bounds = array<i64: 1, 384, 640>}, {transform_indices = @transform_2, window_bounds = array<i64: 1, 384, 640>}, {transform_indices = @transform_3, window_bounds = array<i64: 192, 384>}, {transform_indices = @transform_4, window_bounds = array<i64: 1, 192, 384>}, {transform_indices = @transform_5, window_bounds = array<i64: 1, 192, 640>}]} {
    %c0 = arith.constant 0 : index
    %c0_0 = arith.constant 0 : index
    %c0_1 = arith.constant 0 : index
    %0 = vector.load %arg2[%c0, %c0_0, %c0_1] : memref<1x192x640xf32, #tpu.memory_space<vmem>>, vector<1x192x640xf32>
    %1 = vector.shape_cast %0 : vector<1x192x640xf32> to vector<192x640xf32>
    %c0_2 = arith.constant 0 : index
    %c0_3 = arith.constant 0 : index
    %c0_4 = arith.constant 0 : index
    %2 = vector.load %arg3[%c0_2, %c0_3, %c0_4] : memref<1x384x640xf32, #tpu.memory_space<vmem>>, vector<1x384x640xf32>
    %3 = vector.shape_cast %2 : vector<1x384x640xf32> to vector<384x640xf32>
    %cst = arith.constant dense<0.000000e+00> : vector<192x384xf32>
    %4 = tpu.matmul %1, %3, %cst {dimension_numbers = #tpu.dot_dimension_numbers<[1], [1], [0], [0], [0, 0, 1, 0], [], []>} : vector<192x640xf32>, vector<384x640xf32>, vector<192x384xf32> -> vector<192x384xf32>
    %cst_5 = arith.constant 0.0395284705 : f32
    %5 = vector.broadcast %cst_5 : f32 to vector<192x384xf32>
    %6 = arith.mulf %4, %5 : vector<192x384xf32>
    %c0_6 = arith.constant 0 : index
    %c0_7 = arith.constant 0 : index
    %7 = vector.load %arg5[%c0_6, %c0_7] : memref<192x384xf32, #tpu.memory_space<vmem>>, vector<192x384xf32>
    %8 = arith.addf %6, %7 : vector<192x384xf32>
    %cst_8 = arith.constant dense<0xFF800000> : vector<192xf32>
    %9 = vector.multi_reduction <maximumf>, %8, %cst_8 [1] : vector<192x384xf32> to vector<192xf32>
    %10 = vector.shape_cast %9 : vector<192xf32> to vector<192x1xf32>
    %11 = vector.broadcast %10 : vector<192x1xf32> to vector<192x384xf32>
    %12 = arith.subf %8, %11 : vector<192x384xf32>
    %13 = math.exp %12 : vector<192x384xf32>
    %cst_9 = arith.constant dense<0.000000e+00> : vector<192xf32>
    %14 = vector.multi_reduction <add>, %13, %cst_9 [1] : vector<192x384xf32> to vector<192xf32>
    %15 = vector.shape_cast %14 : vector<192xf32> to vector<192x1xf32>
    %c0_10 = arith.constant 0 : index
    %c0_11 = arith.constant 0 : index
    %c0_12 = arith.constant 0 : index
    %16 = vector.load %arg6[%c0_10, %c0_11, %c0_12] : memref<1x192x384xf32, #tpu.memory_space<vmem>>, vector<1x192x384xf32>
    %17 = vector.shape_cast %16 : vector<1x192x384xf32> to vector<192x384xf32>
    %cst_13 = arith.constant 4.000000e-01 : f32
    %18 = vector.broadcast %cst_13 : f32 to vector<192x384xf32>
    %19 = arith.cmpf oge, %17, %18 : vector<192x384xf32>
    %cst_14 = arith.constant 0.000000e+00 : f32
    %20 = vector.broadcast %cst_14 : f32 to vector<192x384xf32>
    %21 = arith.select %19, %13, %20 : vector<192x384xi1>, vector<192x384xf32>
    %c0_15 = arith.constant 0 : index
    %c0_16 = arith.constant 0 : index
    %c0_17 = arith.constant 0 : index
    %22 = vector.load %arg4[%c0_15, %c0_16, %c0_17] : memref<1x384x640xf32, #tpu.memory_space<vmem>>, vector<1x384x640xf32>
    %23 = vector.shape_cast %22 : vector<1x384x640xf32> to vector<384x640xf32>
    %cst_18 = arith.constant dense<0.000000e+00> : vector<192x640xf32>
    %24 = tpu.matmul %21, %23, %cst_18 {dimension_numbers = #tpu.dot_dimension_numbers<[1], [0], [0], [1], [0, 0, 1, 1], [], []>} : vector<192x384xf32>, vector<384x640xf32>, vector<192x640xf32> -> vector<192x640xf32>
    %25 = tpu.reciprocal %15 {approx = true} : vector<192x1xf32> -> vector<192x1xf32>
    %cst_19 = arith.constant 1.66666663 : f32
    %26 = vector.broadcast %cst_19 : f32 to vector<192x1xf32>
    %27 = arith.mulf %25, %26 : vector<192x1xf32>
    %28 = vector.broadcast %27 : vector<192x1xf32> to vector<192x640xf32>
    %29 = arith.mulf %24, %28 : vector<192x640xf32>
    %c0_20 = arith.constant 0 : index
    %c0_21 = arith.constant 0 : index
    %c0_22 = arith.constant 0 : index
    %30 = vector.load %arg7[%c0_20, %c0_21, %c0_22] : memref<1x192x640xf32, #tpu.memory_space<vmem>>, vector<1x192x640xf32>
    %31 = vector.shape_cast %30 : vector<1x192x640xf32> to vector<192x640xf32>
    %32 = vector.shape_cast %29 : vector<192x640xf32> to vector<1x192x640xf32>
    tpu.vector_store %arg7[%c0_20, %c0_21, %c0_22], %32 {strides = array<i32>} : memref<1x192x640xf32, #tpu.memory_space<vmem>>, vector<1x192x640xf32>,
    return
  }
  func.func @transform_0(%arg0: i32, %arg1: i32) -> (i32, i32, i32) {
    %c0_i32 = arith.constant 0 : i32
    %c0_i32_0 = arith.constant 0 : i32
    return %arg0, %arg1, %c0_i32 : i32, i32, i32
  }
  func.func @transform_1(%arg0: i32, %arg1: i32) -> (i32, i32, i32) {
    %c0_i32 = arith.constant 0 : i32
    %c0_i32_0 = arith.constant 0 : i32
    %c0_i32_1 = arith.constant 0 : i32
    return %arg0, %c0_i32, %c0_i32_0 : i32, i32, i32
  }
  func.func @transform_2(%arg0: i32, %arg1: i32) -> (i32, i32, i32) {
    %c0_i32 = arith.constant 0 : i32
    %c0_i32_0 = arith.constant 0 : i32
    %c0_i32_1 = arith.constant 0 : i32
    return %arg0, %c0_i32, %c0_i32_0 : i32, i32, i32
  }
  func.func @transform_3(%arg0: i32, %arg1: i32) -> (i32, i32) {
    %c0_i32 = arith.constant 0 : i32
    %c0_i32_0 = arith.constant 0 : i32
    return %arg1, %c0_i32 : i32, i32
  }
  func.func @transform_4(%arg0: i32, %arg1: i32) -> (i32, i32, i32) {
    %c0_i32 = arith.constant 0 : i32
    %c0_i32_0 = arith.constant 0 : i32
    return %arg0, %arg1, %c0_i32 : i32, i32, i32
  }
  func.func @transform_5(%arg0: i32, %arg1: i32) -> (i32, i32, i32) {
    %c0_i32 = arith.constant 0 : i32
    %c0_i32_0 = arith.constant 0 : i32
    return %arg0, %arg1, %c0_i32 : i32, i32, i32
  }
}

</mosaic_0001>

<llo_original>
// kernel: attention_dropout.1
$region0: #{attention_dropout.1}
  #allocation0 [shape = 'u32[]', space=smem, size = 0x4, offset = 0x4, fixed_abs, tag = 'smem constant byte address 0x4 - core index']
  #allocation1 [shape = 'u32[144,128]{1,0:T(1,128)}', space=vmem, size = 0x12000, scoped, tag = 'internal scratch']
  %s0 = inlined_call_operand.hbm [shape: f32[5,384,640], index: 0, kind: input, shape index: {}]
  %s1 = inlined_call_operand.hbm [shape: f32[5,384,640], index: 1, kind: input, shape index: {}]
  %s2 = inlined_call_operand.hbm [shape: f32[5,384,640], index: 2, kind: input, shape index: {}]
  %s3 = inlined_call_operand.hbm [shape: f32[384,384], index: 3, kind: input, shape index: {}]
  %s4 = inlined_call_operand.hbm [shape: f32[5,384,384], index: 4, kind: input, shape index: {}]
  %s5 = inlined_call_operand.hbm [shape: f32[5,384,640], index: 5, kind: output, shape index: {}]
  %s6 = sld [smem:[#allocation0]]
  $region73: #{attention_dropout.1} parent=0
    _
  %s8 = ssub.s32 1, %s6
  %s9 = scalar_select 0, %s8, %s6
  $region1: #{attention_dropout.1} parent=0
    #allocation2 [shape = 'u8[983040]{0}', space=vmem, size = 0xf0000, scoped, tag = 'input window, operand 0']
    #allocation3 [shape = 's32[2]{0}', space=sflag, size = 0x8, scoped, tag = 'scoped memory for attention_dropout.1']
    #allocation4 [shape = 's32[2]{0}', space=sflag, size = 0x8, scoped, tag = 'scoped memory for attention_dropout.1']
    #allocation5 [shape = 'u8[1966080]{0}', space=vmem, size = 0x1e0000, scoped, tag = 'input window, operand 1']
    #allocation6 [shape = 's32[2]{0}', space=sflag, size = 0x8, scoped, tag = 'scoped memory for attention_dropout.1']
    #allocation7 [shape = 'u8[1966080]{0}', space=vmem, size = 0x1e0000, scoped, tag = 'input window, operand 2']
    #allocation8 [shape = 'u8[589824]{0}', space=vmem, size = 0x90000, scoped, tag = 'input window, operand 3']
    #allocation9 [shape = 's32[2]{0}', space=sflag, size = 0x8, scoped, tag = 'scoped memory for attention_dropout.1']
    #allocation10 [shape = 'u8[589824]{0}', space=vmem, size = 0x90000, scoped, tag = 'input window, operand 4']
    #allocation11 [shape = 'u8[983040]{0}', space=vmem, size = 0xf0000, scoped, tag = 'output window, operand 0']
    %10 = vsyncpa [#allocation3], 0
    %s11 = scalar_lea.sflag [#allocation3], 1
    %12 = vsyncpa %s11, 0
    %13 = vsyncpa [#allocation6], 0
    %s14 = scalar_lea.sflag [#allocation6], 1
    %15 = vsyncpa %s14, 0
    %16 = vsyncpa [#allocation9], 0
    %s17 = scalar_lea.sflag [#allocation9], 1
    %18 = vsyncpa %s17, 0
    %19 = vsyncpa [#allocation4], 0
    %s20 = scalar_lea.sflag [#allocation4], 1
    %21 = vsyncpa %s20, 0
    loop: start=0, step=1, limit=12
    $region2: #{attention_dropout.1} parent=1 // loop_pre_header
      _
    $region3: #{attention_dropout.1} parent=1 // loop_header
      %s23 = sphi 0, %s27
      %p24 = scmp.ge.s32.totalorder %s23, 12
      %s30 = sphi 0, %s42
      %s31 = sphi 0, %s38
      %s32 = sphi 0, %s30
      %s33 = sphi 0, %s31
      %s34 = sphi 0, %s32
      %s35 = sphi 0, %s33
      %s47 = sphi 0, %s49
      %s50 = sphi 0, %s47
      %s51 = sphi 0, %s50
      %s67 = sphi 0, %s51
      %s73 = sphi 0, %s75
      %s76 = sphi 0, %s73
      %s77 = sphi 0, %s76
      %s93 = sphi 0, %s77
      %s99 = sphi 0, %s101
      %s102 = sphi 0, %s99
      %s103 = sphi 0, %s102
      %s119 = sphi 0, %s103
      %s125 = sphi 0, %s127
      %s128 = sphi 0, %s125
      %s129 = sphi 0, %s128
      %s145 = sphi 0, %s129
      %s153 = sphi 0, %s155
      %s156 = sphi 0, %s153
      %s157 = sphi 0, %s156
      %s173 = sphi 0, %s157
      %s181 = sphi 0, %s183
      %s184 = sphi 0, %s181
      %s185 = sphi 0, %s184
      %s201 = sphi 0, %s185
    $region4: #{attention_dropout.1} parent=1 // loop_header_branch
      %26 = sbr.rel (%p24) target = $region8
    $region5: #{attention_dropout.1} parent=1 // loop_body
      %s28 = ssub.s32 %s23, 1
      %s29 = ssub.s32 %s23, 2
      %s36 = sadd.s32 1, %s31
      %p37 = scmp.ge.s32.totalorder %s36, 2
      %s38 = scalar_select %p37, 0, %s36
      %s39 = sadd.s32 1, %s30
      %s40 = scalar_select %p37, %s39, %s30
      %p41 = scmp.ge.s32.totalorder %s40, 5
      %s42 = scalar_select %p41, 0, %s40
      %s43 = ssub.s32 %s30, %s42
      %s44 = ssub.s32 %s31, %s38
      %s45 = sor.u32 %s43, %s44
      %p46 = scmp.eq.s32.totalorder %s45, 0
      %s48 = sadd.s32 %s47, 1
      %s49 = scalar_select %p46, %s47, %s48
      %p52 = pneg %p46
      %p53 = scmp.eq.s32.totalorder %s23, 9
      %p54 = por %p52, %p53
      %p55 = scmp.ne.s32.totalorder %s47, %s50
      %p56 = scmp.eq.s32.totalorder %s23, 0
      %p57 = por %p55, %p56
      %p58 = scmp.ne.s32.totalorder %s47, %s50
      %p59 = scmp.eq.s32.totalorder %s28, 9
      %p60 = por %p58, %p59
      %p61 = scmp.ne.s32.totalorder %s50, %s51
      %p62 = scmp.eq.s32.totalorder %s28, 0
      %p63 = por %p61, %p62
      %p64 = scmp.ne.s32.totalorder %s50, %s51
      %p65 = scmp.eq.s32.totalorder %s29, 9
      %p66 = por %p64, %p65
      %p68 = scmp.ne.s32.totalorder %s51, %s67
      %p69 = scmp.eq.s32.totalorder %s29, 0
      %p70 = por %p68, %p69
      %s71 = ssub.s32 %s30, %s42
      %p72 = scmp.eq.s32.totalorder %s71, 0
      %s74 = sadd.s32 %s73, 1
      %s75 = scalar_select %p72, %s73, %s74
      %p78 = pneg %p72
      %p79 = scmp.eq.s32.totalorder %s23, 9
      %p80 = por %p78, %p79
      %p81 = scmp.ne.s32.totalorder %s73, %s76
      %p82 = scmp.eq.s32.totalorder %s23, 0
      %p83 = por %p81, %p82
      %p84 = scmp.ne.s32.totalorder %s73, %s76
      %p85 = scmp.eq.s32.totalorder %s28, 9
      %p86 = por %p84, %p85
      %p87 = scmp.ne.s32.totalorder %s76, %s77
      %p88 = scmp.eq.s32.totalorder %s28, 0
      %p89 = por %p87, %p88
      %p90 = scmp.ne.s32.totalorder %s76, %s77
      %p91 = scmp.eq.s32.totalorder %s29, 9
      %p92 = por %p90, %p91
      %p94 = scmp.ne.s32.totalorder %s77, %s93
      %p95 = scmp.eq.s32.totalorder %s29, 0
      %p96 = por %p94, %p95
      %s97 = ssub.s32 %s30, %s42
      %p98 = scmp.eq.s32.totalorder %s97, 0
      %s100 = sadd.s32 %s99, 1
      %s101 = scalar_select %p98, %s99, %s100
      %p104 = pneg %p98
      %p105 = scmp.eq.s32.totalorder %s23, 9
      %p106 = por %p104, %p105
      %p107 = scmp.ne.s32.totalorder %s99, %s102
      %p108 = scmp.eq.s32.totalorder %s23, 0
      %p109 = por %p107, %p108
      %p110 = scmp.ne.s32.totalorder %s99, %s102
      %p111 = scmp.eq.s32.totalorder %s28, 9
      %p112 = por %p110, %p111
      %p113 = scmp.ne.s32.totalorder %s102, %s103
      %p114 = scmp.eq.s32.totalorder %s28, 0
      %p115 = por %p113, %p114
      %p116 = scmp.ne.s32.totalorder %s102, %s103
      %p117 = scmp.eq.s32.totalorder %s29, 9
      %p118 = por %p116, %p117
      %p120 = scmp.ne.s32.totalorder %s103, %s119
      %p121 = scmp.eq.s32.totalorder %s29, 0
      %p122 = por %p120, %p121
      %s123 = ssub.s32 %s31, %s38
      %p124 = scmp.eq.s32.totalorder %s123, 0
      %s126 = sadd.s32 %s125, 1
      %s127 = scalar_select %p124, %s125, %s126
      %p130 = pneg %p124
      %p131 = scmp.eq.s32.totalorder %s23, 9
      %p132 = por %p130, %p131
      %p133 = scmp.ne.s32.totalorder %s125, %s128
      %p134 = scmp.eq.s32.totalorder %s23, 0
      %p135 = por %p133, %p134
      %p136 = scmp.ne.s32.totalorder %s125, %s128
      %p137 = scmp.eq.s32.totalorder %s28, 9
      %p138 = por %p136, %p137
      %p139 = scmp.ne.s32.totalorder %s128, %s129
      %p140 = scmp.eq.s32.totalorder %s28, 0
      %p141 = por %p139, %p140
      %p142 = scmp.ne.s32.totalorder %s128, %s129
      %p143 = scmp.eq.s32.totalorder %s29, 9
      %p144 = por %p142, %p143
      %p146 = scmp.ne.s32.totalorder %s129, %s145
      %p147 = scmp.eq.s32.totalorder %s29, 0
      %p148 = por %p146, %p147
      %s149 = ssub.s32 %s30, %s42
      %s150 = ssub.s32 %s31, %s38
      %s151 = sor.u32 %s149, %s150
      %p152 = scmp.eq.s32.totalorder %s151, 0
      %s154 = sadd.s32 %s153, 1
      %s155 = scalar_select %p152, %s153, %s154
      %p158 = pneg %p152
      %p159 = scmp.eq.s32.totalorder %s23, 9
      %p160 = por %p158, %p159
      %p161 = scmp.ne.s32.totalorder %s153, %s156
      %p162 = scmp.eq.s32.totalorder %s23, 0
      %p163 = por %p161, %p162
      %p164 = scmp.ne.s32.totalorder %s153, %s156
      %p165 = scmp.eq.s32.totalorder %s28, 9
      %p166 = por %p164, %p165
      %p167 = scmp.ne.s32.totalorder %s156, %s157
      %p168 = scmp.eq.s32.totalorder %s28, 0
      %p169 = por %p167, %p168
      %p170 = scmp.ne.s32.totalorder %s156, %s157
      %p171 = scmp.eq.s32.totalorder %s29, 9
      %p172 = por %p170, %p171
      %p174 = scmp.ne.s32.totalorder %s157, %s173
      %p175 = scmp.eq.s32.totalorder %s29, 0
      %p176 = por %p174, %p175
      %s177 = ssub.s32 %s30, %s42
      %s178 = ssub.s32 %s31, %s38
      %s179 = sor.u32 %s177, %s178
      %p180 = scmp.eq.s32.totalorder %s179, 0
      %s182 = sadd.s32 %s181, 1
      %s183 = scalar_select %p180, %s181, %s182
      %p186 = pneg %p180
      %p187 = scmp.eq.s32.totalorder %s23, 9
      %p188 = por %p186, %p187
      %p189 = scmp.ne.s32.totalorder %s181, %s184
      %p190 = scmp.eq.s32.totalorder %s23, 0
      %p191 = por %p189, %p190
      %p192 = scmp.ne.s32.totalorder %s181, %s184
      %p193 = scmp.eq.s32.totalorder %s28, 9
      %p194 = por %p192, %p193
      %p195 = scmp.ne.s32.totalorder %s184, %s185
      %p196 = scmp.eq.s32.totalorder %s28, 0
      %p197 = por %p195, %p196
      %p198 = scmp.ne.s32.totalorder %s184, %s185
      %p199 = scmp.eq.s32.totalorder %s29, 9
      %p200 = por %p198, %p199
      %p202 = scmp.ne.s32.totalorder %s185, %s201
      %p203 = scmp.eq.s32.totalorder %s29, 0
      %p204 = por %p202, %p203
      %p205 = scmp.le.s32.totalorder 1, %s23
      %p206 = scmp.lt.s32.totalorder %s23, 11
      %p207 = pnand %p205, %p206
      %p208 = pneg %p207
      // Predicated region
      $region9: #{attention_dropout.1} parent=5 // pred_check
        _
      $region10: #{attention_dropout.1} parent=5 // pred_check_branch
        %210 = sbr.rel (%p207) target = $region12
      $region11: #{attention_dropout.1} parent=5 // pred_region
        %s211 = ssub.s32 %s23, 1
      $region12: #{attention_dropout.1} parent=5 // pred_fallthru
        _
      %p212 = scmp.lt.s32.totalorder %s23, 10
      // Predicated region
      $region13: #{attention_dropout.1} parent=5 // pred_check
        %p213 = pneg %p212
      $region14: #{attention_dropout.1} parent=5 // pred_check_branch
        %215 = sbr.rel (%p213) target = $region16
      $region15: #{attention_dropout.1} parent=5 // pred_region
        // Predicated region
        $region17: #{attention_dropout.1} parent=15 // pred_check
          %p216 = pneg %p57
        $region18: #{attention_dropout.1} parent=15 // pred_check_branch
          %218 = sbr.rel (%p216) target = $region20
        $region19: #{attention_dropout.1} parent=15 // pred_region
          %s219 = sand.u32 %s47, 1
          %s220 = scalar_lea.sflag [#allocation3], %s219
          %s221 = sand.u32 %s47, 1
          %s222 = smul.addr %s221, 960
          %s223 = scalar_lea.vmem [#allocation2], %s222
          %s224 = smul.u32 24, %s31
          %s226 = ssub.s32 15360, 15360
          %227 = vsyncadd %s220, %s226
          %s228 = smul.addr %s224, 5
          %s229 = smul.addr %s30, 240
          %s230 = sadd.s32 %s228, %s229
          %s231 = smul.addr %s230, 128
          %s232 = scalar_lea.hbm %s0, %s231
          %s233 = sshll.u32 %s223, 4
          %s234 = int_to_ptr.vmem [resolvable:$true] %s233
          %239 = dma.hbm_to_vmem [thread:$0]  %s232, 15360, %s234, %s220, 640, 640, 40
        $region20: #{attention_dropout.1} parent=15 // pred_fallthru
          _
        // Predicated region
        $region21: #{attention_dropout.1} parent=15 // pred_check
          %p240 = pneg %p83
        $region22: #{attention_dropout.1} parent=15 // pred_check_branch
          %242 = sbr.rel (%p240) target = $region24
        $region23: #{attention_dropout.1} parent=15 // pred_region
          %s243 = sand.u32 %s23, 1
          %s244 = scalar_lea.sflag [#allocation6], %s243
          %s245 = sand.u32 %s73, 1
          %s246 = smul.addr %s245, 1920
          %s247 = scalar_lea.vmem [#allocation5], %s246
          %s249 = ssub.s32 30720, 30720
          %250 = vsyncadd %s244, %s249
          %s251 = smul.addr %s30, 240
          %s252 = smul.addr %s251, 128
          %s253 = scalar_lea.hbm %s1, %s252
          %s254 = sshll.u32 %s247, 4
          %s255 = int_to_ptr.vmem [resolvable:$true] %s254
          %260 = dma.hbm_to_vmem [thread:$0]  %s253, 30720, %s255, %s244, 640, 640, 40
        $region24: #{attention_dropout.1} parent=15 // pred_fallthru
          _
        // Predicated region
        $region25: #{attention_dropout.1} parent=15 // pred_check
          %p261 = pneg %p109
        $region26: #{attention_dropout.1} parent=15 // pred_check_branch
          %263 = sbr.rel (%p261) target = $region28
        $region27: #{attention_dropout.1} parent=15 // pred_region
          %s264 = sand.u32 %s23, 1
          %s265 = scalar_lea.sflag [#allocation6], %s264
          %s266 = sand.u32 %s99, 1
          %s267 = smul.addr %s266, 1920
          %s268 = scalar_lea.vmem [#allocation7], %s267
          %s270 = ssub.s32 30720, 30720
          %271 = vsyncadd %s265, %s270
          %s272 = smul.addr %s30, 240
          %s273 = smul.addr %s272, 128
          %s274 = scalar_lea.hbm %s2, %s273
          %s275 = sshll.u32 %s268, 4
          %s276 = int_to_ptr.vmem [resolvable:$true] %s275
          %281 = dma.hbm_to_vmem [thread:$0]  %s274, 30720, %s276, %s265, 640, 640, 40
        $region28: #{attention_dropout.1} parent=15 // pred_fallthru
          _
        // Predicated region
        $region29: #{attention_dropout.1} parent=15 // pred_check
          %p282 = pneg %p135
        $region30: #{attention_dropout.1} parent=15 // pred_check_branch
          %284 = sbr.rel (%p282) target = $region32
        $region31: #{attention_dropout.1} parent=15 // pred_region
          %s285 = sand.u32 %s23, 1
          %s286 = scalar_lea.sflag [#allocation9], %s285
          %s287 = sand.u32 %s125, 1
          %s288 = smul.addr %s287, 576
          %s289 = scalar_lea.vmem [#allocation8], %s288
          %s290 = smul.u32 24, %s31
          %s292 = ssub.s32 9216, 9216
          %293 = vsyncadd %s286, %s292
          %s294 = smul.addr %s290, 3
          %s295 = smul.addr %s294, 128
          %s296 = scalar_lea.hbm %s3, %s295
          %s297 = sshll.u32 %s289, 4
          %s298 = int_to_ptr.vmem [resolvable:$true] %s297
          %303 = dma.hbm_to_vmem [thread:$0]  %s296, 9216, %s298, %s286, 384, 384, 24
        $region32: #{attention_dropout.1} parent=15 // pred_fallthru
          _
        // Predicated region
        $region33: #{attention_dropout.1} parent=15 // pred_check
          %p304 = pneg %p163
        $region34: #{attention_dropout.1} parent=15 // pred_check_branch
          %306 = sbr.rel (%p304) target = $region36
        $region35: #{attention_dropout.1} parent=15 // pred_region
          %s307 = sand.u32 %s23, 1
          %s308 = scalar_lea.sflag [#allocation9], %s307
          %s309 = sand.u32 %s153, 1
          %s310 = smul.addr %s309, 576
          %s311 = scalar_lea.vmem [#allocation10], %s310
          %s312 = smul.u32 24, %s31
          %s314 = ssub.s32 9216, 9216
          %315 = vsyncadd %s308, %s314
          %s316 = smul.addr %s312, 3
          %s317 = smul.addr %s30, 144
          %s318 = sadd.s32 %s316, %s317
          %s319 = smul.addr %s318, 128
          %s320 = scalar_lea.hbm %s4, %s319
          %s321 = sshll.u32 %s311, 4
          %s322 = int_to_ptr.vmem [resolvable:$true] %s321
          %327 = dma.hbm_to_vmem [thread:$0]  %s320, 9216, %s322, %s308, 384, 384, 24
        $region36: #{attention_dropout.1} parent=15 // pred_fallthru
          _
      $region16: #{attention_dropout.1} parent=5 // pred_fallthru
        _
      %p328 = scmp.le.s32.totalorder 1, %s23
      %p329 = scmp.lt.s32.totalorder %s23, 11
      %p330 = pnand %p328, %p329
      %p331 = pneg %p330
      // Predicated region
      $region37: #{attention_dropout.1} parent=5 // pred_check
        _
      $region38: #{attention_dropout.1} parent=5 // pred_check_branch
        %333 = sbr.rel (%p330) target = $region40
      $region39: #{attention_dropout.1} parent=5 // pred_region
        %s334 = ssub.s32 %s23, 1
        %s335 = sand.u32 %s50, 1
        %s336 = scalar_lea.sflag [#allocation3], %s335
        %s337 = sand.u32 %s50, 1
        %s338 = smul.addr %s337, 960
        %s339 = scalar_lea.vmem [#allocation2], %s338
        // Predicated region
        $region41: #{attention_dropout.1} parent=39 // pred_check
          %p340 = pneg %p63
        $region42: #{attention_dropout.1} parent=39 // pred_check_branch
          %342 = sbr.rel (%p340) target = $region44
        $region43: #{attention_dropout.1} parent=39 // pred_region
          %343 = dma.done %s336, 15360
        $region44: #{attention_dropout.1} parent=39 // pred_fallthru
          _
        %s344 = sand.u32 %s28, 1
        %s345 = scalar_lea.sflag [#allocation6], %s344
        %s346 = sand.u32 %s76, 1
        %s347 = smul.addr %s346, 1920
        %s348 = scalar_lea.vmem [#allocation5], %s347
        // Predicated region
        $region45: #{attention_dropout.1} parent=39 // pred_check
          %p349 = pneg %p89
        $region46: #{attention_dropout.1} parent=39 // pred_check_branch
          %351 = sbr.rel (%p349) target = $region48
        $region47: #{attention_dropout.1} parent=39 // pred_region
          %352 = dma.done %s345, 30720
        $region48: #{attention_dropout.1} parent=39 // pred_fallthru
          _
        %s353 = sand.u32 %s28, 1
        %s354 = scalar_lea.sflag [#allocation6], %s353
        %s355 = sand.u32 %s102, 1
        %s356 = smul.addr %s355, 1920
        %s357 = scalar_lea.vmem [#allocation7], %s356
        // Predicated region
        $region49: #{attention_dropout.1} parent=39 // pred_check
          %p358 = pneg %p115
        $region50: #{attention_dropout.1} parent=39 // pred_check_branch
          %360 = sbr.rel (%p358) target = $region52
        $region51: #{attention_dropout.1} parent=39 // pred_region
          %361 = dma.done %s354, 30720
        $region52: #{attention_dropout.1} parent=39 // pred_fallthru
          _
        %s362 = sand.u32 %s28, 1
        %s363 = scalar_lea.sflag [#allocation9], %s362
        %s364 = sand.u32 %s128, 1
        %s365 = smul.addr %s364, 576
        %s366 = scalar_lea.vmem [#allocation8], %s365
        // Predicated region
        $region53: #{attention_dropout.1} parent=39 // pred_check
          %p367 = pneg %p141
        $region54: #{attention_dropout.1} parent=39 // pred_check_branch
          %369 = sbr.rel (%p367) target = $region56
        $region55: #{attention_dropout.1} parent=39 // pred_region
          %370 = dma.done %s363, 9216
        $region56: #{attention_dropout.1} parent=39 // pred_fallthru
          _
        %s371 = sand.u32 %s28, 1
        %s372 = scalar_lea.sflag [#allocation9], %s371
        %s373 = sand.u32 %s156, 1
        %s374 = smul.addr %s373, 576
        %s375 = scalar_lea.vmem [#allocation10], %s374
        // Predicated region
        $region57: #{attention_dropout.1} parent=39 // pred_check
          %p376 = pneg %p169
        $region58: #{attention_dropout.1} parent=39 // pred_check_branch
          %378 = sbr.rel (%p376) target = $region60
        $region59: #{attention_dropout.1} parent=39 // pred_region
          %379 = dma.done %s372, 9216
        $region60: #{attention_dropout.1} parent=39 // pred_fallthru
          _
        %s380 = sand.u32 %s50, 1
        %s381 = scalar_lea.sflag [#allocation3], %s380
        %s382 = sand.u32 %s50, 1
        %s383 = smul.addr %s382, 960
        %s384 = scalar_lea.vmem [#allocation2], %s383
        %p385 = pneg %p63
        %p386 = pneg %p60
        %s387 = sand.u32 %s28, 1
        %s388 = scalar_lea.sflag [#allocation6], %s387
        %s389 = sand.u32 %s76, 1
        %s390 = smul.addr %s389, 1920
        %s391 = scalar_lea.vmem [#allocation5], %s390
        %p392 = pneg %p89
        %p393 = pneg %p86
        %s394 = sand.u32 %s28, 1
        %s395 = scalar_lea.sflag [#allocation6], %s394
        %s396 = sand.u32 %s102, 1
        %s397 = smul.addr %s396, 1920
        %s398 = scalar_lea.vmem [#allocation7], %s397
        %p399 = pneg %p115
        %p400 = pneg %p112
        %s401 = sand.u32 %s28, 1
        %s402 = scalar_lea.sflag [#allocation9], %s401
        %s403 = sand.u32 %s128, 1
        %s404 = smul.addr %s403, 576
        %s405 = scalar_lea.vmem [#allocation8], %s404
        %p406 = pneg %p141
        %p407 = pneg %p138
        %s408 = sand.u32 %s28, 1
        %s409 = scalar_lea.sflag [#allocation9], %s408
        %s410 = sand.u32 %s156, 1
        %s411 = smul.addr %s410, 576
        %s412 = scalar_lea.vmem [#allocation10], %s411
        %p413 = pneg %p169
        %p414 = pneg %p166
        %p415 = pneg %p197
        %p416 = pneg %p194
        %s417 = sand.u32 %s184, 1
        %s418 = scalar_lea.sflag [#allocation4], %s417
        %s419 = sand.u32 %s184, 1
        %s420 = smul.addr %s419, 960
        %s421 = scalar_lea.vmem [#allocation11], %s420
        %s422 = smul.u32 24, %s33
        %s423 = smul.u32 24, %s33
        %s424 = smul.u32 24, %s33
        %s425 = smul.u32 24, %s33
        %v426 = vld [vmem:[%s339] sm:$0xff]
        %v427 = vld [vmem:[%s339 + $0x8] sm:$0xff]
        %v428 = vld [vmem:[%s339 + $0x10] sm:$0xff]
        %v429 = vld [vmem:[%s339 + $0x18] sm:$0xff]
        %v430 = vld [vmem:[%s339 + $0x20] sm:$0xff]
        %v431 = vld [vmem:[%s339 + $0x28] sm:$0xff]
        %v432 = vld [vmem:[%s339 + $0x30] sm:$0xff]
        %v433 = vld [vmem:[%s339 + $0x38] sm:$0xff]
        %v434 = vld [vmem:[%s339 + $0x40] sm:$0xff]
        %v435 = vld [vmem:[%s339 + $0x48] sm:$0xff]
        %v436 = vld [vmem:[%s339 + $0x50] sm:$0xff]
        %v437 = vld [vmem:[%s339 + $0x58] sm:$0xff]
        %v438 = vld [vmem:[%s339 + $0x60] sm:$0xff]
        %v439 = vld [vmem:[%s339 + $0x68] sm:$0xff]
        %v440 = vld [vmem:[%s339 + $0x70] sm:$0xff]
        %v441 = vld [vmem:[%s339 + $0x78] sm:$0xff]
        %v442 = vld [vmem:[%s339 + $0x80] sm:$0xff]
        %v443 = vld [vmem:[%s339 + $0x88] sm:$0xff]
        %v444 = vld [vmem:[%s339 + $0x90] sm:$0xff]
        %v445 = vld [vmem:[%s339 + $0x98] sm:$0xff]
        %v446 = vld [vmem:[%s339 + $0xa0] sm:$0xff]
        %v447 = vld [vmem:[%s339 + $0xa8] sm:$0xff]
        %v448 = vld [vmem:[%s339 + $0xb0] sm:$0xff]
        %v449 = vld [vmem:[%s339 + $0xb8] sm:$0xff]
        %v450 = vld [vmem:[%s339 + $0xc0] sm:$0xff]
        %v451 = vld [vmem:[%s339 + $0xc8] sm:$0xff]
        %v452 = vld [vmem:[%s339 + $0xd0] sm:$0xff]
        %v453 = vld [vmem:[%s339 + $0xd8] sm:$0xff]
        %v454 = vld [vmem:[%s339 + $0xe0] sm:$0xff]
        %v455 = vld [vmem:[%s339 + $0xe8] sm:$0xff]
        %v456 = vld [vmem:[%s339 + $0xf0] sm:$0xff]
        %v457 = vld [vmem:[%s339 + $0xf8] sm:$0xff]
        %v458 = vld [vmem:[%s339 + $0x100] sm:$0xff]
        %v459 = vld [vmem:[%s339 + $0x108] sm:$0xff]
        %v460 = vld [vmem:[%s339 + $0x110] sm:$0xff]
        %v461 = vld [vmem:[%s339 + $0x118] sm:$0xff]
        %v462 = vld [vmem:[%s339 + $0x120] sm:$0xff]
        %v463 = vld [vmem:[%s339 + $0x128] sm:$0xff]
        %v464 = vld [vmem:[%s339 + $0x130] sm:$0xff]
        %v465 = vld [vmem:[%s339 + $0x138] sm:$0xff]
        %v466 = vld [vmem:[%s339 + $0x140] sm:$0xff]
        %v467 = vld [vmem:[%s339 + $0x148] sm:$0xff]
        %v468 = vld [vmem:[%s339 + $0x150] sm:$0xff]
        %v469 = vld [vmem:[%s339 + $0x158] sm:$0xff]
        %v470 = vld [vmem:[%s339 + $0x160] sm:$0xff]
        %v471 = vld [vmem:[%s339 + $0x168] sm:$0xff]
        %v472 = vld [vmem:[%s339 + $0x170] sm:$0xff]
        %v473 = vld [vmem:[%s339 + $0x178] sm:$0xff]
        %v474 = vld [vmem:[%s339 + $0x180] sm:$0xff]
        %v475 = vld [vmem:[%s339 + $0x188] sm:$0xff]
        %v476 = vld [vmem:[%s339 + $0x190] sm:$0xff]
        %v477 = vld [vmem:[%s339 + $0x198] sm:$0xff]
        %v478 = vld [vmem:[%s339 + $0x1a0] sm:$0xff]
        %v479 = vld [vmem:[%s339 + $0x1a8] sm:$0xff]
        %v480 = vld [vmem:[%s339 + $0x1b0] sm:$0xff]
        %v481 = vld [vmem:[%s339 + $0x1b8] sm:$0xff]
        %v482 = vld [vmem:[%s339 + $0x1c0] sm:$0xff]
        %v483 = vld [vmem:[%s339 + $0x1c8] sm:$0xff]
        %v484 = vld [vmem:[%s339 + $0x1d0] sm:$0xff]
        %v485 = vld [vmem:[%s339 + $0x1d8] sm:$0xff]
        %v486 = vld [vmem:[%s339 + $0x1e0] sm:$0xff]
        %v487 = vld [vmem:[%s339 + $0x1e8] sm:$0xff]
        %v488 = vld [vmem:[%s339 + $0x1f0] sm:$0xff]
        %v489 = vld [vmem:[%s339 + $0x1f8] sm:$0xff]
        %v490 = vld [vmem:[%s339 + $0x200] sm:$0xff]
        %v491 = vld [vmem:[%s339 + $0x208] sm:$0xff]
        %v492 = vld [vmem:[%s339 + $0x210] sm:$0xff]
        %v493 = vld [vmem:[%s339 + $0x218] sm:$0xff]
        %v494 = vld [vmem:[%s339 + $0x220] sm:$0xff]
        %v495 = vld [vmem:[%s339 + $0x228] sm:$0xff]
        %v496 = vld [vmem:[%s339 + $0x230] sm:$0xff]
        %v497 = vld [vmem:[%s339 + $0x238] sm:$0xff]
        %v498 = vld [vmem:[%s339 + $0x240] sm:$0xff]
        %v499 = vld [vmem:[%s339 + $0x248] sm:$0xff]
        %v500 = vld [vmem:[%s339 + $0x250] sm:$0xff]
        %v501 = vld [vmem:[%s339 + $0x258] sm:$0xff]
        %v502 = vld [vmem:[%s339 + $0x260] sm:$0xff]
        %v503 = vld [vmem:[%s339 + $0x268] sm:$0xff]
        %v504 = vld [vmem:[%s339 + $0x270] sm:$0xff]
        %v505 = vld [vmem:[%s339 + $0x278] sm:$0xff]
        %v506 = vld [vmem:[%s339 + $0x280] sm:$0xff]
        %v507 = vld [vmem:[%s339 + $0x288] sm:$0xff]
        %v508 = vld [vmem:[%s339 + $0x290] sm:$0xff]
        %v509 = vld [vmem:[%s339 + $0x298] sm:$0xff]
        %v510 = vld [vmem:[%s339 + $0x2a0] sm:$0xff]
        %v511 = vld [vmem:[%s339 + $0x2a8] sm:$0xff]
        %v512 = vld [vmem:[%s339 + $0x2b0] sm:$0xff]
        %v513 = vld [vmem:[%s339 + $0x2b8] sm:$0xff]
        %v514 = vld [vmem:[%s339 + $0x2c0] sm:$0xff]
        %v515 = vld [vmem:[%s339 + $0x2c8] sm:$0xff]
        %v516 = vld [vmem:[%s339 + $0x2d0] sm:$0xff]
        %v517 = vld [vmem:[%s339 + $0x2d8] sm:$0xff]
        %v518 = vld [vmem:[%s339 + $0x2e0] sm:$0xff]
        %v519 = vld [vmem:[%s339 + $0x2e8] sm:$0xff]
        %v520 = vld [vmem:[%s339 + $0x2f0] sm:$0xff]
        %v521 = vld [vmem:[%s339 + $0x2f8] sm:$0xff]
        %v522 = vld [vmem:[%s339 + $0x300] sm:$0xff]
        %v523 = vld [vmem:[%s339 + $0x308] sm:$0xff]
        %v524 = vld [vmem:[%s339 + $0x310] sm:$0xff]
        %v525 = vld [vmem:[%s339 + $0x318] sm:$0xff]
        %v526 = vld [vmem:[%s339 + $0x320] sm:$0xff]
        %v527 = vld [vmem:[%s339 + $0x328] sm:$0xff]
        %v528 = vld [vmem:[%s339 + $0x330] sm:$0xff]
        %v529 = vld [vmem:[%s339 + $0x338] sm:$0xff]
        %v530 = vld [vmem:[%s339 + $0x340] sm:$0xff]
        %v531 = vld [vmem:[%s339 + $0x348] sm:$0xff]
        %v532 = vld [vmem:[%s339 + $0x350] sm:$0xff]
        %v533 = vld [vmem:[%s339 + $0x358] sm:$0xff]
        %v534 = vld [vmem:[%s339 + $0x360] sm:$0xff]
        %v535 = vld [vmem:[%s339 + $0x368] sm:$0xff]
        %v536 = vld [vmem:[%s339 + $0x370] sm:$0xff]
        %v537 = vld [vmem:[%s339 + $0x378] sm:$0xff]
        %v538 = vld [vmem:[%s339 + $0x380] sm:$0xff]
        %v539 = vld [vmem:[%s339 + $0x388] sm:$0xff]
        %v540 = vld [vmem:[%s339 + $0x390] sm:$0xff]
        %v541 = vld [vmem:[%s339 + $0x398] sm:$0xff]
        %v542 = vld [vmem:[%s339 + $0x3a0] sm:$0xff]
        %v543 = vld [vmem:[%s339 + $0x3a8] sm:$0xff]
        %v544 = vld [vmem:[%s339 + $0x3b0] sm:$0xff]
        %v545 = vld [vmem:[%s339 + $0x3b8] sm:$0xff]
        %v546 = vld [vmem:[%s348] sm:$0xff]
        %v547 = vld [vmem:[%s348 + $0x8] sm:$0xff]
        %v548 = vld [vmem:[%s348 + $0x10] sm:$0xff]
        %v549 = vld [vmem:[%s348 + $0x18] sm:$0xff]
        %v550 = vld [vmem:[%s348 + $0x20] sm:$0xff]
        %v551 = vld [vmem:[%s348 + $0x28] sm:$0xff]
        %v552 = vld [vmem:[%s348 + $0x30] sm:$0xff]
        %v553 = vld [vmem:[%s348 + $0x38] sm:$0xff]
        %v554 = vld [vmem:[%s348 + $0x40] sm:$0xff]
        %v555 = vld [vmem:[%s348 + $0x48] sm:$0xff]
        %v556 = vld [vmem:[%s348 + $0x50] sm:$0xff]
        %v557 = vld [vmem:[%s348 + $0x58] sm:$0xff]
        %v558 = vld [vmem:[%s348 + $0x60] sm:$0xff]
        %v559 = vld [vmem:[%s348 + $0x68] sm:$0xff]
        %v560 = vld [vmem:[%s348 + $0x70] sm:$0xff]
        %v561 = vld [vmem:[%s348 + $0x78] sm:$0xff]
        %v562 = vld [vmem:[%s348 + $0x80] sm:$0xff]
        %v563 = vld [vmem:[%s348 + $0x88] sm:$0xff]
        %v564 = vld [vmem:[%s348 + $0x90] sm:$0xff]
        %v565 = vld [vmem:[%s348 + $0x98] sm:$0xff]
        %v566 = vld [vmem:[%s348 + $0xa0] sm:$0xff]
        %v567 = vld [vmem:[%s348 + $0xa8] sm:$0xff]
        %v568 = vld [vmem:[%s348 + $0xb0] sm:$0xff]
        %v569 = vld [vmem:[%s348 + $0xb8] sm:$0xff]
        %v570 = vld [vmem:[%s348 + $0xc0] sm:$0xff]
        %v571 = vld [vmem:[%s348 + $0xc8] sm:$0xff]
        %v572 = vld [vmem:[%s348 + $0xd0] sm:$0xff]
        %v573 = vld [vmem:[%s348 + $0xd8] sm:$0xff]
        %v574 = vld [vmem:[%s348 + $0xe0] sm:$0xff]
        %v575 = vld [vmem:[%s348 + $0xe8] sm:$0xff]
        %v576 = vld [vmem:[%s348 + $0xf0] sm:$0xff]
        %v577 = vld [vmem:[%s348 + $0xf8] sm:$0xff]
        %v578 = vld [vmem:[%s348 + $0x100] sm:$0xff]
        %v579 = vld [vmem:[%s348 + $0x108] sm:$0xff]
        %v580 = vld [vmem:[%s348 + $0x110] sm:$0xff]
        %v581 = vld [vmem:[%s348 + $0x118] sm:$0xff]
        %v582 = vld [vmem:[%s348 + $0x120] sm:$0xff]
        %v583 = vld [vmem:[%s348 + $0x128] sm:$0xff]
        %v584 = vld [vmem:[%s348 + $0x130] sm:$0xff]
        %v585 = vld [vmem:[%s348 + $0x138] sm:$0xff]
        %v586 = vld [vmem:[%s348 + $0x140] sm:$0xff]
        %v587 = vld [vmem:[%s348 + $0x148] sm:$0xff]
        %v588 = vld [vmem:[%s348 + $0x150] sm:$0xff]
        %v589 = vld [vmem:[%s348 + $0x158] sm:$0xff]
        %v590 = vld [vmem:[%s348 + $0x160] sm:$0xff]
        %v591 = vld [vmem:[%s348 + $0x168] sm:$0xff]
        %v592 = vld [vmem:[%s348 + $0x170] sm:$0xff]
        %v593 = vld [vmem:[%s348 + $0x178] sm:$0xff]
        %v594 = vld [vmem:[%s348 + $0x180] sm:$0xff]
        %v595 = vld [vmem:[%s348 + $0x188] sm:$0xff]
        %v596 = vld [vmem:[%s348 + $0x190] sm:$0xff]
        %v597 = vld [vmem:[%s348 + $0x198] sm:$0xff]
        %v598 = vld [vmem:[%s348 + $0x1a0] sm:$0xff]
        %v599 = vld [vmem:[%s348 + $0x1a8] sm:$0xff]
        %v600 = vld [vmem:[%s348 + $0x1b0] sm:$0xff]
        %v601 = vld [vmem:[%s348 + $0x1b8] sm:$0xff]
        %v602 = vld [vmem:[%s348 + $0x1c0] sm:$0xff]
        %v603 = vld [vmem:[%s348 + $0x1c8] sm:$0xff]
        %v604 = vld [vmem:[%s348 + $0x1d0] sm:$0xff]
        %v605 = vld [vmem:[%s348 + $0x1d8] sm:$0xff]
        %v606 = vld [vmem:[%s348 + $0x1e0] sm:$0xff]
        %v607 = vld [vmem:[%s348 + $0x1e8] sm:$0xff]
        %v608 = vld [vmem:[%s348 + $0x1f0] sm:$0xff]
        %v609 = vld [vmem:[%s348 + $0x1f8] sm:$0xff]
        %v610 = vld [vmem:[%s348 + $0x200] sm:$0xff]
        %v611 = vld [vmem:[%s348 + $0x208] sm:$0xff]
        %v612 = vld [vmem:[%s348 + $0x210] sm:$0xff]
        %v613 = vld [vmem:[%s348 + $0x218] sm:$0xff]
        %v614 = vld [vmem:[%s348 + $0x220] sm:$0xff]
        %v615 = vld [vmem:[%s348 + $0x228] sm:$0xff]
        %v616 = vld [vmem:[%s348 + $0x230] sm:$0xff]
        %v617 = vld [vmem:[%s348 + $0x238] sm:$0xff]
        %v618 = vld [vmem:[%s348 + $0x240] sm:$0xff]
        %v619 = vld [vmem:[%s348 + $0x248] sm:$0xff]
        %v620 = vld [vmem:[%s348 + $0x250] sm:$0xff]
        %v621 = vld [vmem:[%s348 + $0x258] sm:$0xff]
        %v622 = vld [vmem:[%s348 + $0x260] sm:$0xff]
        %v623 = vld [vmem:[%s348 + $0x268] sm:$0xff]
        %v624 = vld [vmem:[%s348 + $0x270] sm:$0xff]
        %v625 = vld [vmem:[%s348 + $0x278] sm:$0xff]
        %v626 = vld [vmem:[%s348 + $0x280] sm:$0xff]
        %v627 = vld [vmem:[%s348 + $0x288] sm:$0xff]
        %v628 = vld [vmem:[%s348 + $0x290] sm:$0xff]
        %v629 = vld [vmem:[%s348 + $0x298] sm:$0xff]
        %v630 = vld [vmem:[%s348 + $0x2a0] sm:$0xff]
        %v631 = vld [vmem:[%s348 + $0x2a8] sm:$0xff]
        %v632 = vld [vmem:[%s348 + $0x2b0] sm:$0xff]
        %v633 = vld [vmem:[%s348 + $0x2b8] sm:$0xff]
        %v634 = vld [vmem:[%s348 + $0x2c0] sm:$0xff]
        %v635 = vld [vmem:[%s348 + $0x2c8] sm:$0xff]
        %v636 = vld [vmem:[%s348 + $0x2d0] sm:$0xff]
        %v637 = vld [vmem:[%s348 + $0x2d8] sm:$0xff]
        %v638 = vld [vmem:[%s348 + $0x2e0] sm:$0xff]
        %v639 = vld [vmem:[%s348 + $0x2e8] sm:$0xff]
        %v640 = vld [vmem:[%s348 + $0x2f0] sm:$0xff]
        %v641 = vld [vmem:[%s348 + $0x2f8] sm:$0xff]
        %v642 = vld [vmem:[%s348 + $0x300] sm:$0xff]
        %v643 = vld [vmem:[%s348 + $0x308] sm:$0xff]
        %v644 = vld [vmem:[%s348 + $0x310] sm:$0xff]
        %v645 = vld [vmem:[%s348 + $0x318] sm:$0xff]
        %v646 = vld [vmem:[%s348 + $0x320] sm:$0xff]
        %v647 = vld [vmem:[%s348 + $0x328] sm:$0xff]
        %v648 = vld [vmem:[%s348 + $0x330] sm:$0xff]
        %v649 = vld [vmem:[%s348 + $0x338] sm:$0xff]
        %v650 = vld [vmem:[%s348 + $0x340] sm:$0xff]
        %v651 = vld [vmem:[%s348 + $0x348] sm:$0xff]
        %v652 = vld [vmem:[%s348 + $0x350] sm:$0xff]
        %v653 = vld [vmem:[%s348 + $0x358] sm:$0xff]
        %v654 = vld [vmem:[%s348 + $0x360] sm:$0xff]
        %v655 = vld [vmem:[%s348 + $0x368] sm:$0xff]
        %v656 = vld [vmem:[%s348 + $0x370] sm:$0xff]
        %v657 = vld [vmem:[%s348 + $0x378] sm:$0xff]
        %v658 = vld [vmem:[%s348 + $0x380] sm:$0xff]
        %v659 = vld [vmem:[%s348 + $0x388] sm:$0xff]
        %v660 = vld [vmem:[%s348 + $0x390] sm:$0xff]
        %v661 = vld [vmem:[%s348 + $0x398] sm:$0xff]
        %v662 = vld [vmem:[%s348 + $0x3a0] sm:$0xff]
        %v663 = vld [vmem:[%s348 + $0x3a8] sm:$0xff]
        %v664 = vld [vmem:[%s348 + $0x3b0] sm:$0xff]
        %v665 = vld [vmem:[%s348 + $0x3b8] sm:$0xff]
        %v666 = vld [vmem:[%s348 + $0x3c0] sm:$0xff]
        %v667 = vld [vmem:[%s348 + $0x3c8] sm:$0xff]
        %v668 = vld [vmem:[%s348 + $0x3d0] sm:$0xff]
        %v669 = vld [vmem:[%s348 + $0x3d8] sm:$0xff]
        %v670 = vld [vmem:[%s348 + $0x3e0] sm:$0xff]
        %v671 = vld [vmem:[%s348 + $0x3e8] sm:$0xff]
        %v672 = vld [vmem:[%s348 + $0x3f0] sm:$0xff]
        %v673 = vld [vmem:[%s348 + $0x3f8] sm:$0xff]
        %v674 = vld [vmem:[%s348 + $0x400] sm:$0xff]
        %v675 = vld [vmem:[%s348 + $0x408] sm:$0xff]
        %v676 = vld [vmem:[%s348 + $0x410] sm:$0xff]
        %v677 = vld [vmem:[%s348 + $0x418] sm:$0xff]
        %v678 = vld [vmem:[%s348 + $0x420] sm:$0xff]
        %v679 = vld [vmem:[%s348 + $0x428] sm:$0xff]
        %v680 = vld [vmem:[%s348 + $0x430] sm:$0xff]
        %v681 = vld [vmem:[%s348 + $0x438] sm:$0xff]
        %v682 = vld [vmem:[%s348 + $0x440] sm:$0xff]
        %v683 = vld [vmem:[%s348 + $0x448] sm:$0xff]
        %v684 = vld [vmem:[%s348 + $0x450] sm:$0xff]
        %v685 = vld [vmem:[%s348 + $0x458] sm:$0xff]
        %v686 = vld [vmem:[%s348 + $0x460] sm:$0xff]
        %v687 = vld [vmem:[%s348 + $0x468] sm:$0xff]
        %v688 = vld [vmem:[%s348 + $0x470] sm:$0xff]
        %v689 = vld [vmem:[%s348 + $0x478] sm:$0xff]
        %v690 = vld [vmem:[%s348 + $0x480] sm:$0xff]
        %v691 = vld [vmem:[%s348 + $0x488] sm:$0xff]
        %v692 = vld [vmem:[%s348 + $0x490] sm:$0xff]
        %v693 = vld [vmem:[%s348 + $0x498] sm:$0xff]
        %v694 = vld [vmem:[%s348 + $0x4a0] sm:$0xff]
        %v695 = vld [vmem:[%s348 + $0x4a8] sm:$0xff]
        %v696 = vld [vmem:[%s348 + $0x4b0] sm:$0xff]
        %v697 = vld [vmem:[%s348 + $0x4b8] sm:$0xff]
        %v698 = vld [vmem:[%s348 + $0x4c0] sm:$0xff]
        %v699 = vld [vmem:[%s348 + $0x4c8] sm:$0xff]
        %v700 = vld [vmem:[%s348 + $0x4d0] sm:$0xff]
        %v701 = vld [vmem:[%s348 + $0x4d8] sm:$0xff]
        %v702 = vld [vmem:[%s348 + $0x4e0] sm:$0xff]
        %v703 = vld [vmem:[%s348 + $0x4e8] sm:$0xff]
        %v704 = vld [vmem:[%s348 + $0x4f0] sm:$0xff]
        %v705 = vld [vmem:[%s348 + $0x4f8] sm:$0xff]
        %v706 = vld [vmem:[%s348 + $0x500] sm:$0xff]
        %v707 = vld [vmem:[%s348 + $0x508] sm:$0xff]
        %v708 = vld [vmem:[%s348 + $0x510] sm:$0xff]
        %v709 = vld [vmem:[%s348 + $0x518] sm:$0xff]
        %v710 = vld [vmem:[%s348 + $0x520] sm:$0xff]
        %v711 = vld [vmem:[%s348 + $0x528] sm:$0xff]
        %v712 = vld [vmem:[%s348 + $0x530] sm:$0xff]
        %v713 = vld [vmem:[%s348 + $0x538] sm:$0xff]
        %v714 = vld [vmem:[%s348 + $0x540] sm:$0xff]
        %v715 = vld [vmem:[%s348 + $0x548] sm:$0xff]
        %v716 = vld [vmem:[%s348 + $0x550] sm:$0xff]
        %v717 = vld [vmem:[%s348 + $0x558] sm:$0xff]
        %v718 = vld [vmem:[%s348 + $0x560] sm:$0xff]
        %v719 = vld [vmem:[%s348 + $0x568] sm:$0xff]
        %v720 = vld [vmem:[%s348 + $0x570] sm:$0xff]
        %v721 = vld [vmem:[%s348 + $0x578] sm:$0xff]
        %v722 = vld [vmem:[%s348 + $0x580] sm:$0xff]
        %v723 = vld [vmem:[%s348 + $0x588] sm:$0xff]
        %v724 = vld [vmem:[%s348 + $0x590] sm:$0xff]
        %v725 = vld [vmem:[%s348 + $0x598] sm:$0xff]
        %v726 = vld [vmem:[%s348 + $0x5a0] sm:$0xff]
        %v727 = vld [vmem:[%s348 + $0x5a8] sm:$0xff]
        %v728 = vld [vmem:[%s348 + $0x5b0] sm:$0xff]
        %v729 = vld [vmem:[%s348 + $0x5b8] sm:$0xff]
        %v730 = vld [vmem:[%s348 + $0x5c0] sm:$0xff]
        %v731 = vld [vmem:[%s348 + $0x5c8] sm:$0xff]
        %v732 = vld [vmem:[%s348 + $0x5d0] sm:$0xff]
        %v733 = vld [vmem:[%s348 + $0x5d8] sm:$0xff]
        %v734 = vld [vmem:[%s348 + $0x5e0] sm:$0xff]
        %v735 = vld [vmem:[%s348 + $0x5e8] sm:$0xff]
        %v736 = vld [vmem:[%s348 + $0x5f0] sm:$0xff]
        %v737 = vld [vmem:[%s348 + $0x5f8] sm:$0xff]
        %v738 = vld [vmem:[%s348 + $0x600] sm:$0xff]
        %v739 = vld [vmem:[%s348 + $0x608] sm:$0xff]
        %v740 = vld [vmem:[%s348 + $0x610] sm:$0xff]
        %v741 = vld [vmem:[%s348 + $0x618] sm:$0xff]
        %v742 = vld [vmem:[%s348 + $0x620] sm:$0xff]
        %v743 = vld [vmem:[%s348 + $0x628] sm:$0xff]
        %v744 = vld [vmem:[%s348 + $0x630] sm:$0xff]
        %v745 = vld [vmem:[%s348 + $0x638] sm:$0xff]
        %v746 = vld [vmem:[%s348 + $0x640] sm:$0xff]
        %v747 = vld [vmem:[%s348 + $0x648] sm:$0xff]
        %v748 = vld [vmem:[%s348 + $0x650] sm:$0xff]
        %v749 = vld [vmem:[%s348 + $0x658] sm:$0xff]
        %v750 = vld [vmem:[%s348 + $0x660] sm:$0xff]
        %v751 = vld [vmem:[%s348 + $0x668] sm:$0xff]
        %v752 = vld [vmem:[%s348 + $0x670] sm:$0xff]
        %v753 = vld [vmem:[%s348 + $0x678] sm:$0xff]
        %v754 = vld [vmem:[%s348 + $0x680] sm:$0xff]
        %v755 = vld [vmem:[%s348 + $0x688] sm:$0xff]
        %v756 = vld [vmem:[%s348 + $0x690] sm:$0xff]
        %v757 = vld [vmem:[%s348 + $0x698] sm:$0xff]
        %v758 = vld [vmem:[%s348 + $0x6a0] sm:$0xff]
        %v759 = vld [vmem:[%s348 + $0x6a8] sm:$0xff]
        %v760 = vld [vmem:[%s348 + $0x6b0] sm:$0xff]
        %v761 = vld [vmem:[%s348 + $0x6b8] sm:$0xff]
        %v762 = vld [vmem:[%s348 + $0x6c0] sm:$0xff]
        %v763 = vld [vmem:[%s348 + $0x6c8] sm:$0xff]
        %v764 = vld [vmem:[%s348 + $0x6d0] sm:$0xff]
        %v765 = vld [vmem:[%s348 + $0x6d8] sm:$0xff]
        %v766 = vld [vmem:[%s348 + $0x6e0] sm:$0xff]
        %v767 = vld [vmem:[%s348 + $0x6e8] sm:$0xff]
        %v768 = vld [vmem:[%s348 + $0x6f0] sm:$0xff]
        %v769 = vld [vmem:[%s348 + $0x6f8] sm:$0xff]
        %v770 = vld [vmem:[%s348 + $0x700] sm:$0xff]
        %v771 = vld [vmem:[%s348 + $0x708] sm:$0xff]
        %v772 = vld [vmem:[%s348 + $0x710] sm:$0xff]
        %v773 = vld [vmem:[%s348 + $0x718] sm:$0xff]
        %v774 = vld [vmem:[%s348 + $0x720] sm:$0xff]
        %v775 = vld [vmem:[%s348 + $0x728] sm:$0xff]
        %v776 = vld [vmem:[%s348 + $0x730] sm:$0xff]
        %v777 = vld [vmem:[%s348 + $0x738] sm:$0xff]
        %v778 = vld [vmem:[%s348 + $0x740] sm:$0xff]
        %v779 = vld [vmem:[%s348 + $0x748] sm:$0xff]
        %v780 = vld [vmem:[%s348 + $0x750] sm:$0xff]
        %v781 = vld [vmem:[%s348 + $0x758] sm:$0xff]
        %v782 = vld [vmem:[%s348 + $0x760] sm:$0xff]
        %v783 = vld [vmem:[%s348 + $0x768] sm:$0xff]
        %v784 = vld [vmem:[%s348 + $0x770] sm:$0xff]
        %v785 = vld [vmem:[%s348 + $0x778] sm:$0xff]
        %786 = vmatprep.subr.mxu0 %v622
        %787 = vmatpush1.xpose.msra.mxu0 %v621
        %788 = vmatprep.subr.mxu0 %v617
        %789 = vmatpush1.xpose.msra.mxu0 %v616
        %790 = vmatprep.subr.mxu0 %v612
        %791 = vmatpush1.xpose.msra.mxu0 %v611
        %792 = vmatprep.subr.mxu0 %v607
        %793 = vmatpush1.xpose.msra.mxu0 %v606
        %794 = vmatprep.subr.mxu0 %v602
        %795 = vmatpush1.xpose.msra.mxu0 %v601
        %796 = vmatprep.subr.mxu0 %v597
        %797 = vmatpush1.xpose.msra.mxu0 %v596
        %798 = vmatprep.subr.mxu0 %v592
        %799 = vmatpush1.xpose.msra.mxu0 %v591
        %800 = vmatprep.subr.mxu0 %v587
        %801 = vmatpush1.xpose.msra.mxu0 %v586
        %802 = vmatprep.subr.mxu0 %v582
        %803 = vmatpush1.xpose.msra.mxu0 %v581
        %804 = vmatprep.subr.mxu0 %v577
        %805 = vmatpush1.xpose.msra.mxu0 %v576
        %806 = vmatprep.subr.mxu0 %v572
        %807 = vmatpush1.xpose.msra.mxu0 %v571
        %808 = vmatprep.subr.mxu0 %v567
        %809 = vmatpush1.xpose.msra.mxu0 %v566
        %810 = vmatprep.subr.mxu0 %v562
        %811 = vmatpush1.xpose.msra.mxu0 %v561
        %812 = vmatprep.subr.mxu0 %v557
        %813 = vmatpush1.xpose.msra.mxu0 %v556
        %814 = vmatprep.subr.mxu0 %v552
        %815 = vmatpush1.xpose.msra.mxu0 %v551
        %816 = vmatprep.subr.mxu0 %v547
        %817 = vmatpush1.xpose.msra.mxu0 %v546
        %818 = vmatprep.subr.mxu0 %v702
        %819 = vmatpush2.xpose.msra.mxu0 %v701
        %820 = vmatprep.subr.mxu0 %v697
        %821 = vmatpush2.xpose.msra.mxu0 %v696
        %822 = vmatprep.subr.mxu0 %v692
        %823 = vmatpush2.xpose.msra.mxu0 %v691
        %824 = vmatprep.subr.mxu0 %v687
        %825 = vmatpush2.xpose.msra.mxu0 %v686
        %826 = vmatprep.subr.mxu0 %v682
        %827 = vmatpush2.xpose.msra.mxu0 %v681
        %828 = vmatprep.subr.mxu0 %v677
        %829 = vmatpush2.xpose.msra.mxu0 %v676
        %830 = vmatprep.subr.mxu0 %v672
        %831 = vmatpush2.xpose.msra.mxu0 %v671
        %832 = vmatprep.subr.mxu0 %v667
        %833 = vmatpush2.xpose.msra.mxu0 %v666
        %834 = vmatprep.subr.mxu0 %v662
        %835 = vmatpush2.xpose.msra.mxu0 %v661
        %836 = vmatprep.subr.mxu0 %v657
        %837 = vmatpush2.xpose.msra.mxu0 %v656
        %838 = vmatprep.subr.mxu0 %v652
        %839 = vmatpush2.xpose.msra.mxu0 %v651
        %840 = vmatprep.subr.mxu0 %v647
        %841 = vmatpush2.xpose.msra.mxu0 %v646
        %842 = vmatprep.subr.mxu0 %v642
        %843 = vmatpush2.xpose.msra.mxu0 %v641
        %844 = vmatprep.subr.mxu0 %v637
        %845 = vmatpush2.xpose.msra.mxu0 %v636
        %846 = vmatprep.subr.mxu0 %v632
        %847 = vmatpush2.xpose.msra.mxu0 %v631
        %848 = vmatprep.subr.mxu0 %v627
        %849 = vmatpush2.xpose.msra.mxu0 %v626
        %850 = vmatprep.mubr.f32.mxu0 %v427
        %851 = vmatmul.mubr.f32.gmra.mxu0 %v426
        %v852 = vpop.f32.mrf.mxu0
        %v853 = vadd.f32 0.0, %v852
        %v854 = vpop.f32.mrf.mxu0
        %v855 = vadd.f32 0.0, %v854
        %856 = vmatprep.mubr.f32.mxu0 %v432
        %857 = vmatmul.mubr.f32.gmra.mxu0 %v431
        %v858 = vpop.f32.mrf.mxu0
        %v859 = vadd.f32 0.0, %v858
        %v860 = vpop.f32.mrf.mxu0
        %v861 = vadd.f32 0.0, %v860
        %862 = vmatprep.mubr.f32.mxu0 %v437
        %863 = vmatmul.mubr.f32.gmra.mxu0 %v436
        %v864 = vpop.f32.mrf.mxu0
        %v865 = vadd.f32 0.0, %v864
        %v866 = vpop.f32.mrf.mxu0
        %v867 = vadd.f32 0.0, %v866
        %868 = vmatprep.mubr.f32.mxu0 %v442
        %869 = vmatmul.mubr.f32.gmra.mxu0 %v441
        %v870 = vpop.f32.mrf.mxu0
        %v871 = vadd.f32 0.0, %v870
        %v872 = vpop.f32.mrf.mxu0
        %v873 = vadd.f32 0.0, %v872
        %874 = vmatprep.mubr.f32.mxu0 %v447
        %875 = vmatmul.mubr.f32.gmra.mxu0 %v446
        %v876 = vpop.f32.mrf.mxu0
        %v877 = vadd.f32 0.0, %v876
        %v878 = vpop.f32.mrf.mxu0
        %v879 = vadd.f32 0.0, %v878
        %880 = vmatprep.mubr.f32.mxu0 %v452
        %881 = vmatmul.mubr.f32.gmra.mxu0 %v451
        %v882 = vpop.f32.mrf.mxu0
        %v883 = vadd.f32 0.0, %v882
        %v884 = vpop.f32.mrf.mxu0
        %v885 = vadd.f32 0.0, %v884
        %886 = vmatprep.mubr.f32.mxu0 %v457
        %887 = vmatmul.mubr.f32.gmra.mxu0 %v456
        %v888 = vpop.f32.mrf.mxu0
        %v889 = vadd.f32 0.0, %v888
        %v890 = vpop.f32.mrf.mxu0
        %v891 = vadd.f32 0.0, %v890
        %892 = vmatprep.mubr.f32.mxu0 %v462
        %893 = vmatmul.mubr.f32.gmra.mxu0 %v461
        %v894 = vpop.f32.mrf.mxu0
        %v895 = vadd.f32 0.0, %v894
        %v896 = vpop.f32.mrf.mxu0
        %v897 = vadd.f32 0.0, %v896
        %898 = vmatprep.mubr.f32.mxu0 %v467
        %899 = vmatmul.mubr.f32.gmra.mxu0 %v466
        %v900 = vpop.f32.mrf.mxu0
        %v901 = vadd.f32 0.0, %v900
        %v902 = vpop.f32.mrf.mxu0
        %v903 = vadd.f32 0.0, %v902
        %904 = vmatprep.mubr.f32.mxu0 %v472
        %905 = vmatmul.mubr.f32.gmra.mxu0 %v471
        %v906 = vpop.f32.mrf.mxu0
        %v907 = vadd.f32 0.0, %v906
        %v908 = vpop.f32.mrf.mxu0
        %v909 = vadd.f32 0.0, %v908
        %910 = vmatprep.mubr.f32.mxu0 %v477
        %911 = vmatmul.mubr.f32.gmra.mxu0 %v476
        %v912 = vpop.f32.mrf.mxu0
        %v913 = vadd.f32 0.0, %v912
        %v914 = vpop.f32.mrf.mxu0
        %v915 = vadd.f32 0.0, %v914
        %916 = vmatprep.mubr.f32.mxu0 %v482
        %917 = vmatmul.mubr.f32.gmra.mxu0 %v481
        %v918 = vpop.f32.mrf.mxu0
        %v919 = vadd.f32 0.0, %v918
        %v920 = vpop.f32.mrf.mxu0
        %v921 = vadd.f32 0.0, %v920
        %922 = vmatprep.mubr.f32.mxu0 %v487
        %923 = vmatmul.mubr.f32.gmra.mxu0 %v486
        %v924 = vpop.f32.mrf.mxu0
        %v925 = vadd.f32 0.0, %v924
        %v926 = vpop.f32.mrf.mxu0
        %v927 = vadd.f32 0.0, %v926
        %928 = vmatprep.mubr.f32.mxu0 %v492
        %929 = vmatmul.mubr.f32.gmra.mxu0 %v491
        %v930 = vpop.f32.mrf.mxu0
        %v931 = vadd.f32 0.0, %v930
        %v932 = vpop.f32.mrf.mxu0
        %v933 = vadd.f32 0.0, %v932
        %934 = vmatprep.mubr.f32.mxu0 %v497
        %935 = vmatmul.mubr.f32.gmra.mxu0 %v496
        %v936 = vpop.f32.mrf.mxu0
        %v937 = vadd.f32 0.0, %v936
        %v938 = vpop.f32.mrf.mxu0
        %v939 = vadd.f32 0.0, %v938
        %940 = vmatprep.mubr.f32.mxu0 %v502
        %941 = vmatmul.mubr.f32.gmra.mxu0 %v501
        %v942 = vpop.f32.mrf.mxu0
        %v943 = vadd.f32 0.0, %v942
        %v944 = vpop.f32.mrf.mxu0
        %v945 = vadd.f32 0.0, %v944
        %946 = vmatprep.mubr.f32.mxu0 %v507
        %947 = vmatmul.mubr.f32.gmra.mxu0 %v506
        %v948 = vpop.f32.mrf.mxu0
        %v949 = vadd.f32 0.0, %v948
        %v950 = vpop.f32.mrf.mxu0
        %v951 = vadd.f32 0.0, %v950
        %952 = vmatprep.mubr.f32.mxu0 %v512
        %953 = vmatmul.mubr.f32.gmra.mxu0 %v511
        %v954 = vpop.f32.mrf.mxu0
        %v955 = vadd.f32 0.0, %v954
        %v956 = vpop.f32.mrf.mxu0
        %v957 = vadd.f32 0.0, %v956
        %958 = vmatprep.mubr.f32.mxu0 %v517
        %959 = vmatmul.mubr.f32.gmra.mxu0 %v516
        %v960 = vpop.f32.mrf.mxu0
        %v961 = vadd.f32 0.0, %v960
        %v962 = vpop.f32.mrf.mxu0
        %v963 = vadd.f32 0.0, %v962
        %964 = vmatprep.mubr.f32.mxu0 %v522
        %965 = vmatmul.mubr.f32.gmra.mxu0 %v521
        %v966 = vpop.f32.mrf.mxu0
        %v967 = vadd.f32 0.0, %v966
        %v968 = vpop.f32.mrf.mxu0
        %v969 = vadd.f32 0.0, %v968
        %970 = vmatprep.mubr.f32.mxu0 %v527
        %971 = vmatmul.mubr.f32.gmra.mxu0 %v526
        %v972 = vpop.f32.mrf.mxu0
        %v973 = vadd.f32 0.0, %v972
        %v974 = vpop.f32.mrf.mxu0
        %v975 = vadd.f32 0.0, %v974
        %976 = vmatprep.mubr.f32.mxu0 %v532
        %977 = vmatmul.mubr.f32.gmra.mxu0 %v531
        %v978 = vpop.f32.mrf.mxu0
        %v979 = vadd.f32 0.0, %v978
        %v980 = vpop.f32.mrf.mxu0
        %v981 = vadd.f32 0.0, %v980
        %982 = vmatprep.mubr.f32.mxu0 %v537
        %983 = vmatmul.mubr.f32.gmra.mxu0 %v536
        %v984 = vpop.f32.mrf.mxu0
        %v985 = vadd.f32 0.0, %v984
        %v986 = vpop.f32.mrf.mxu0
        %v987 = vadd.f32 0.0, %v986
        %988 = vmatprep.mubr.f32.mxu0 %v542
        %989 = vmatmul.mubr.f32.gmra.mxu0 %v541
        %v990 = vpop.f32.mrf.mxu0
        %v991 = vadd.f32 0.0, %v990
        %v992 = vpop.f32.mrf.mxu0
        %v993 = vadd.f32 0.0, %v992
        %994 = vdwg.mxu0
        %995 = vmatprep.subr.mxu0 %v624
        %996 = vmatpush1.xpose.msra.mxu0 %v623
        %997 = vmatprep.subr.mxu0 %v619
        %998 = vmatpush1.xpose.msra.mxu0 %v618
        %999 = vmatprep.subr.mxu0 %v614
        %1000 = vmatpush1.xpose.msra.mxu0 %v613
        %1001 = vmatprep.subr.mxu0 %v609
        %1002 = vmatpush1.xpose.msra.mxu0 %v608
        %1003 = vmatprep.subr.mxu0 %v604
        %1004 = vmatpush1.xpose.msra.mxu0 %v603
        %1005 = vmatprep.subr.mxu0 %v599
        %1006 = vmatpush1.xpose.msra.mxu0 %v598
        %1007 = vmatprep.subr.mxu0 %v594
        %1008 = vmatpush1.xpose.msra.mxu0 %v593
        %1009 = vmatprep.subr.mxu0 %v589
        %1010 = vmatpush1.xpose.msra.mxu0 %v588
        %1011 = vmatprep.subr.mxu0 %v584
        %1012 = vmatpush1.xpose.msra.mxu0 %v583
        %1013 = vmatprep.subr.mxu0 %v579
        %1014 = vmatpush1.xpose.msra.mxu0 %v578
        %1015 = vmatprep.subr.mxu0 %v574
        %1016 = vmatpush1.xpose.msra.mxu0 %v573
        %1017 = vmatprep.subr.mxu0 %v569
        %1018 = vmatpush1.xpose.msra.mxu0 %v568
        %1019 = vmatprep.subr.mxu0 %v564
        %1020 = vmatpush1.xpose.msra.mxu0 %v563
        %1021 = vmatprep.subr.mxu0 %v559
        %1022 = vmatpush1.xpose.msra.mxu0 %v558
        %1023 = vmatprep.subr.mxu0 %v554
        %1024 = vmatpush1.xpose.msra.mxu0 %v553
        %1025 = vmatprep.subr.mxu0 %v549
        %1026 = vmatpush1.xpose.msra.mxu0 %v548
        %1027 = vmatprep.subr.mxu0 %v704
        %1028 = vmatpush2.xpose.msra.mxu0 %v703
        %1029 = vmatprep.subr.mxu0 %v699
        %1030 = vmatpush2.xpose.msra.mxu0 %v698
        %1031 = vmatprep.subr.mxu0 %v694
        %1032 = vmatpush2.xpose.msra.mxu0 %v693
        %1033 = vmatprep.subr.mxu0 %v689
        %1034 = vmatpush2.xpose.msra.mxu0 %v688
        %1035 = vmatprep.subr.mxu0 %v684
        %1036 = vmatpush2.xpose.msra.mxu0 %v683
        %1037 = vmatprep.subr.mxu0 %v679
        %1038 = vmatpush2.xpose.msra.mxu0 %v678
        %1039 = vmatprep.subr.mxu0 %v674
        %1040 = vmatpush2.xpose.msra.mxu0 %v673
        %1041 = vmatprep.subr.mxu0 %v669
        %1042 = vmatpush2.xpose.msra.mxu0 %v668
        %1043 = vmatprep.subr.mxu0 %v664
        %1044 = vmatpush2.xpose.msra.mxu0 %v663
        %1045 = vmatprep.subr.mxu0 %v659
        %1046 = vmatpush2.xpose.msra.mxu0 %v658
        %1047 = vmatprep.subr.mxu0 %v654
        %1048 = vmatpush2.xpose.msra.mxu0 %v653
        %1049 = vmatprep.subr.mxu0 %v649
        %1050 = vmatpush2.xpose.msra.mxu0 %v648
        %1051 = vmatprep.subr.mxu0 %v644
        %1052 = vmatpush2.xpose.msra.mxu0 %v643
        %1053 = vmatprep.subr.mxu0 %v639
        %1054 = vmatpush2.xpose.msra.mxu0 %v638
        %1055 = vmatprep.subr.mxu0 %v634
        %1056 = vmatpush2.xpose.msra.mxu0 %v633
        %1057 = vmatprep.subr.mxu0 %v629
        %1058 = vmatpush2.xpose.msra.mxu0 %v628
        %1059 = vmatprep.mubr.f32.mxu0 %v429
        %1060 = vmatmul.mubr.f32.gmra.mxu0 %v428
        %v1061 = vpop.f32.mrf.mxu0
        %v1062 = vadd.f32 %v853, %v1061
        %v1063 = vpop.f32.mrf.mxu0
        %v1064 = vadd.f32 %v855, %v1063
        %1065 = vmatprep.mubr.f32.mxu0 %v434
        %1066 = vmatmul.mubr.f32.gmra.mxu0 %v433
        %v1067 = vpop.f32.mrf.mxu0
        %v1068 = vadd.f32 %v859, %v1067
        %v1069 = vpop.f32.mrf.mxu0
        %v1070 = vadd.f32 %v861, %v1069
        %1071 = vmatprep.mubr.f32.mxu0 %v439
        %1072 = vmatmul.mubr.f32.gmra.mxu0 %v438
        %v1073 = vpop.f32.mrf.mxu0
        %v1074 = vadd.f32 %v865, %v1073
        %v1075 = vpop.f32.mrf.mxu0
        %v1076 = vadd.f32 %v867, %v1075
        %1077 = vmatprep.mubr.f32.mxu0 %v444
        %1078 = vmatmul.mubr.f32.gmra.mxu0 %v443
        %v1079 = vpop.f32.mrf.mxu0
        %v1080 = vadd.f32 %v871, %v1079
        %v1081 = vpop.f32.mrf.mxu0
        %v1082 = vadd.f32 %v873, %v1081
        %1083 = vmatprep.mubr.f32.mxu0 %v449
        %1084 = vmatmul.mubr.f32.gmra.mxu0 %v448
        %v1085 = vpop.f32.mrf.mxu0
        %v1086 = vadd.f32 %v877, %v1085
        %v1087 = vpop.f32.mrf.mxu0
        %v1088 = vadd.f32 %v879, %v1087
        %1089 = vmatprep.mubr.f32.mxu0 %v454
        %1090 = vmatmul.mubr.f32.gmra.mxu0 %v453
        %v1091 = vpop.f32.mrf.mxu0
        %v1092 = vadd.f32 %v883, %v1091
        %v1093 = vpop.f32.mrf.mxu0
        %v1094 = vadd.f32 %v885, %v1093
        %1095 = vmatprep.mubr.f32.mxu0 %v459
        %1096 = vmatmul.mubr.f32.gmra.mxu0 %v458
        %v1097 = vpop.f32.mrf.mxu0
        %v1098 = vadd.f32 %v889, %v1097
        %v1099 = vpop.f32.mrf.mxu0
        %v1100 = vadd.f32 %v891, %v1099
        %1101 = vmatprep.mubr.f32.mxu0 %v464
        %1102 = vmatmul.mubr.f32.gmra.mxu0 %v463
        %v1103 = vpop.f32.mrf.mxu0
        %v1104 = vadd.f32 %v895, %v1103
        %v1105 = vpop.f32.mrf.mxu0
        %v1106 = vadd.f32 %v897, %v1105
        %1107 = vmatprep.mubr.f32.mxu0 %v469
        %1108 = vmatmul.mubr.f32.gmra.mxu0 %v468
        %v1109 = vpop.f32.mrf.mxu0
        %v1110 = vadd.f32 %v901, %v1109
        %v1111 = vpop.f32.mrf.mxu0
        %v1112 = vadd.f32 %v903, %v1111
        %1113 = vmatprep.mubr.f32.mxu0 %v474
        %1114 = vmatmul.mubr.f32.gmra.mxu0 %v473
        %v1115 = vpop.f32.mrf.mxu0
        %v1116 = vadd.f32 %v907, %v1115
        %v1117 = vpop.f32.mrf.mxu0
        %v1118 = vadd.f32 %v909, %v1117
        %1119 = vmatprep.mubr.f32.mxu0 %v479
        %1120 = vmatmul.mubr.f32.gmra.mxu0 %v478
        %v1121 = vpop.f32.mrf.mxu0
        %v1122 = vadd.f32 %v913, %v1121
        %v1123 = vpop.f32.mrf.mxu0
        %v1124 = vadd.f32 %v915, %v1123
        %1125 = vmatprep.mubr.f32.mxu0 %v484
        %1126 = vmatmul.mubr.f32.gmra.mxu0 %v483
        %v1127 = vpop.f32.mrf.mxu0
        %v1128 = vadd.f32 %v919, %v1127
        %v1129 = vpop.f32.mrf.mxu0
        %v1130 = vadd.f32 %v921, %v1129
        %1131 = vmatprep.mubr.f32.mxu0 %v489
        %1132 = vmatmul.mubr.f32.gmra.mxu0 %v488
        %v1133 = vpop.f32.mrf.mxu0
        %v1134 = vadd.f32 %v925, %v1133
        %v1135 = vpop.f32.mrf.mxu0
        %v1136 = vadd.f32 %v927, %v1135
        %1137 = vmatprep.mubr.f32.mxu0 %v494
        %1138 = vmatmul.mubr.f32.gmra.mxu0 %v493
        %v1139 = vpop.f32.mrf.mxu0
        %v1140 = vadd.f32 %v931, %v1139
        %v1141 = vpop.f32.mrf.mxu0
        %v1142 = vadd.f32 %v933, %v1141
        %1143 = vmatprep.mubr.f32.mxu0 %v499
        %1144 = vmatmul.mubr.f32.gmra.mxu0 %v498
        %v1145 = vpop.f32.mrf.mxu0
        %v1146 = vadd.f32 %v937, %v1145
        %v1147 = vpop.f32.mrf.mxu0
        %v1148 = vadd.f32 %v939, %v1147
        %1149 = vmatprep.mubr.f32.mxu0 %v504
        %1150 = vmatmul.mubr.f32.gmra.mxu0 %v503
        %v1151 = vpop.f32.mrf.mxu0
        %v1152 = vadd.f32 %v943, %v1151
        %v1153 = vpop.f32.mrf.mxu0
        %v1154 = vadd.f32 %v945, %v1153
        %1155 = vmatprep.mubr.f32.mxu0 %v509
        %1156 = vmatmul.mubr.f32.gmra.mxu0 %v508
        %v1157 = vpop.f32.mrf.mxu0
        %v1158 = vadd.f32 %v949, %v1157
        %v1159 = vpop.f32.mrf.mxu0
        %v1160 = vadd.f32 %v951, %v1159
        %1161 = vmatprep.mubr.f32.mxu0 %v514
        %1162 = vmatmul.mubr.f32.gmra.mxu0 %v513
        %v1163 = vpop.f32.mrf.mxu0
        %v1164 = vadd.f32 %v955, %v1163
        %v1165 = vpop.f32.mrf.mxu0
        %v1166 = vadd.f32 %v957, %v1165
        %1167 = vmatprep.mubr.f32.mxu0 %v519
        %1168 = vmatmul.mubr.f32.gmra.mxu0 %v518
        %v1169 = vpop.f32.mrf.mxu0
        %v1170 = vadd.f32 %v961, %v1169
        %v1171 = vpop.f32.mrf.mxu0
        %v1172 = vadd.f32 %v963, %v1171
        %1173 = vmatprep.mubr.f32.mxu0 %v524
        %1174 = vmatmul.mubr.f32.gmra.mxu0 %v523
        %v1175 = vpop.f32.mrf.mxu0
        %v1176 = vadd.f32 %v967, %v1175
        %v1177 = vpop.f32.mrf.mxu0
        %v1178 = vadd.f32 %v969, %v1177
        %1179 = vmatprep.mubr.f32.mxu0 %v529
        %1180 = vmatmul.mubr.f32.gmra.mxu0 %v528
        %v1181 = vpop.f32.mrf.mxu0
        %v1182 = vadd.f32 %v973, %v1181
        %v1183 = vpop.f32.mrf.mxu0
        %v1184 = vadd.f32 %v975, %v1183
        %1185 = vmatprep.mubr.f32.mxu0 %v534
        %1186 = vmatmul.mubr.f32.gmra.mxu0 %v533
        %v1187 = vpop.f32.mrf.mxu0
        %v1188 = vadd.f32 %v979, %v1187
        %v1189 = vpop.f32.mrf.mxu0
        %v1190 = vadd.f32 %v981, %v1189
        %1191 = vmatprep.mubr.f32.mxu0 %v539
        %1192 = vmatmul.mubr.f32.gmra.mxu0 %v538
        %v1193 = vpop.f32.mrf.mxu0
        %v1194 = vadd.f32 %v985, %v1193
        %v1195 = vpop.f32.mrf.mxu0
        %v1196 = vadd.f32 %v987, %v1195
        %1197 = vmatprep.mubr.f32.mxu0 %v544
        %1198 = vmatmul.mubr.f32.gmra.mxu0 %v543
        %v1199 = vpop.f32.mrf.mxu0
        %v1200 = vadd.f32 %v991, %v1199
        %v1201 = vpop.f32.mrf.mxu0
        %v1202 = vadd.f32 %v993, %v1201
        %1203 = vdwg.mxu0
        %1204 = vmatprep.subr.mxu0 0.0
        %1205 = vmatpush1.xpose.msra.mxu0 %v625
        %1206 = vmatprep.subr.mxu0 0.0
        %1207 = vmatpush1.xpose.msra.mxu0 %v620
        %1208 = vmatprep.subr.mxu0 0.0
        %1209 = vmatpush1.xpose.msra.mxu0 %v615
        %1210 = vmatprep.subr.mxu0 0.0
        %1211 = vmatpush1.xpose.msra.mxu0 %v610
        %1212 = vmatprep.subr.mxu0 0.0
        %1213 = vmatpush1.xpose.msra.mxu0 %v605
        %1214 = vmatprep.subr.mxu0 0.0
        %1215 = vmatpush1.xpose.msra.mxu0 %v600
        %1216 = vmatprep.subr.mxu0 0.0
        %1217 = vmatpush1.xpose.msra.mxu0 %v595
        %1218 = vmatprep.subr.mxu0 0.0
        %1219 = vmatpush1.xpose.msra.mxu0 %v590
        %1220 = vmatprep.subr.mxu0 0.0
        %1221 = vmatpush1.xpose.msra.mxu0 %v585
        %1222 = vmatprep.subr.mxu0 0.0
        %1223 = vmatpush1.xpose.msra.mxu0 %v580
        %1224 = vmatprep.subr.mxu0 0.0
        %1225 = vmatpush1.xpose.msra.mxu0 %v575
        %1226 = vmatprep.subr.mxu0 0.0
        %1227 = vmatpush1.xpose.msra.mxu0 %v570
        %1228 = vmatprep.subr.mxu0 0.0
        %1229 = vmatpush1.xpose.msra.mxu0 %v565
        %1230 = vmatprep.subr.mxu0 0.0
        %1231 = vmatpush1.xpose.msra.mxu0 %v560
        %1232 = vmatprep.subr.mxu0 0.0
        %1233 = vmatpush1.xpose.msra.mxu0 %v555
        %1234 = vmatprep.subr.mxu0 0.0
        %1235 = vmatpush1.xpose.msra.mxu0 %v550
        %1236 = vmatprep.subr.mxu0 0.0
        %1237 = vmatpush2.xpose.msra.mxu0 %v705
        %1238 = vmatprep.subr.mxu0 0.0
        %1239 = vmatpush2.xpose.msra.mxu0 %v700
        %1240 = vmatprep.subr.mxu0 0.0
        %1241 = vmatpush2.xpose.msra.mxu0 %v695
        %1242 = vmatprep.subr.mxu0 0.0
        %1243 = vmatpush2.xpose.msra.mxu0 %v690
        %1244 = vmatprep.subr.mxu0 0.0
        %1245 = vmatpush2.xpose.msra.mxu0 %v685
        %1246 = vmatprep.subr.mxu0 0.0
        %1247 = vmatpush2.xpose.msra.mxu0 %v680
        %1248 = vmatprep.subr.mxu0 0.0
        %1249 = vmatpush2.xpose.msra.mxu0 %v675
        %1250 = vmatprep.subr.mxu0 0.0
        %1251 = vmatpush2.xpose.msra.mxu0 %v670
        %1252 = vmatprep.subr.mxu0 0.0
        %1253 = vmatpush2.xpose.msra.mxu0 %v665
        %1254 = vmatprep.subr.mxu0 0.0
        %1255 = vmatpush2.xpose.msra.mxu0 %v660
        %1256 = vmatprep.subr.mxu0 0.0
        %1257 = vmatpush2.xpose.msra.mxu0 %v655
        %1258 = vmatprep.subr.mxu0 0.0
        %1259 = vmatpush2.xpose.msra.mxu0 %v650
        %1260 = vmatprep.subr.mxu0 0.0
        %1261 = vmatpush2.xpose.msra.mxu0 %v645
        %1262 = vmatprep.subr.mxu0 0.0
        %1263 = vmatpush2.xpose.msra.mxu0 %v640
        %1264 = vmatprep.subr.mxu0 0.0
        %1265 = vmatpush2.xpose.msra.mxu0 %v635
        %1266 = vmatprep.subr.mxu0 0.0
        %1267 = vmatpush2.xpose.msra.mxu0 %v630
        %1268 = vmatprep.mubr.f32.mxu0 0.0
        %1269 = vmatmul.mubr.f32.gmra.mxu0 %v430
        %v1270 = vpop.f32.mrf.mxu0
        %v1271 = vadd.f32 %v1062, %v1270
        %v1272 = vpop.f32.mrf.mxu0
        %v1273 = vadd.f32 %v1064, %v1272
        %1274 = vmatprep.mubr.f32.mxu0 0.0
        %1275 = vmatmul.mubr.f32.gmra.mxu0 %v435
        %v1276 = vpop.f32.mrf.mxu0
        %v1277 = vadd.f32 %v1068, %v1276
        %v1278 = vpop.f32.mrf.mxu0
        %v1279 = vadd.f32 %v1070, %v1278
        %1280 = vmatprep.mubr.f32.mxu0 0.0
        %1281 = vmatmul.mubr.f32.gmra.mxu0 %v440
        %v1282 = vpop.f32.mrf.mxu0
        %v1283 = vadd.f32 %v1074, %v1282
        %v1284 = vpop.f32.mrf.mxu0
        %v1285 = vadd.f32 %v1076, %v1284
        %1286 = vmatprep.mubr.f32.mxu0 0.0
        %1287 = vmatmul.mubr.f32.gmra.mxu0 %v445
        %v1288 = vpop.f32.mrf.mxu0
        %v1289 = vadd.f32 %v1080, %v1288
        %v1290 = vpop.f32.mrf.mxu0
        %v1291 = vadd.f32 %v1082, %v1290
        %1292 = vmatprep.mubr.f32.mxu0 0.0
        %1293 = vmatmul.mubr.f32.gmra.mxu0 %v450
        %v1294 = vpop.f32.mrf.mxu0
        %v1295 = vadd.f32 %v1086, %v1294
        %v1296 = vpop.f32.mrf.mxu0
        %v1297 = vadd.f32 %v1088, %v1296
        %1298 = vmatprep.mubr.f32.mxu0 0.0
        %1299 = vmatmul.mubr.f32.gmra.mxu0 %v455
        %v1300 = vpop.f32.mrf.mxu0
        %v1301 = vadd.f32 %v1092, %v1300
        %v1302 = vpop.f32.mrf.mxu0
        %v1303 = vadd.f32 %v1094, %v1302
        %1304 = vmatprep.mubr.f32.mxu0 0.0
        %1305 = vmatmul.mubr.f32.gmra.mxu0 %v460
        %v1306 = vpop.f32.mrf.mxu0
        %v1307 = vadd.f32 %v1098, %v1306
        %v1308 = vpop.f32.mrf.mxu0
        %v1309 = vadd.f32 %v1100, %v1308
        %1310 = vmatprep.mubr.f32.mxu0 0.0
        %1311 = vmatmul.mubr.f32.gmra.mxu0 %v465
        %v1312 = vpop.f32.mrf.mxu0
        %v1313 = vadd.f32 %v1104, %v1312
        %v1314 = vpop.f32.mrf.mxu0
        %v1315 = vadd.f32 %v1106, %v1314
        %1316 = vmatprep.mubr.f32.mxu0 0.0
        %1317 = vmatmul.mubr.f32.gmra.mxu0 %v470
        %v1318 = vpop.f32.mrf.mxu0
        %v1319 = vadd.f32 %v1110, %v1318
        %v1320 = vpop.f32.mrf.mxu0
        %v1321 = vadd.f32 %v1112, %v1320
        %1322 = vmatprep.mubr.f32.mxu0 0.0
        %1323 = vmatmul.mubr.f32.gmra.mxu0 %v475
        %v1324 = vpop.f32.mrf.mxu0
        %v1325 = vadd.f32 %v1116, %v1324
        %v1326 = vpop.f32.mrf.mxu0
        %v1327 = vadd.f32 %v1118, %v1326
        %1328 = vmatprep.mubr.f32.mxu0 0.0
        %1329 = vmatmul.mubr.f32.gmra.mxu0 %v480
        %v1330 = vpop.f32.mrf.mxu0
        %v1331 = vadd.f32 %v1122, %v1330
        %v1332 = vpop.f32.mrf.mxu0
        %v1333 = vadd.f32 %v1124, %v1332
        %1334 = vmatprep.mubr.f32.mxu0 0.0
        %1335 = vmatmul.mubr.f32.gmra.mxu0 %v485
        %v1336 = vpop.f32.mrf.mxu0
        %v1337 = vadd.f32 %v1128, %v1336
        %v1338 = vpop.f32.mrf.mxu0
        %v1339 = vadd.f32 %v1130, %v1338
        %1340 = vmatprep.mubr.f32.mxu0 0.0
        %1341 = vmatmul.mubr.f32.gmra.mxu0 %v490
        %v1342 = vpop.f32.mrf.mxu0
        %v1343 = vadd.f32 %v1134, %v1342
        %v1344 = vpop.f32.mrf.mxu0
        %v1345 = vadd.f32 %v1136, %v1344
        %1346 = vmatprep.mubr.f32.mxu0 0.0
        %1347 = vmatmul.mubr.f32.gmra.mxu0 %v495
        %v1348 = vpop.f32.mrf.mxu0
        %v1349 = vadd.f32 %v1140, %v1348
        %v1350 = vpop.f32.mrf.mxu0
        %v1351 = vadd.f32 %v1142, %v1350
        %1352 = vmatprep.mubr.f32.mxu0 0.0
        %1353 = vmatmul.mubr.f32.gmra.mxu0 %v500
        %v1354 = vpop.f32.mrf.mxu0
        %v1355 = vadd.f32 %v1146, %v1354
        %v1356 = vpop.f32.mrf.mxu0
        %v1357 = vadd.f32 %v1148, %v1356
        %1358 = vmatprep.mubr.f32.mxu0 0.0
        %1359 = vmatmul.mubr.f32.gmra.mxu0 %v505
        %v1360 = vpop.f32.mrf.mxu0
        %v1361 = vadd.f32 %v1152, %v1360
        %v1362 = vpop.f32.mrf.mxu0
        %v1363 = vadd.f32 %v1154, %v1362
        %1364 = vmatprep.mubr.f32.mxu0 0.0
        %1365 = vmatmul.mubr.f32.gmra.mxu0 %v510
        %v1366 = vpop.f32.mrf.mxu0
        %v1367 = vadd.f32 %v1158, %v1366
        %v1368 = vpop.f32.mrf.mxu0
        %v1369 = vadd.f32 %v1160, %v1368
        %1370 = vmatprep.mubr.f32.mxu0 0.0
        %1371 = vmatmul.mubr.f32.gmra.mxu0 %v515
        %v1372 = vpop.f32.mrf.mxu0
        %v1373 = vadd.f32 %v1164, %v1372
        %v1374 = vpop.f32.mrf.mxu0
        %v1375 = vadd.f32 %v1166, %v1374
        %1376 = vmatprep.mubr.f32.mxu0 0.0
        %1377 = vmatmul.mubr.f32.gmra.mxu0 %v520
        %v1378 = vpop.f32.mrf.mxu0
        %v1379 = vadd.f32 %v1170, %v1378
        %v1380 = vpop.f32.mrf.mxu0
        %v1381 = vadd.f32 %v1172, %v1380
        %1382 = vmatprep.mubr.f32.mxu0 0.0
        %1383 = vmatmul.mubr.f32.gmra.mxu0 %v525
        %v1384 = vpop.f32.mrf.mxu0
        %v1385 = vadd.f32 %v1176, %v1384
        %v1386 = vpop.f32.mrf.mxu0
        %v1387 = vadd.f32 %v1178, %v1386
        %1388 = vmatprep.mubr.f32.mxu0 0.0
        %1389 = vmatmul.mubr.f32.gmra.mxu0 %v530
        %v1390 = vpop.f32.mrf.mxu0
        %v1391 = vadd.f32 %v1182, %v1390
        %v1392 = vpop.f32.mrf.mxu0
        %v1393 = vadd.f32 %v1184, %v1392
        %1394 = vmatprep.mubr.f32.mxu0 0.0
        %1395 = vmatmul.mubr.f32.gmra.mxu0 %v535
        %v1396 = vpop.f32.mrf.mxu0
        %v1397 = vadd.f32 %v1188, %v1396
        %v1398 = vpop.f32.mrf.mxu0
        %v1399 = vadd.f32 %v1190, %v1398
        %1400 = vmatprep.mubr.f32.mxu0 0.0
        %1401 = vmatmul.mubr.f32.gmra.mxu0 %v540
        %v1402 = vpop.f32.mrf.mxu0
        %v1403 = vadd.f32 %v1194, %v1402
        %v1404 = vpop.f32.mrf.mxu0
        %v1405 = vadd.f32 %v1196, %v1404
        %1406 = vmatprep.mubr.f32.mxu0 0.0
        %1407 = vmatmul.mubr.f32.gmra.mxu0 %v545
        %v1408 = vpop.f32.mrf.mxu0
        %v1409 = vadd.f32 %v1200, %v1408
        %v1410 = vpop.f32.mrf.mxu0
        %v1411 = vadd.f32 %v1202, %v1410
        %1412 = vdwg.mxu0
        %1413 = vmatprep.subr.mxu0 %v782
        %1414 = vmatpush1.xpose.msra.mxu0 %v781
        %1415 = vmatprep.subr.mxu0 %v777
        %1416 = vmatpush1.xpose.msra.mxu0 %v776
        %1417 = vmatprep.subr.mxu0 %v772
        %1418 = vmatpush1.xpose.msra.mxu0 %v771
        %1419 = vmatprep.subr.mxu0 %v767
        %1420 = vmatpush1.xpose.msra.mxu0 %v766
        %1421 = vmatprep.subr.mxu0 %v762
        %1422 = vmatpush1.xpose.msra.mxu0 %v761
        %1423 = vmatprep.subr.mxu0 %v757
        %1424 = vmatpush1.xpose.msra.mxu0 %v756
        %1425 = vmatprep.subr.mxu0 %v752
        %1426 = vmatpush1.xpose.msra.mxu0 %v751
        %1427 = vmatprep.subr.mxu0 %v747
        %1428 = vmatpush1.xpose.msra.mxu0 %v746
        %1429 = vmatprep.subr.mxu0 %v742
        %1430 = vmatpush1.xpose.msra.mxu0 %v741
        %1431 = vmatprep.subr.mxu0 %v737
        %1432 = vmatpush1.xpose.msra.mxu0 %v736
        %1433 = vmatprep.subr.mxu0 %v732
        %1434 = vmatpush1.xpose.msra.mxu0 %v731
        %1435 = vmatprep.subr.mxu0 %v727
        %1436 = vmatpush1.xpose.msra.mxu0 %v726
        %1437 = vmatprep.subr.mxu0 %v722
        %1438 = vmatpush1.xpose.msra.mxu0 %v721
        %1439 = vmatprep.subr.mxu0 %v717
        %1440 = vmatpush1.xpose.msra.mxu0 %v716
        %1441 = vmatprep.subr.mxu0 %v712
        %1442 = vmatpush1.xpose.msra.mxu0 %v711
        %1443 = vmatprep.subr.mxu0 %v707
        %1444 = vmatpush1.xpose.msra.mxu0 %v706
        %1445 = vmatprep.subr.mxu0 0.0
        %1446 = vmatpush2.xpose.msra.mxu0 0.0
        %1447 = vmatprep.subr.mxu0 0.0
        %1448 = vmatpush2.xpose.msra.mxu0 0.0
        %1449 = vmatprep.subr.mxu0 0.0
        %1450 = vmatpush2.xpose.msra.mxu0 0.0
        %1451 = vmatprep.subr.mxu0 0.0
        %1452 = vmatpush2.xpose.msra.mxu0 0.0
        %1453 = vmatprep.subr.mxu0 0.0
        %1454 = vmatpush2.xpose.msra.mxu0 0.0
        %1455 = vmatprep.subr.mxu0 0.0
        %1456 = vmatpush2.xpose.msra.mxu0 0.0
        %1457 = vmatprep.subr.mxu0 0.0
        %1458 = vmatpush2.xpose.msra.mxu0 0.0
        %1459 = vmatprep.subr.mxu0 0.0
        %1460 = vmatpush2.xpose.msra.mxu0 0.0
        %1461 = vmatprep.subr.mxu0 0.0
        %1462 = vmatpush2.xpose.msra.mxu0 0.0
        %1463 = vmatprep.subr.mxu0 0.0
        %1464 = vmatpush2.xpose.msra.mxu0 0.0
        %1465 = vmatprep.subr.mxu0 0.0
        %1466 = vmatpush2.xpose.msra.mxu0 0.0
        %1467 = vmatprep.subr.mxu0 0.0
        %1468 = vmatpush2.xpose.msra.mxu0 0.0
        %1469 = vmatprep.subr.mxu0 0.0
        %1470 = vmatpush2.xpose.msra.mxu0 0.0
        %1471 = vmatprep.subr.mxu0 0.0
        %1472 = vmatpush2.xpose.msra.mxu0 0.0
        %1473 = vmatprep.subr.mxu0 0.0
        %1474 = vmatpush2.xpose.msra.mxu0 0.0
        %1475 = vmatprep.subr.mxu0 0.0
        %1476 = vmatpush2.xpose.msra.mxu0 0.0
        %1477 = vmatprep.mubr.f32.mxu0 %v427
        %1478 = vmatmul.mubr.f32.gmra.mxu0 %v426
        %v1479 = vpop.f32.mrf.mxu0
        %v1480 = vadd.f32 0.0, %v1479
        %v1481 = vpop.f32.mrf.mxu0
        %1482 = vmatprep.mubr.f32.mxu0 %v432
        %1483 = vmatmul.mubr.f32.gmra.mxu0 %v431
        %v1484 = vpop.f32.mrf.mxu0
        %v1485 = vadd.f32 0.0, %v1484
        %v1486 = vpop.f32.mrf.mxu0
        %1487 = vmatprep.mubr.f32.mxu0 %v437
        %1488 = vmatmul.mubr.f32.gmra.mxu0 %v436
        %v1489 = vpop.f32.mrf.mxu0
        %v1490 = vadd.f32 0.0, %v1489
        %v1491 = vpop.f32.mrf.mxu0
        %1492 = vmatprep.mubr.f32.mxu0 %v442
        %1493 = vmatmul.mubr.f32.gmra.mxu0 %v441
        %v1494 = vpop.f32.mrf.mxu0
        %v1495 = vadd.f32 0.0, %v1494
        %v1496 = vpop.f32.mrf.mxu0
        %1497 = vmatprep.mubr.f32.mxu0 %v447
        %1498 = vmatmul.mubr.f32.gmra.mxu0 %v446
        %v1499 = vpop.f32.mrf.mxu0
        %v1500 = vadd.f32 0.0, %v1499
        %v1501 = vpop.f32.mrf.mxu0
        %1502 = vmatprep.mubr.f32.mxu0 %v452
        %1503 = vmatmul.mubr.f32.gmra.mxu0 %v451
        %v1504 = vpop.f32.mrf.mxu0
        %v1505 = vadd.f32 0.0, %v1504
        %v1506 = vpop.f32.mrf.mxu0
        %1507 = vmatprep.mubr.f32.mxu0 %v457
        %1508 = vmatmul.mubr.f32.gmra.mxu0 %v456
        %v1509 = vpop.f32.mrf.mxu0
        %v1510 = vadd.f32 0.0, %v1509
        %v1511 = vpop.f32.mrf.mxu0
        %1512 = vmatprep.mubr.f32.mxu0 %v462
        %1513 = vmatmul.mubr.f32.gmra.mxu0 %v461
        %v1514 = vpop.f32.mrf.mxu0
        %v1515 = vadd.f32 0.0, %v1514
        %v1516 = vpop.f32.mrf.mxu0
        %1517 = vmatprep.mubr.f32.mxu0 %v467
        %1518 = vmatmul.mubr.f32.gmra.mxu0 %v466
        %v1519 = vpop.f32.mrf.mxu0
        %v1520 = vadd.f32 0.0, %v1519
        %v1521 = vpop.f32.mrf.mxu0
        %1522 = vmatprep.mubr.f32.mxu0 %v472
        %1523 = vmatmul.mubr.f32.gmra.mxu0 %v471
        %v1524 = vpop.f32.mrf.mxu0
        %v1525 = vadd.f32 0.0, %v1524
        %v1526 = vpop.f32.mrf.mxu0
        %1527 = vmatprep.mubr.f32.mxu0 %v477
        %1528 = vmatmul.mubr.f32.gmra.mxu0 %v476
        %v1529 = vpop.f32.mrf.mxu0
        %v1530 = vadd.f32 0.0, %v1529
        %v1531 = vpop.f32.mrf.mxu0
        %1532 = vmatprep.mubr.f32.mxu0 %v482
        %1533 = vmatmul.mubr.f32.gmra.mxu0 %v481
        %v1534 = vpop.f32.mrf.mxu0
        %v1535 = vadd.f32 0.0, %v1534
        %v1536 = vpop.f32.mrf.mxu0
        %1537 = vmatprep.mubr.f32.mxu0 %v487
        %1538 = vmatmul.mubr.f32.gmra.mxu0 %v486
        %v1539 = vpop.f32.mrf.mxu0
        %v1540 = vadd.f32 0.0, %v1539
        %v1541 = vpop.f32.mrf.mxu0
        %1542 = vmatprep.mubr.f32.mxu0 %v492
        %1543 = vmatmul.mubr.f32.gmra.mxu0 %v491
        %v1544 = vpop.f32.mrf.mxu0
        %v1545 = vadd.f32 0.0, %v1544
        %v1546 = vpop.f32.mrf.mxu0
        %1547 = vmatprep.mubr.f32.mxu0 %v497
        %1548 = vmatmul.mubr.f32.gmra.mxu0 %v496
        %v1549 = vpop.f32.mrf.mxu0
        %v1550 = vadd.f32 0.0, %v1549
        %v1551 = vpop.f32.mrf.mxu0
        %1552 = vmatprep.mubr.f32.mxu0 %v502
        %1553 = vmatmul.mubr.f32.gmra.mxu0 %v501
        %v1554 = vpop.f32.mrf.mxu0
        %v1555 = vadd.f32 0.0, %v1554
        %v1556 = vpop.f32.mrf.mxu0
        %1557 = vmatprep.mubr.f32.mxu0 %v507
        %1558 = vmatmul.mubr.f32.gmra.mxu0 %v506
        %v1559 = vpop.f32.mrf.mxu0
        %v1560 = vadd.f32 0.0, %v1559
        %v1561 = vpop.f32.mrf.mxu0
        %1562 = vmatprep.mubr.f32.mxu0 %v512
        %1563 = vmatmul.mubr.f32.gmra.mxu0 %v511
        %v1564 = vpop.f32.mrf.mxu0
        %v1565 = vadd.f32 0.0, %v1564
        %v1566 = vpop.f32.mrf.mxu0
        %1567 = vmatprep.mubr.f32.mxu0 %v517
        %1568 = vmatmul.mubr.f32.gmra.mxu0 %v516
        %v1569 = vpop.f32.mrf.mxu0
        %v1570 = vadd.f32 0.0, %v1569
        %v1571 = vpop.f32.mrf.mxu0
        %1572 = vmatprep.mubr.f32.mxu0 %v522
        %1573 = vmatmul.mubr.f32.gmra.mxu0 %v521
        %v1574 = vpop.f32.mrf.mxu0
        %v1575 = vadd.f32 0.0, %v1574
        %v1576 = vpop.f32.mrf.mxu0
        %1577 = vmatprep.mubr.f32.mxu0 %v527
        %1578 = vmatmul.mubr.f32.gmra.mxu0 %v526
        %v1579 = vpop.f32.mrf.mxu0
        %v1580 = vadd.f32 0.0, %v1579
        %v1581 = vpop.f32.mrf.mxu0
        %1582 = vmatprep.mubr.f32.mxu0 %v532
        %1583 = vmatmul.mubr.f32.gmra.mxu0 %v531
        %v1584 = vpop.f32.mrf.mxu0
        %v1585 = vadd.f32 0.0, %v1584
        %v1586 = vpop.f32.mrf.mxu0
        %1587 = vmatprep.mubr.f32.mxu0 %v537
        %1588 = vmatmul.mubr.f32.gmra.mxu0 %v536
        %v1589 = vpop.f32.mrf.mxu0
        %v1590 = vadd.f32 0.0, %v1589
        %v1591 = vpop.f32.mrf.mxu0
        %1592 = vmatprep.mubr.f32.mxu0 %v542
        %1593 = vmatmul.mubr.f32.gmra.mxu0 %v541
        %v1594 = vpop.f32.mrf.mxu0
        %v1595 = vadd.f32 0.0, %v1594
        %v1596 = vpop.f32.mrf.mxu0
        %1597 = vdwg.mxu0
        %1598 = vmatprep.subr.mxu0 %v784
        %1599 = vmatpush1.xpose.msra.mxu0 %v783
        %1600 = vmatprep.subr.mxu0 %v779
        %1601 = vmatpush1.xpose.msra.mxu0 %v778
        %1602 = vmatprep.subr.mxu0 %v774
        %1603 = vmatpush1.xpose.msra.mxu0 %v773
        %1604 = vmatprep.subr.mxu0 %v769
        %1605 = vmatpush1.xpose.msra.mxu0 %v768
        %1606 = vmatprep.subr.mxu0 %v764
        %1607 = vmatpush1.xpose.msra.mxu0 %v763
        %1608 = vmatprep.subr.mxu0 %v759
        %1609 = vmatpush1.xpose.msra.mxu0 %v758
        %1610 = vmatprep.subr.mxu0 %v754
        %1611 = vmatpush1.xpose.msra.mxu0 %v753
        %1612 = vmatprep.subr.mxu0 %v749
        %1613 = vmatpush1.xpose.msra.mxu0 %v748
        %1614 = vmatprep.subr.mxu0 %v744
        %1615 = vmatpush1.xpose.msra.mxu0 %v743
        %1616 = vmatprep.subr.mxu0 %v739
        %1617 = vmatpush1.xpose.msra.mxu0 %v738
        %1618 = vmatprep.subr.mxu0 %v734
        %1619 = vmatpush1.xpose.msra.mxu0 %v733
        %1620 = vmatprep.subr.mxu0 %v729
        %1621 = vmatpush1.xpose.msra.mxu0 %v728
        %1622 = vmatprep.subr.mxu0 %v724
        %1623 = vmatpush1.xpose.msra.mxu0 %v723
        %1624 = vmatprep.subr.mxu0 %v719
        %1625 = vmatpush1.xpose.msra.mxu0 %v718
        %1626 = vmatprep.subr.mxu0 %v714
        %1627 = vmatpush1.xpose.msra.mxu0 %v713
        %1628 = vmatprep.subr.mxu0 %v709
        %1629 = vmatpush1.xpose.msra.mxu0 %v708
        %1630 = vmatprep.subr.mxu0 0.0
        %1631 = vmatpush2.xpose.msra.mxu0 0.0
        %1632 = vmatprep.subr.mxu0 0.0
        %1633 = vmatpush2.xpose.msra.mxu0 0.0
        %1634 = vmatprep.subr.mxu0 0.0
        %1635 = vmatpush2.xpose.msra.mxu0 0.0
        %1636 = vmatprep.subr.mxu0 0.0
        %1637 = vmatpush2.xpose.msra.mxu0 0.0
        %1638 = vmatprep.subr.mxu0 0.0
        %1639 = vmatpush2.xpose.msra.mxu0 0.0
        %1640 = vmatprep.subr.mxu0 0.0
        %1641 = vmatpush2.xpose.msra.mxu0 0.0
        %1642 = vmatprep.subr.mxu0 0.0
        %1643 = vmatpush2.xpose.msra.mxu0 0.0
        %1644 = vmatprep.subr.mxu0 0.0
        %1645 = vmatpush2.xpose.msra.mxu0 0.0
        %1646 = vmatprep.subr.mxu0 0.0
        %1647 = vmatpush2.xpose.msra.mxu0 0.0
        %1648 = vmatprep.subr.mxu0 0.0
        %1649 = vmatpush2.xpose.msra.mxu0 0.0
        %1650 = vmatprep.subr.mxu0 0.0
        %1651 = vmatpush2.xpose.msra.mxu0 0.0
        %1652 = vmatprep.subr.mxu0 0.0
        %1653 = vmatpush2.xpose.msra.mxu0 0.0
        %1654 = vmatprep.subr.mxu0 0.0
        %1655 = vmatpush2.xpose.msra.mxu0 0.0
        %1656 = vmatprep.subr.mxu0 0.0
        %1657 = vmatpush2.xpose.msra.mxu0 0.0
        %1658 = vmatprep.subr.mxu0 0.0
        %1659 = vmatpush2.xpose.msra.mxu0 0.0
        %1660 = vmatprep.subr.mxu0 0.0
        %1661 = vmatpush2.xpose.msra.mxu0 0.0
        %1662 = vmatprep.mubr.f32.mxu0 %v429
        %1663 = vmatmul.mubr.f32.gmra.mxu0 %v428
        %v1664 = vpop.f32.mrf.mxu0
        %v1665 = vadd.f32 %v1480, %v1664
        %v1666 = vpop.f32.mrf.mxu0
        %1667 = vmatprep.mubr.f32.mxu0 %v434
        %1668 = vmatmul.mubr.f32.gmra.mxu0 %v433
        %v1669 = vpop.f32.mrf.mxu0
        %v1670 = vadd.f32 %v1485, %v1669
        %v1671 = vpop.f32.mrf.mxu0
        %1672 = vmatprep.mubr.f32.mxu0 %v439
        %1673 = vmatmul.mubr.f32.gmra.mxu0 %v438
        %v1674 = vpop.f32.mrf.mxu0
        %v1675 = vadd.f32 %v1490, %v1674
        %v1676 = vpop.f32.mrf.mxu0
        %1677 = vmatprep.mubr.f32.mxu0 %v444
        %1678 = vmatmul.mubr.f32.gmra.mxu0 %v443
        %v1679 = vpop.f32.mrf.mxu0
        %v1680 = vadd.f32 %v1495, %v1679
        %v1681 = vpop.f32.mrf.mxu0
        %1682 = vmatprep.mubr.f32.mxu0 %v449
        %1683 = vmatmul.mubr.f32.gmra.mxu0 %v448
        %v1684 = vpop.f32.mrf.mxu0
        %v1685 = vadd.f32 %v1500, %v1684
        %v1686 = vpop.f32.mrf.mxu0
        %1687 = vmatprep.mubr.f32.mxu0 %v454
        %1688 = vmatmul.mubr.f32.gmra.mxu0 %v453
        %v1689 = vpop.f32.mrf.mxu0
        %v1690 = vadd.f32 %v1505, %v1689
        %v1691 = vpop.f32.mrf.mxu0
        %1692 = vmatprep.mubr.f32.mxu0 %v459
        %1693 = vmatmul.mubr.f32.gmra.mxu0 %v458
        %v1694 = vpop.f32.mrf.mxu0
        %v1695 = vadd.f32 %v1510, %v1694
        %v1696 = vpop.f32.mrf.mxu0
        %1697 = vmatprep.mubr.f32.mxu0 %v464
        %1698 = vmatmul.mubr.f32.gmra.mxu0 %v463
        %v1699 = vpop.f32.mrf.mxu0
        %v1700 = vadd.f32 %v1515, %v1699
        %v1701 = vpop.f32.mrf.mxu0
        %1702 = vmatprep.mubr.f32.mxu0 %v469
        %1703 = vmatmul.mubr.f32.gmra.mxu0 %v468
        %v1704 = vpop.f32.mrf.mxu0
        %v1705 = vadd.f32 %v1520, %v1704
        %v1706 = vpop.f32.mrf.mxu0
        %1707 = vmatprep.mubr.f32.mxu0 %v474
        %1708 = vmatmul.mubr.f32.gmra.mxu0 %v473
        %v1709 = vpop.f32.mrf.mxu0
        %v1710 = vadd.f32 %v1525, %v1709
        %v1711 = vpop.f32.mrf.mxu0
        %1712 = vmatprep.mubr.f32.mxu0 %v479
        %1713 = vmatmul.mubr.f32.gmra.mxu0 %v478
        %v1714 = vpop.f32.mrf.mxu0
        %v1715 = vadd.f32 %v1530, %v1714
        %v1716 = vpop.f32.mrf.mxu0
        %1717 = vmatprep.mubr.f32.mxu0 %v484
        %1718 = vmatmul.mubr.f32.gmra.mxu0 %v483
        %v1719 = vpop.f32.mrf.mxu0
        %v1720 = vadd.f32 %v1535, %v1719
        %v1721 = vpop.f32.mrf.mxu0
        %1722 = vmatprep.mubr.f32.mxu0 %v489
        %1723 = vmatmul.mubr.f32.gmra.mxu0 %v488
        %v1724 = vpop.f32.mrf.mxu0
        %v1725 = vadd.f32 %v1540, %v1724
        %v1726 = vpop.f32.mrf.mxu0
        %1727 = vmatprep.mubr.f32.mxu0 %v494
        %1728 = vmatmul.mubr.f32.gmra.mxu0 %v493
        %v1729 = vpop.f32.mrf.mxu0
        %v1730 = vadd.f32 %v1545, %v1729
        %v1731 = vpop.f32.mrf.mxu0
        %1732 = vmatprep.mubr.f32.mxu0 %v499
        %1733 = vmatmul.mubr.f32.gmra.mxu0 %v498
        %v1734 = vpop.f32.mrf.mxu0
        %v1735 = vadd.f32 %v1550, %v1734
        %v1736 = vpop.f32.mrf.mxu0
        %1737 = vmatprep.mubr.f32.mxu0 %v504
        %1738 = vmatmul.mubr.f32.gmra.mxu0 %v503
        %v1739 = vpop.f32.mrf.mxu0
        %v1740 = vadd.f32 %v1555, %v1739
        %v1741 = vpop.f32.mrf.mxu0
        %1742 = vmatprep.mubr.f32.mxu0 %v509
        %1743 = vmatmul.mubr.f32.gmra.mxu0 %v508
        %v1744 = vpop.f32.mrf.mxu0
        %v1745 = vadd.f32 %v1560, %v1744
        %v1746 = vpop.f32.mrf.mxu0
        %1747 = vmatprep.mubr.f32.mxu0 %v514
        %1748 = vmatmul.mubr.f32.gmra.mxu0 %v513
        %v1749 = vpop.f32.mrf.mxu0
        %v1750 = vadd.f32 %v1565, %v1749
        %v1751 = vpop.f32.mrf.mxu0
        %1752 = vmatprep.mubr.f32.mxu0 %v519
        %1753 = vmatmul.mubr.f32.gmra.mxu0 %v518
        %v1754 = vpop.f32.mrf.mxu0
        %v1755 = vadd.f32 %v1570, %v1754
        %v1756 = vpop.f32.mrf.mxu0
        %1757 = vmatprep.mubr.f32.mxu0 %v524
        %1758 = vmatmul.mubr.f32.gmra.mxu0 %v523
        %v1759 = vpop.f32.mrf.mxu0
        %v1760 = vadd.f32 %v1575, %v1759
        %v1761 = vpop.f32.mrf.mxu0
        %1762 = vmatprep.mubr.f32.mxu0 %v529
        %1763 = vmatmul.mubr.f32.gmra.mxu0 %v528
        %v1764 = vpop.f32.mrf.mxu0
        %v1765 = vadd.f32 %v1580, %v1764
        %v1766 = vpop.f32.mrf.mxu0
        %1767 = vmatprep.mubr.f32.mxu0 %v534
        %1768 = vmatmul.mubr.f32.gmra.mxu0 %v533
        %v1769 = vpop.f32.mrf.mxu0
        %v1770 = vadd.f32 %v1585, %v1769
        %v1771 = vpop.f32.mrf.mxu0
        %1772 = vmatprep.mubr.f32.mxu0 %v539
        %1773 = vmatmul.mubr.f32.gmra.mxu0 %v538
        %v1774 = vpop.f32.mrf.mxu0
        %v1775 = vadd.f32 %v1590, %v1774
        %v1776 = vpop.f32.mrf.mxu0
        %1777 = vmatprep.mubr.f32.mxu0 %v544
        %1778 = vmatmul.mubr.f32.gmra.mxu0 %v543
        %v1779 = vpop.f32.mrf.mxu0
        %v1780 = vadd.f32 %v1595, %v1779
        %v1781 = vpop.f32.mrf.mxu0
        %1782 = vdwg.mxu0
        %1783 = vmatprep.subr.mxu0 0.0
        %1784 = vmatpush1.xpose.msra.mxu0 %v785
        %1785 = vmatprep.subr.mxu0 0.0
        %1786 = vmatpush1.xpose.msra.mxu0 %v780
        %1787 = vmatprep.subr.mxu0 0.0
        %1788 = vmatpush1.xpose.msra.mxu0 %v775
        %1789 = vmatprep.subr.mxu0 0.0
        %1790 = vmatpush1.xpose.msra.mxu0 %v770
        %1791 = vmatprep.subr.mxu0 0.0
        %1792 = vmatpush1.xpose.msra.mxu0 %v765
        %1793 = vmatprep.subr.mxu0 0.0
        %1794 = vmatpush1.xpose.msra.mxu0 %v760
        %1795 = vmatprep.subr.mxu0 0.0
        %1796 = vmatpush1.xpose.msra.mxu0 %v755
        %1797 = vmatprep.subr.mxu0 0.0
        %1798 = vmatpush1.xpose.msra.mxu0 %v750
        %1799 = vmatprep.subr.mxu0 0.0
        %1800 = vmatpush1.xpose.msra.mxu0 %v745
        %1801 = vmatprep.subr.mxu0 0.0
        %1802 = vmatpush1.xpose.msra.mxu0 %v740
        %1803 = vmatprep.subr.mxu0 0.0
        %1804 = vmatpush1.xpose.msra.mxu0 %v735
        %1805 = vmatprep.subr.mxu0 0.0
        %1806 = vmatpush1.xpose.msra.mxu0 %v730
        %1807 = vmatprep.subr.mxu0 0.0
        %1808 = vmatpush1.xpose.msra.mxu0 %v725
        %1809 = vmatprep.subr.mxu0 0.0
        %1810 = vmatpush1.xpose.msra.mxu0 %v720
        %1811 = vmatprep.subr.mxu0 0.0
        %1812 = vmatpush1.xpose.msra.mxu0 %v715
        %1813 = vmatprep.subr.mxu0 0.0
        %1814 = vmatpush1.xpose.msra.mxu0 %v710
        %1815 = vmatprep.subr.mxu0 0.0
        %1816 = vmatpush2.xpose.msra.mxu0 0.0
        %1817 = vmatprep.subr.mxu0 0.0
        %1818 = vmatpush2.xpose.msra.mxu0 0.0
        %1819 = vmatprep.subr.mxu0 0.0
        %1820 = vmatpush2.xpose.msra.mxu0 0.0
        %1821 = vmatprep.subr.mxu0 0.0
        %1822 = vmatpush2.xpose.msra.mxu0 0.0
        %1823 = vmatprep.subr.mxu0 0.0
        %1824 = vmatpush2.xpose.msra.mxu0 0.0
        %1825 = vmatprep.subr.mxu0 0.0
        %1826 = vmatpush2.xpose.msra.mxu0 0.0
        %1827 = vmatprep.subr.mxu0 0.0
        %1828 = vmatpush2.xpose.msra.mxu0 0.0
        %1829 = vmatprep.subr.mxu0 0.0
        %1830 = vmatpush2.xpose.msra.mxu0 0.0
        %1831 = vmatprep.subr.mxu0 0.0
        %1832 = vmatpush2.xpose.msra.mxu0 0.0
        %1833 = vmatprep.subr.mxu0 0.0
        %1834 = vmatpush2.xpose.msra.mxu0 0.0
        %1835 = vmatprep.subr.mxu0 0.0
        %1836 = vmatpush2.xpose.msra.mxu0 0.0
        %1837 = vmatprep.subr.mxu0 0.0
        %1838 = vmatpush2.xpose.msra.mxu0 0.0
        %1839 = vmatprep.subr.mxu0 0.0
        %1840 = vmatpush2.xpose.msra.mxu0 0.0
        %1841 = vmatprep.subr.mxu0 0.0
        %1842 = vmatpush2.xpose.msra.mxu0 0.0
        %1843 = vmatprep.subr.mxu0 0.0
        %1844 = vmatpush2.xpose.msra.mxu0 0.0
        %1845 = vmatprep.subr.mxu0 0.0
        %1846 = vmatpush2.xpose.msra.mxu0 0.0
        %1847 = vmatprep.mubr.f32.mxu0 0.0
        %1848 = vmatmul.mubr.f32.gmra.mxu0 %v430
        %v1849 = vpop.f32.mrf.mxu0
        %v1850 = vadd.f32 %v1665, %v1849
        %v1851 = vpop.f32.mrf.mxu0
        %1852 = vmatprep.mubr.f32.mxu0 0.0
        %1853 = vmatmul.mubr.f32.gmra.mxu0 %v435
        %v1854 = vpop.f32.mrf.mxu0
        %v1855 = vadd.f32 %v1670, %v1854
        %v1856 = vpop.f32.mrf.mxu0
        %1857 = vmatprep.mubr.f32.mxu0 0.0
        %1858 = vmatmul.mubr.f32.gmra.mxu0 %v440
        %v1859 = vpop.f32.mrf.mxu0
        %v1860 = vadd.f32 %v1675, %v1859
        %v1861 = vpop.f32.mrf.mxu0
        %1862 = vmatprep.mubr.f32.mxu0 0.0
        %1863 = vmatmul.mubr.f32.gmra.mxu0 %v445
        %v1864 = vpop.f32.mrf.mxu0
        %v1865 = vadd.f32 %v1680, %v1864
        %v1866 = vpop.f32.mrf.mxu0
        %1867 = vmatprep.mubr.f32.mxu0 0.0
        %1868 = vmatmul.mubr.f32.gmra.mxu0 %v450
        %v1869 = vpop.f32.mrf.mxu0
        %v1870 = vadd.f32 %v1685, %v1869
        %v1871 = vpop.f32.mrf.mxu0
        %1872 = vmatprep.mubr.f32.mxu0 0.0
        %1873 = vmatmul.mubr.f32.gmra.mxu0 %v455
        %v1874 = vpop.f32.mrf.mxu0
        %v1875 = vadd.f32 %v1690, %v1874
        %v1876 = vpop.f32.mrf.mxu0
        %1877 = vmatprep.mubr.f32.mxu0 0.0
        %1878 = vmatmul.mubr.f32.gmra.mxu0 %v460
        %v1879 = vpop.f32.mrf.mxu0
        %v1880 = vadd.f32 %v1695, %v1879
        %v1881 = vpop.f32.mrf.mxu0
        %1882 = vmatprep.mubr.f32.mxu0 0.0
        %1883 = vmatmul.mubr.f32.gmra.mxu0 %v465
        %v1884 = vpop.f32.mrf.mxu0
        %v1885 = vadd.f32 %v1700, %v1884
        %v1886 = vpop.f32.mrf.mxu0
        %1887 = vmatprep.mubr.f32.mxu0 0.0
        %1888 = vmatmul.mubr.f32.gmra.mxu0 %v470
        %v1889 = vpop.f32.mrf.mxu0
        %v1890 = vadd.f32 %v1705, %v1889
        %v1891 = vpop.f32.mrf.mxu0
        %1892 = vmatprep.mubr.f32.mxu0 0.0
        %1893 = vmatmul.mubr.f32.gmra.mxu0 %v475
        %v1894 = vpop.f32.mrf.mxu0
        %v1895 = vadd.f32 %v1710, %v1894
        %v1896 = vpop.f32.mrf.mxu0
        %1897 = vmatprep.mubr.f32.mxu0 0.0
        %1898 = vmatmul.mubr.f32.gmra.mxu0 %v480
        %v1899 = vpop.f32.mrf.mxu0
        %v1900 = vadd.f32 %v1715, %v1899
        %v1901 = vpop.f32.mrf.mxu0
        %1902 = vmatprep.mubr.f32.mxu0 0.0
        %1903 = vmatmul.mubr.f32.gmra.mxu0 %v485
        %v1904 = vpop.f32.mrf.mxu0
        %v1905 = vadd.f32 %v1720, %v1904
        %v1906 = vpop.f32.mrf.mxu0
        %1907 = vmatprep.mubr.f32.mxu0 0.0
        %1908 = vmatmul.mubr.f32.gmra.mxu0 %v490
        %v1909 = vpop.f32.mrf.mxu0
        %v1910 = vadd.f32 %v1725, %v1909
        %v1911 = vpop.f32.mrf.mxu0
        %1912 = vmatprep.mubr.f32.mxu0 0.0
        %1913 = vmatmul.mubr.f32.gmra.mxu0 %v495
        %v1914 = vpop.f32.mrf.mxu0
        %v1915 = vadd.f32 %v1730, %v1914
        %v1916 = vpop.f32.mrf.mxu0
        %1917 = vmatprep.mubr.f32.mxu0 0.0
        %1918 = vmatmul.mubr.f32.gmra.mxu0 %v500
        %v1919 = vpop.f32.mrf.mxu0
        %v1920 = vadd.f32 %v1735, %v1919
        %v1921 = vpop.f32.mrf.mxu0
        %1922 = vmatprep.mubr.f32.mxu0 0.0
        %1923 = vmatmul.mubr.f32.gmra.mxu0 %v505
        %v1924 = vpop.f32.mrf.mxu0
        %v1925 = vadd.f32 %v1740, %v1924
        %v1926 = vpop.f32.mrf.mxu0
        %1927 = vmatprep.mubr.f32.mxu0 0.0
        %1928 = vmatmul.mubr.f32.gmra.mxu0 %v510
        %v1929 = vpop.f32.mrf.mxu0
        %v1930 = vadd.f32 %v1745, %v1929
        %v1931 = vpop.f32.mrf.mxu0
        %1932 = vmatprep.mubr.f32.mxu0 0.0
        %1933 = vmatmul.mubr.f32.gmra.mxu0 %v515
        %v1934 = vpop.f32.mrf.mxu0
        %v1935 = vadd.f32 %v1750, %v1934
        %v1936 = vpop.f32.mrf.mxu0
        %1937 = vmatprep.mubr.f32.mxu0 0.0
        %1938 = vmatmul.mubr.f32.gmra.mxu0 %v520
        %v1939 = vpop.f32.mrf.mxu0
        %v1940 = vadd.f32 %v1755, %v1939
        %v1941 = vpop.f32.mrf.mxu0
        %1942 = vmatprep.mubr.f32.mxu0 0.0
        %1943 = vmatmul.mubr.f32.gmra.mxu0 %v525
        %v1944 = vpop.f32.mrf.mxu0
        %v1945 = vadd.f32 %v1760, %v1944
        %v1946 = vpop.f32.mrf.mxu0
        %1947 = vmatprep.mubr.f32.mxu0 0.0
        %1948 = vmatmul.mubr.f32.gmra.mxu0 %v530
        %v1949 = vpop.f32.mrf.mxu0
        %v1950 = vadd.f32 %v1765, %v1949
        %v1951 = vpop.f32.mrf.mxu0
        %1952 = vmatprep.mubr.f32.mxu0 0.0
        %1953 = vmatmul.mubr.f32.gmra.mxu0 %v535
        %v1954 = vpop.f32.mrf.mxu0
        %v1955 = vadd.f32 %v1770, %v1954
        %v1956 = vpop.f32.mrf.mxu0
        %1957 = vmatprep.mubr.f32.mxu0 0.0
        %1958 = vmatmul.mubr.f32.gmra.mxu0 %v540
        %v1959 = vpop.f32.mrf.mxu0
        %v1960 = vadd.f32 %v1775, %v1959
        %v1961 = vpop.f32.mrf.mxu0
        %1962 = vmatprep.mubr.f32.mxu0 0.0
        %1963 = vmatmul.mubr.f32.gmra.mxu0 %v545
        %v1964 = vpop.f32.mrf.mxu0
        %v1965 = vadd.f32 %v1780, %v1964
        %v1966 = vpop.f32.mrf.mxu0
        %1967 = vdwg.mxu0
        %v1968 = vmul.f32 %v1271, 0.03952847
        %v1969 = vmul.f32 %v1273, 0.03952847
        %v1970 = vmul.f32 %v1850, 0.03952847
        %v1971 = vmul.f32 %v1277, 0.03952847
        %v1972 = vmul.f32 %v1279, 0.03952847
        %v1973 = vmul.f32 %v1855, 0.03952847
        %v1974 = vmul.f32 %v1283, 0.03952847
        %v1975 = vmul.f32 %v1285, 0.03952847
        %v1976 = vmul.f32 %v1860, 0.03952847
        %v1977 = vmul.f32 %v1289, 0.03952847
        %v1978 = vmul.f32 %v1291, 0.03952847
        %v1979 = vmul.f32 %v1865, 0.03952847
        %v1980 = vmul.f32 %v1295, 0.03952847
        %v1981 = vmul.f32 %v1297, 0.03952847
        %v1982 = vmul.f32 %v1870, 0.03952847
        %v1983 = vmul.f32 %v1301, 0.03952847
        %v1984 = vmul.f32 %v1303, 0.03952847
        %v1985 = vmul.f32 %v1875, 0.03952847
        %v1986 = vmul.f32 %v1307, 0.03952847
        %v1987 = vmul.f32 %v1309, 0.03952847
        %v1988 = vmul.f32 %v1880, 0.03952847
        %v1989 = vmul.f32 %v1313, 0.03952847
        %v1990 = vmul.f32 %v1315, 0.03952847
        %v1991 = vmul.f32 %v1885, 0.03952847
        %v1992 = vmul.f32 %v1319, 0.03952847
        %v1993 = vmul.f32 %v1321, 0.03952847
        %v1994 = vmul.f32 %v1890, 0.03952847
        %v1995 = vmul.f32 %v1325, 0.03952847
        %v1996 = vmul.f32 %v1327, 0.03952847
        %v1997 = vmul.f32 %v1895, 0.03952847
        %v1998 = vmul.f32 %v1331, 0.03952847
        %v1999 = vmul.f32 %v1333, 0.03952847
        %v2000 = vmul.f32 %v1900, 0.03952847
        %v2001 = vmul.f32 %v1337, 0.03952847
        %v2002 = vmul.f32 %v1339, 0.03952847
        %v2003 = vmul.f32 %v1905, 0.03952847
        %v2004 = vmul.f32 %v1343, 0.03952847
        %v2005 = vmul.f32 %v1345, 0.03952847
        %v2006 = vmul.f32 %v1910, 0.03952847
        %v2007 = vmul.f32 %v1349, 0.03952847
        %v2008 = vmul.f32 %v1351, 0.03952847
        %v2009 = vmul.f32 %v1915, 0.03952847
        %v2010 = vmul.f32 %v1355, 0.03952847
        %v2011 = vmul.f32 %v1357, 0.03952847
        %v2012 = vmul.f32 %v1920, 0.03952847
        %v2013 = vmul.f32 %v1361, 0.03952847
        %v2014 = vmul.f32 %v1363, 0.03952847
        %v2015 = vmul.f32 %v1925, 0.03952847
        %v2016 = vmul.f32 %v1367, 0.03952847
        %v2017 = vmul.f32 %v1369, 0.03952847
        %v2018 = vmul.f32 %v1930, 0.03952847
        %v2019 = vmul.f32 %v1373, 0.03952847
        %v2020 = vmul.f32 %v1375, 0.03952847
        %v2021 = vmul.f32 %v1935, 0.03952847
        %v2022 = vmul.f32 %v1379, 0.03952847
        %v2023 = vmul.f32 %v1381, 0.03952847
        %v2024 = vmul.f32 %v1940, 0.03952847
        %v2025 = vmul.f32 %v1385, 0.03952847
        %v2026 = vmul.f32 %v1387, 0.03952847
        %v2027 = vmul.f32 %v1945, 0.03952847
        %v2028 = vmul.f32 %v1391, 0.03952847
        %v2029 = vmul.f32 %v1393, 0.03952847
        %v2030 = vmul.f32 %v1950, 0.03952847
        %v2031 = vmul.f32 %v1397, 0.03952847
        %v2032 = vmul.f32 %v1399, 0.03952847
        %v2033 = vmul.f32 %v1955, 0.03952847
        %v2034 = vmul.f32 %v1403, 0.03952847
        %v2035 = vmul.f32 %v1405, 0.03952847
        %v2036 = vmul.f32 %v1960, 0.03952847
        %v2037 = vmul.f32 %v1409, 0.03952847
        %v2038 = vmul.f32 %v1411, 0.03952847
        %v2039 = vmul.f32 %v1965, 0.03952847
        %v2040 = vld [vmem:[%s366] sm:$0xff]
        %v2041 = vld [vmem:[%s366 + $0x8] sm:$0xff]
        %v2042 = vld [vmem:[%s366 + $0x10] sm:$0xff]
        %v2043 = vld [vmem:[%s366 + $0x18] sm:$0xff]
        %v2044 = vld [vmem:[%s366 + $0x20] sm:$0xff]
        %v2045 = vld [vmem:[%s366 + $0x28] sm:$0xff]
        %v2046 = vld [vmem:[%s366 + $0x30] sm:$0xff]
        %v2047 = vld [vmem:[%s366 + $0x38] sm:$0xff]
        %v2048 = vld [vmem:[%s366 + $0x40] sm:$0xff]
        %v2049 = vld [vmem:[%s366 + $0x48] sm:$0xff]
        %v2050 = vld [vmem:[%s366 + $0x50] sm:$0xff]
        %v2051 = vld [vmem:[%s366 + $0x58] sm:$0xff]
        %v2052 = vld [vmem:[%s366 + $0x60] sm:$0xff]
        %v2053 = vld [vmem:[%s366 + $0x68] sm:$0xff]
        %v2054 = vld [vmem:[%s366 + $0x70] sm:$0xff]
        %v2055 = vld [vmem:[%s366 + $0x78] sm:$0xff]
        %v2056 = vld [vmem:[%s366 + $0x80] sm:$0xff]
        %v2057 = vld [vmem:[%s366 + $0x88] sm:$0xff]
        %v2058 = vld [vmem:[%s366 + $0x90] sm:$0xff]
        %v2059 = vld [vmem:[%s366 + $0x98] sm:$0xff]
        %v2060 = vld [vmem:[%s366 + $0xa0] sm:$0xff]
        %v2061 = vld [vmem:[%s366 + $0xa8] sm:$0xff]
        %v2062 = vld [vmem:[%s366 + $0xb0] sm:$0xff]
        %v2063 = vld [vmem:[%s366 + $0xb8] sm:$0xff]
        %v2064 = vld [vmem:[%s366 + $0xc0] sm:$0xff]
        %v2065 = vld [vmem:[%s366 + $0xc8] sm:$0xff]
        %v2066 = vld [vmem:[%s366 + $0xd0] sm:$0xff]
        %v2067 = vld [vmem:[%s366 + $0xd8] sm:$0xff]
        %v2068 = vld [vmem:[%s366 + $0xe0] sm:$0xff]
        %v2069 = vld [vmem:[%s366 + $0xe8] sm:$0xff]
        %v2070 = vld [vmem:[%s366 + $0xf0] sm:$0xff]
        %v2071 = vld [vmem:[%s366 + $0xf8] sm:$0xff]
        %v2072 = vld [vmem:[%s366 + $0x100] sm:$0xff]
        %v2073 = vld [vmem:[%s366 + $0x108] sm:$0xff]
        %v2074 = vld [vmem:[%s366 + $0x110] sm:$0xff]
        %v2075 = vld [vmem:[%s366 + $0x118] sm:$0xff]
        %v2076 = vld [vmem:[%s366 + $0x120] sm:$0xff]
        %v2077 = vld [vmem:[%s366 + $0x128] sm:$0xff]
        %v2078 = vld [vmem:[%s366 + $0x130] sm:$0xff]
        %v2079 = vld [vmem:[%s366 + $0x138] sm:$0xff]
        %v2080 = vld [vmem:[%s366 + $0x140] sm:$0xff]
        %v2081 = vld [vmem:[%s366 + $0x148] sm:$0xff]
        %v2082 = vld [vmem:[%s366 + $0x150] sm:$0xff]
        %v2083 = vld [vmem:[%s366 + $0x158] sm:$0xff]
        %v2084 = vld [vmem:[%s366 + $0x160] sm:$0xff]
        %v2085 = vld [vmem:[%s366 + $0x168] sm:$0xff]
        %v2086 = vld [vmem:[%s366 + $0x170] sm:$0xff]
        %v2087 = vld [vmem:[%s366 + $0x178] sm:$0xff]
        %v2088 = vld [vmem:[%s366 + $0x180] sm:$0xff]
        %v2089 = vld [vmem:[%s366 + $0x188] sm:$0xff]
        %v2090 = vld [vmem:[%s366 + $0x190] sm:$0xff]
        %v2091 = vld [vmem:[%s366 + $0x198] sm:$0xff]
        %v2092 = vld [vmem:[%s366 + $0x1a0] sm:$0xff]
        %v2093 = vld [vmem:[%s366 + $0x1a8] sm:$0xff]
        %v2094 = vld [vmem:[%s366 + $0x1b0] sm:$0xff]
        %v2095 = vld [vmem:[%s366 + $0x1b8] sm:$0xff]
        %v2096 = vld [vmem:[%s366 + $0x1c0] sm:$0xff]
        %v2097 = vld [vmem:[%s366 + $0x1c8] sm:$0xff]
        %v2098 = vld [vmem:[%s366 + $0x1d0] sm:$0xff]
        %v2099 = vld [vmem:[%s366 + $0x1d8] sm:$0xff]
        %v2100 = vld [vmem:[%s366 + $0x1e0] sm:$0xff]
        %v2101 = vld [vmem:[%s366 + $0x1e8] sm:$0xff]
        %v2102 = vld [vmem:[%s366 + $0x1f0] sm:$0xff]
        %v2103 = vld [vmem:[%s366 + $0x1f8] sm:$0xff]
        %v2104 = vld [vmem:[%s366 + $0x200] sm:$0xff]
        %v2105 = vld [vmem:[%s366 + $0x208] sm:$0xff]
        %v2106 = vld [vmem:[%s366 + $0x210] sm:$0xff]
        %v2107 = vld [vmem:[%s366 + $0x218] sm:$0xff]
        %v2108 = vld [vmem:[%s366 + $0x220] sm:$0xff]
        %v2109 = vld [vmem:[%s366 + $0x228] sm:$0xff]
        %v2110 = vld [vmem:[%s366 + $0x230] sm:$0xff]
        %v2111 = vld [vmem:[%s366 + $0x238] sm:$0xff]
        %v2112 = vadd.f32 %v1968, %v2040
        %v2113 = vadd.f32 %v1969, %v2041
        %v2114 = vadd.f32 %v1970, %v2042
        %v2115 = vadd.f32 %v1971, %v2043
        %v2116 = vadd.f32 %v1972, %v2044
        %v2117 = vadd.f32 %v1973, %v2045
        %v2118 = vadd.f32 %v1974, %v2046
        %v2119 = vadd.f32 %v1975, %v2047
        %v2120 = vadd.f32 %v1976, %v2048
        %v2121 = vadd.f32 %v1977, %v2049
        %v2122 = vadd.f32 %v1978, %v2050
        %v2123 = vadd.f32 %v1979, %v2051
        %v2124 = vadd.f32 %v1980, %v2052
        %v2125 = vadd.f32 %v1981, %v2053
        %v2126 = vadd.f32 %v1982, %v2054
        %v2127 = vadd.f32 %v1983, %v2055
        %v2128 = vadd.f32 %v1984, %v2056
        %v2129 = vadd.f32 %v1985, %v2057
        %v2130 = vadd.f32 %v1986, %v2058
        %v2131 = vadd.f32 %v1987, %v2059
        %v2132 = vadd.f32 %v1988, %v2060
        %v2133 = vadd.f32 %v1989, %v2061
        %v2134 = vadd.f32 %v1990, %v2062
        %v2135 = vadd.f32 %v1991, %v2063
        %v2136 = vadd.f32 %v1992, %v2064
        %v2137 = vadd.f32 %v1993, %v2065
        %v2138 = vadd.f32 %v1994, %v2066
        %v2139 = vadd.f32 %v1995, %v2067
        %v2140 = vadd.f32 %v1996, %v2068
        %v2141 = vadd.f32 %v1997, %v2069
        %v2142 = vadd.f32 %v1998, %v2070
        %v2143 = vadd.f32 %v1999, %v2071
        %v2144 = vadd.f32 %v2000, %v2072
        %v2145 = vadd.f32 %v2001, %v2073
        %v2146 = vadd.f32 %v2002, %v2074
        %v2147 = vadd.f32 %v2003, %v2075
        %v2148 = vadd.f32 %v2004, %v2076
        %v2149 = vadd.f32 %v2005, %v2077
        %v2150 = vadd.f32 %v2006, %v2078
        %v2151 = vadd.f32 %v2007, %v2079
        %v2152 = vadd.f32 %v2008, %v2080
        %v2153 = vadd.f32 %v2009, %v2081
        %v2154 = vadd.f32 %v2010, %v2082
        %v2155 = vadd.f32 %v2011, %v2083
        %v2156 = vadd.f32 %v2012, %v2084
        %v2157 = vadd.f32 %v2013, %v2085
        %v2158 = vadd.f32 %v2014, %v2086
        %v2159 = vadd.f32 %v2015, %v2087
        %v2160 = vadd.f32 %v2016, %v2088
        %v2161 = vadd.f32 %v2017, %v2089
        %v2162 = vadd.f32 %v2018, %v2090
        %v2163 = vadd.f32 %v2019, %v2091
        %v2164 = vadd.f32 %v2020, %v2092
        %v2165 = vadd.f32 %v2021, %v2093
        %v2166 = vadd.f32 %v2022, %v2094
        %v2167 = vadd.f32 %v2023, %v2095
        %v2168 = vadd.f32 %v2024, %v2096
        %v2169 = vadd.f32 %v2025, %v2097
        %v2170 = vadd.f32 %v2026, %v2098
        %v2171 = vadd.f32 %v2027, %v2099
        %v2172 = vadd.f32 %v2028, %v2100
        %v2173 = vadd.f32 %v2029, %v2101
        %v2174 = vadd.f32 %v2030, %v2102
        %v2175 = vadd.f32 %v2031, %v2103
        %v2176 = vadd.f32 %v2032, %v2104
        %v2177 = vadd.f32 %v2033, %v2105
        %v2178 = vadd.f32 %v2034, %v2106
        %v2179 = vadd.f32 %v2035, %v2107
        %v2180 = vadd.f32 %v2036, %v2108
        %v2181 = vadd.f32 %v2037, %v2109
        %v2182 = vadd.f32 %v2038, %v2110
        %v2183 = vadd.f32 %v2039, %v2111
        %v2184 = vmax.f32 %v2112, %v2113
        %v2185 = vmax.f32 %v2184, %v2114
        %2186 = vmax.xlane.f32.xlu0 %v2185
        %v2187 = vpop.xlane.xlu0 %2186
        %v2188 = vmax.f32 %v2115, %v2116
        %v2189 = vmax.f32 %v2188, %v2117
        %2190 = vmax.xlane.f32.xlu0 %v2189
        %v2191 = vpop.xlane.xlu0 %2190
        %v2192 = vmax.f32 %v2118, %v2119
        %v2193 = vmax.f32 %v2192, %v2120
        %2194 = vmax.xlane.f32.xlu0 %v2193
        %v2195 = vpop.xlane.xlu0 %2194
        %v2196 = vmax.f32 %v2121, %v2122
        %v2197 = vmax.f32 %v2196, %v2123
        %2198 = vmax.xlane.f32.xlu0 %v2197
        %v2199 = vpop.xlane.xlu0 %2198
        %v2200 = vmax.f32 %v2124, %v2125
        %v2201 = vmax.f32 %v2200, %v2126
        %2202 = vmax.xlane.f32.xlu0 %v2201
        %v2203 = vpop.xlane.xlu0 %2202
        %v2204 = vmax.f32 %v2127, %v2128
        %v2205 = vmax.f32 %v2204, %v2129
        %2206 = vmax.xlane.f32.xlu0 %v2205
        %v2207 = vpop.xlane.xlu0 %2206
        %v2208 = vmax.f32 %v2130, %v2131
        %v2209 = vmax.f32 %v2208, %v2132
        %2210 = vmax.xlane.f32.xlu0 %v2209
        %v2211 = vpop.xlane.xlu0 %2210
        %v2212 = vmax.f32 %v2133, %v2134
        %v2213 = vmax.f32 %v2212, %v2135
        %2214 = vmax.xlane.f32.xlu0 %v2213
        %v2215 = vpop.xlane.xlu0 %2214
        %v2216 = vmax.f32 %v2136, %v2137
        %v2217 = vmax.f32 %v2216, %v2138
        %2218 = vmax.xlane.f32.xlu0 %v2217
        %v2219 = vpop.xlane.xlu0 %2218
        %v2220 = vmax.f32 %v2139, %v2140
        %v2221 = vmax.f32 %v2220, %v2141
        %2222 = vmax.xlane.f32.xlu0 %v2221
        %v2223 = vpop.xlane.xlu0 %2222
        %v2224 = vmax.f32 %v2142, %v2143
        %v2225 = vmax.f32 %v2224, %v2144
        %2226 = vmax.xlane.f32.xlu0 %v2225
        %v2227 = vpop.xlane.xlu0 %2226
        %v2228 = vmax.f32 %v2145, %v2146
        %v2229 = vmax.f32 %v2228, %v2147
        %2230 = vmax.xlane.f32.xlu0 %v2229
        %v2231 = vpop.xlane.xlu0 %2230
        %v2232 = vmax.f32 %v2148, %v2149
        %v2233 = vmax.f32 %v2232, %v2150
        %2234 = vmax.xlane.f32.xlu0 %v2233
        %v2235 = vpop.xlane.xlu0 %2234
        %v2236 = vmax.f32 %v2151, %v2152
        %v2237 = vmax.f32 %v2236, %v2153
        %2238 = vmax.xlane.f32.xlu0 %v2237
        %v2239 = vpop.xlane.xlu0 %2238
        %v2240 = vmax.f32 %v2154, %v2155
        %v2241 = vmax.f32 %v2240, %v2156
        %2242 = vmax.xlane.f32.xlu0 %v2241
        %v2243 = vpop.xlane.xlu0 %2242
        %v2244 = vmax.f32 %v2157, %v2158
        %v2245 = vmax.f32 %v2244, %v2159
        %2246 = vmax.xlane.f32.xlu0 %v2245
        %v2247 = vpop.xlane.xlu0 %2246
        %v2248 = vmax.f32 %v2160, %v2161
        %v2249 = vmax.f32 %v2248, %v2162
        %2250 = vmax.xlane.f32.xlu0 %v2249
        %v2251 = vpop.xlane.xlu0 %2250
        %v2252 = vmax.f32 %v2163, %v2164
        %v2253 = vmax.f32 %v2252, %v2165
        %2254 = vmax.xlane.f32.xlu0 %v2253
        %v2255 = vpop.xlane.xlu0 %2254
        %v2256 = vmax.f32 %v2166, %v2167
        %v2257 = vmax.f32 %v2256, %v2168
        %2258 = vmax.xlane.f32.xlu0 %v2257
        %v2259 = vpop.xlane.xlu0 %2258
        %v2260 = vmax.f32 %v2169, %v2170
        %v2261 = vmax.f32 %v2260, %v2171
        %2262 = vmax.xlane.f32.xlu0 %v2261
        %v2263 = vpop.xlane.xlu0 %2262
        %v2264 = vmax.f32 %v2172, %v2173
        %v2265 = vmax.f32 %v2264, %v2174
        %2266 = vmax.xlane.f32.xlu0 %v2265
        %v2267 = vpop.xlane.xlu0 %2266
        %v2268 = vmax.f32 %v2175, %v2176
        %v2269 = vmax.f32 %v2268, %v2177
        %2270 = vmax.xlane.f32.xlu0 %v2269
        %v2271 = vpop.xlane.xlu0 %2270
        %v2272 = vmax.f32 %v2178, %v2179
        %v2273 = vmax.f32 %v2272, %v2180
        %2274 = vmax.xlane.f32.xlu0 %v2273
        %v2275 = vpop.xlane.xlu0 %2274
        %v2276 = vmax.f32 %v2181, %v2182
        %v2277 = vmax.f32 %v2276, %v2183
        %2278 = vmax.xlane.f32.xlu0 %v2277
        %v2279 = vpop.xlane.xlu0 %2278
        %v2280 = vsub.f32 %v2112, %v2187
        %v2281 = vsub.f32 %v2113, %v2187
        %v2282 = vsub.f32 %v2114, %v2187
        %v2283 = vsub.f32 %v2115, %v2191
        %v2284 = vsub.f32 %v2116, %v2191
        %v2285 = vsub.f32 %v2117, %v2191
        %v2286 = vsub.f32 %v2118, %v2195
        %v2287 = vsub.f32 %v2119, %v2195
        %v2288 = vsub.f32 %v2120, %v2195
        %v2289 = vsub.f32 %v2121, %v2199
        %v2290 = vsub.f32 %v2122, %v2199
        %v2291 = vsub.f32 %v2123, %v2199
        %v2292 = vsub.f32 %v2124, %v2203
        %v2293 = vsub.f32 %v2125, %v2203
        %v2294 = vsub.f32 %v2126, %v2203
        %v2295 = vsub.f32 %v2127, %v2207
        %v2296 = vsub.f32 %v2128, %v2207
        %v2297 = vsub.f32 %v2129, %v2207
        %v2298 = vsub.f32 %v2130, %v2211
        %v2299 = vsub.f32 %v2131, %v2211
        %v2300 = vsub.f32 %v2132, %v2211
        %v2301 = vsub.f32 %v2133, %v2215
        %v2302 = vsub.f32 %v2134, %v2215
        %v2303 = vsub.f32 %v2135, %v2215
        %v2304 = vsub.f32 %v2136, %v2219
        %v2305 = vsub.f32 %v2137, %v2219
        %v2306 = vsub.f32 %v2138, %v2219
        %v2307 = vsub.f32 %v2139, %v2223
        %v2308 = vsub.f32 %v2140, %v2223
        %v2309 = vsub.f32 %v2141, %v2223
        %v2310 = vsub.f32 %v2142, %v2227
        %v2311 = vsub.f32 %v2143, %v2227
        %v2312 = vsub.f32 %v2144, %v2227
        %v2313 = vsub.f32 %v2145, %v2231
        %v2314 = vsub.f32 %v2146, %v2231
        %v2315 = vsub.f32 %v2147, %v2231
        %v2316 = vsub.f32 %v2148, %v2235
        %v2317 = vsub.f32 %v2149, %v2235
        %v2318 = vsub.f32 %v2150, %v2235
        %v2319 = vsub.f32 %v2151, %v2239
        %v2320 = vsub.f32 %v2152, %v2239
        %v2321 = vsub.f32 %v2153, %v2239
        %v2322 = vsub.f32 %v2154, %v2243
        %v2323 = vsub.f32 %v2155, %v2243
        %v2324 = vsub.f32 %v2156, %v2243
        %v2325 = vsub.f32 %v2157, %v2247
        %v2326 = vsub.f32 %v2158, %v2247
        %v2327 = vsub.f32 %v2159, %v2247
        %v2328 = vsub.f32 %v2160, %v2251
        %v2329 = vsub.f32 %v2161, %v2251
        %v2330 = vsub.f32 %v2162, %v2251
        %v2331 = vsub.f32 %v2163, %v2255
        %v2332 = vsub.f32 %v2164, %v2255
        %v2333 = vsub.f32 %v2165, %v2255
        %v2334 = vsub.f32 %v2166, %v2259
        %v2335 = vsub.f32 %v2167, %v2259
        %v2336 = vsub.f32 %v2168, %v2259
        %v2337 = vsub.f32 %v2169, %v2263
        %v2338 = vsub.f32 %v2170, %v2263
        %v2339 = vsub.f32 %v2171, %v2263
        %v2340 = vsub.f32 %v2172, %v2267
        %v2341 = vsub.f32 %v2173, %v2267
        %v2342 = vsub.f32 %v2174, %v2267
        %v2343 = vsub.f32 %v2175, %v2271
        %v2344 = vsub.f32 %v2176, %v2271
        %v2345 = vsub.f32 %v2177, %v2271
        %v2346 = vsub.f32 %v2178, %v2275
        %v2347 = vsub.f32 %v2179, %v2275
        %v2348 = vsub.f32 %v2180, %v2275
        %v2349 = vsub.f32 %v2181, %v2279
        %v2350 = vsub.f32 %v2182, %v2279
        %v2351 = vsub.f32 %v2183, %v2279
        %v2352 = vmul.f32 %v2280, 1.442695
        %v2353 = vpow.pop %v2352
        %v2354 = vmul.f32 %v2281, 1.442695
        %v2355 = vpow.pop %v2354
        %v2356 = vmul.f32 %v2282, 1.442695
        %v2357 = vpow.pop %v2356
        %v2358 = vmul.f32 %v2283, 1.442695
        %v2359 = vpow.pop %v2358
        %v2360 = vmul.f32 %v2284, 1.442695
        %v2361 = vpow.pop %v2360
        %v2362 = vmul.f32 %v2285, 1.442695
        %v2363 = vpow.pop %v2362
        %v2364 = vmul.f32 %v2286, 1.442695
        %v2365 = vpow.pop %v2364
        %v2366 = vmul.f32 %v2287, 1.442695
        %v2367 = vpow.pop %v2366
        %v2368 = vmul.f32 %v2288, 1.442695
        %v2369 = vpow.pop %v2368
        %v2370 = vmul.f32 %v2289, 1.442695
        %v2371 = vpow.pop %v2370
        %v2372 = vmul.f32 %v2290, 1.442695
        %v2373 = vpow.pop %v2372
        %v2374 = vmul.f32 %v2291, 1.442695
        %v2375 = vpow.pop %v2374
        %v2376 = vmul.f32 %v2292, 1.442695
        %v2377 = vpow.pop %v2376
        %v2378 = vmul.f32 %v2293, 1.442695
        %v2379 = vpow.pop %v2378
        %v2380 = vmul.f32 %v2294, 1.442695
        %v2381 = vpow.pop %v2380
        %v2382 = vmul.f32 %v2295, 1.442695
        %v2383 = vpow.pop %v2382
        %v2384 = vmul.f32 %v2296, 1.442695
        %v2385 = vpow.pop %v2384
        %v2386 = vmul.f32 %v2297, 1.442695
        %v2387 = vpow.pop %v2386
        %v2388 = vmul.f32 %v2298, 1.442695
        %v2389 = vpow.pop %v2388
        %v2390 = vmul.f32 %v2299, 1.442695
        %v2391 = vpow.pop %v2390
        %v2392 = vmul.f32 %v2300, 1.442695
        %v2393 = vpow.pop %v2392
        %v2394 = vmul.f32 %v2301, 1.442695
        %v2395 = vpow.pop %v2394
        %v2396 = vmul.f32 %v2302, 1.442695
        %v2397 = vpow.pop %v2396
        %v2398 = vmul.f32 %v2303, 1.442695
        %v2399 = vpow.pop %v2398
        %v2400 = vmul.f32 %v2304, 1.442695
        %v2401 = vpow.pop %v2400
        %v2402 = vmul.f32 %v2305, 1.442695
        %v2403 = vpow.pop %v2402
        %v2404 = vmul.f32 %v2306, 1.442695
        %v2405 = vpow.pop %v2404
        %v2406 = vmul.f32 %v2307, 1.442695
        %v2407 = vpow.pop %v2406
        %v2408 = vmul.f32 %v2308, 1.442695
        %v2409 = vpow.pop %v2408
        %v2410 = vmul.f32 %v2309, 1.442695
        %v2411 = vpow.pop %v2410
        %v2412 = vmul.f32 %v2310, 1.442695
        %v2413 = vpow.pop %v2412
        %v2414 = vmul.f32 %v2311, 1.442695
        %v2415 = vpow.pop %v2414
        %v2416 = vmul.f32 %v2312, 1.442695
        %v2417 = vpow.pop %v2416
        %v2418 = vmul.f32 %v2313, 1.442695
        %v2419 = vpow.pop %v2418
        %v2420 = vmul.f32 %v2314, 1.442695
        %v2421 = vpow.pop %v2420
        %v2422 = vmul.f32 %v2315, 1.442695
        %v2423 = vpow.pop %v2422
        %v2424 = vmul.f32 %v2316, 1.442695
        %v2425 = vpow.pop %v2424
        %v2426 = vmul.f32 %v2317, 1.442695
        %v2427 = vpow.pop %v2426
        %v2428 = vmul.f32 %v2318, 1.442695
        %v2429 = vpow.pop %v2428
        %v2430 = vmul.f32 %v2319, 1.442695
        %v2431 = vpow.pop %v2430
        %v2432 = vmul.f32 %v2320, 1.442695
        %v2433 = vpow.pop %v2432
        %v2434 = vmul.f32 %v2321, 1.442695
        %v2435 = vpow.pop %v2434
        %v2436 = vmul.f32 %v2322, 1.442695
        %v2437 = vpow.pop %v2436
        %v2438 = vmul.f32 %v2323, 1.442695
        %v2439 = vpow.pop %v2438
        %v2440 = vmul.f32 %v2324, 1.442695
        %v2441 = vpow.pop %v2440
        %v2442 = vmul.f32 %v2325, 1.442695
        %v2443 = vpow.pop %v2442
        %v2444 = vmul.f32 %v2326, 1.442695
        %v2445 = vpow.pop %v2444
        %v2446 = vmul.f32 %v2327, 1.442695
        %v2447 = vpow.pop %v2446
        %v2448 = vmul.f32 %v2328, 1.442695
        %v2449 = vpow.pop %v2448
        %v2450 = vmul.f32 %v2329, 1.442695
        %v2451 = vpow.pop %v2450
        %v2452 = vmul.f32 %v2330, 1.442695
        %v2453 = vpow.pop %v2452
        %v2454 = vmul.f32 %v2331, 1.442695
        %v2455 = vpow.pop %v2454
        %v2456 = vmul.f32 %v2332, 1.442695
        %v2457 = vpow.pop %v2456
        %v2458 = vmul.f32 %v2333, 1.442695
        %v2459 = vpow.pop %v2458
        %v2460 = vmul.f32 %v2334, 1.442695
        %v2461 = vpow.pop %v2460
        %v2462 = vmul.f32 %v2335, 1.442695
        %v2463 = vpow.pop %v2462
        %v2464 = vmul.f32 %v2336, 1.442695
        %v2465 = vpow.pop %v2464
        %v2466 = vmul.f32 %v2337, 1.442695
        %v2467 = vpow.pop %v2466
        %v2468 = vmul.f32 %v2338, 1.442695
        %v2469 = vpow.pop %v2468
        %v2470 = vmul.f32 %v2339, 1.442695
        %v2471 = vpow.pop %v2470
        %v2472 = vmul.f32 %v2340, 1.442695
        %v2473 = vpow.pop %v2472
        %v2474 = vmul.f32 %v2341, 1.442695
        %v2475 = vpow.pop %v2474
        %v2476 = vmul.f32 %v2342, 1.442695
        %v2477 = vpow.pop %v2476
        %v2478 = vmul.f32 %v2343, 1.442695
        %v2479 = vpow.pop %v2478
        %v2480 = vmul.f32 %v2344, 1.442695
        %v2481 = vpow.pop %v2480
        %v2482 = vmul.f32 %v2345, 1.442695
        %v2483 = vpow.pop %v2482
        %v2484 = vmul.f32 %v2346, 1.442695
        %v2485 = vpow.pop %v2484
        %v2486 = vmul.f32 %v2347, 1.442695
        %v2487 = vpow.pop %v2486
        %v2488 = vmul.f32 %v2348, 1.442695
        %v2489 = vpow.pop %v2488
        %v2490 = vmul.f32 %v2349, 1.442695
        %v2491 = vpow.pop %v2490
        %v2492 = vmul.f32 %v2350, 1.442695
        %v2493 = vpow.pop %v2492
        %v2494 = vmul.f32 %v2351, 1.442695
        %v2495 = vpow.pop %v2494
        %v2496 = vadd.f32 %v2353, %v2355
        %v2497 = vadd.f32 %v2496, %v2357
        %2498 = vadd.xlane.f32.xlu0 %v2497
        %v2499 = vpop.xlane.xlu0 %2498
        %v2500 = vadd.f32 %v2359, %v2361
        %v2501 = vadd.f32 %v2500, %v2363
        %2502 = vadd.xlane.f32.xlu0 %v2501
        %v2503 = vpop.xlane.xlu0 %2502
        %v2504 = vadd.f32 %v2365, %v2367
        %v2505 = vadd.f32 %v2504, %v2369
        %2506 = vadd.xlane.f32.xlu0 %v2505
        %v2507 = vpop.xlane.xlu0 %2506
        %v2508 = vadd.f32 %v2371, %v2373
        %v2509 = vadd.f32 %v2508, %v2375
        %2510 = vadd.xlane.f32.xlu0 %v2509
        %v2511 = vpop.xlane.xlu0 %2510
        %v2512 = vadd.f32 %v2377, %v2379
        %v2513 = vadd.f32 %v2512, %v2381
        %2514 = vadd.xlane.f32.xlu0 %v2513
        %v2515 = vpop.xlane.xlu0 %2514
        %v2516 = vadd.f32 %v2383, %v2385
        %v2517 = vadd.f32 %v2516, %v2387
        %2518 = vadd.xlane.f32.xlu0 %v2517
        %v2519 = vpop.xlane.xlu0 %2518
        %v2520 = vadd.f32 %v2389, %v2391
        %v2521 = vadd.f32 %v2520, %v2393
        %2522 = vadd.xlane.f32.xlu0 %v2521
        %v2523 = vpop.xlane.xlu0 %2522
        %v2524 = vadd.f32 %v2395, %v2397
        %v2525 = vadd.f32 %v2524, %v2399
        %2526 = vadd.xlane.f32.xlu0 %v2525
        %v2527 = vpop.xlane.xlu0 %2526
        %v2528 = vadd.f32 %v2401, %v2403
        %v2529 = vadd.f32 %v2528, %v2405
        %2530 = vadd.xlane.f32.xlu0 %v2529
        %v2531 = vpop.xlane.xlu0 %2530
        %v2532 = vadd.f32 %v2407, %v2409
        %v2533 = vadd.f32 %v2532, %v2411
        %2534 = vadd.xlane.f32.xlu0 %v2533
        %v2535 = vpop.xlane.xlu0 %2534
        %v2536 = vadd.f32 %v2413, %v2415
        %v2537 = vadd.f32 %v2536, %v2417
        %2538 = vadd.xlane.f32.xlu0 %v2537
        %v2539 = vpop.xlane.xlu0 %2538
        %v2540 = vadd.f32 %v2419, %v2421
        %v2541 = vadd.f32 %v2540, %v2423
        %2542 = vadd.xlane.f32.xlu0 %v2541
        %v2543 = vpop.xlane.xlu0 %2542
        %v2544 = vadd.f32 %v2425, %v2427
        %v2545 = vadd.f32 %v2544, %v2429
        %2546 = vadd.xlane.f32.xlu0 %v2545
        %v2547 = vpop.xlane.xlu0 %2546
        %v2548 = vadd.f32 %v2431, %v2433
        %v2549 = vadd.f32 %v2548, %v2435
        %2550 = vadd.xlane.f32.xlu0 %v2549
        %v2551 = vpop.xlane.xlu0 %2550
        %v2552 = vadd.f32 %v2437, %v2439
        %v2553 = vadd.f32 %v2552, %v2441
        %2554 = vadd.xlane.f32.xlu0 %v2553
        %v2555 = vpop.xlane.xlu0 %2554
        %v2556 = vadd.f32 %v2443, %v2445
        %v2557 = vadd.f32 %v2556, %v2447
        %2558 = vadd.xlane.f32.xlu0 %v2557
        %v2559 = vpop.xlane.xlu0 %2558
        %v2560 = vadd.f32 %v2449, %v2451
        %v2561 = vadd.f32 %v2560, %v2453
        %2562 = vadd.xlane.f32.xlu0 %v2561
        %v2563 = vpop.xlane.xlu0 %2562
        %v2564 = vadd.f32 %v2455, %v2457
        %v2565 = vadd.f32 %v2564, %v2459
        %2566 = vadd.xlane.f32.xlu0 %v2565
        %v2567 = vpop.xlane.xlu0 %2566
        %v2568 = vadd.f32 %v2461, %v2463
        %v2569 = vadd.f32 %v2568, %v2465
        %2570 = vadd.xlane.f32.xlu0 %v2569
        %v2571 = vpop.xlane.xlu0 %2570
        %v2572 = vadd.f32 %v2467, %v2469
        %v2573 = vadd.f32 %v2572, %v2471
        %2574 = vadd.xlane.f32.xlu0 %v2573
        %v2575 = vpop.xlane.xlu0 %2574
        %v2576 = vadd.f32 %v2473, %v2475
        %v2577 = vadd.f32 %v2576, %v2477
        %2578 = vadd.xlane.f32.xlu0 %v2577
        %v2579 = vpop.xlane.xlu0 %2578
        %v2580 = vadd.f32 %v2479, %v2481
        %v2581 = vadd.f32 %v2580, %v2483
        %2582 = vadd.xlane.f32.xlu0 %v2581
        %v2583 = vpop.xlane.xlu0 %2582
        %v2584 = vadd.f32 %v2485, %v2487
        %v2585 = vadd.f32 %v2584, %v2489
        %2586 = vadd.xlane.f32.xlu0 %v2585
        %v2587 = vpop.xlane.xlu0 %2586
        %v2588 = vadd.f32 %v2491, %v2493
        %v2589 = vadd.f32 %v2588, %v2495
        %2590 = vadd.xlane.f32.xlu0 %v2589
        %v2591 = vpop.xlane.xlu0 %2590
        %v2592 = vld [vmem:[%s375] sm:$0xff]
        %v2593 = vld [vmem:[%s375 + $0x8] sm:$0xff]
        %v2594 = vld [vmem:[%s375 + $0x10] sm:$0xff]
        %v2595 = vld [vmem:[%s375 + $0x18] sm:$0xff]
        %v2596 = vld [vmem:[%s375 + $0x20] sm:$0xff]
        %v2597 = vld [vmem:[%s375 + $0x28] sm:$0xff]
        %v2598 = vld [vmem:[%s375 + $0x30] sm:$0xff]
        %v2599 = vld [vmem:[%s375 + $0x38] sm:$0xff]
        %v2600 = vld [vmem:[%s375 + $0x40] sm:$0xff]
        %v2601 = vld [vmem:[%s375 + $0x48] sm:$0xff]
        %v2602 = vld [vmem:[%s375 + $0x50] sm:$0xff]
        %v2603 = vld [vmem:[%s375 + $0x58] sm:$0xff]
        %v2604 = vld [vmem:[%s375 + $0x60] sm:$0xff]
        %v2605 = vld [vmem:[%s375 + $0x68] sm:$0xff]
        %v2606 = vld [vmem:[%s375 + $0x70] sm:$0xff]
        %v2607 = vld [vmem:[%s375 + $0x78] sm:$0xff]
        %v2608 = vld [vmem:[%s375 + $0x80] sm:$0xff]
        %v2609 = vld [vmem:[%s375 + $0x88] sm:$0xff]
        %v2610 = vld [vmem:[%s375 + $0x90] sm:$0xff]
        %v2611 = vld [vmem:[%s375 + $0x98] sm:$0xff]
        %v2612 = vld [vmem:[%s375 + $0xa0] sm:$0xff]
        %v2613 = vld [vmem:[%s375 + $0xa8] sm:$0xff]
        %v2614 = vld [vmem:[%s375 + $0xb0] sm:$0xff]
        %v2615 = vld [vmem:[%s375 + $0xb8] sm:$0xff]
        %v2616 = vld [vmem:[%s375 + $0xc0] sm:$0xff]
        %v2617 = vld [vmem:[%s375 + $0xc8] sm:$0xff]
        %v2618 = vld [vmem:[%s375 + $0xd0] sm:$0xff]
        %v2619 = vld [vmem:[%s375 + $0xd8] sm:$0xff]
        %v2620 = vld [vmem:[%s375 + $0xe0] sm:$0xff]
        %v2621 = vld [vmem:[%s375 + $0xe8] sm:$0xff]
        %v2622 = vld [vmem:[%s375 + $0xf0] sm:$0xff]
        %v2623 = vld [vmem:[%s375 + $0xf8] sm:$0xff]
        %v2624 = vld [vmem:[%s375 + $0x100] sm:$0xff]
        %v2625 = vld [vmem:[%s375 + $0x108] sm:$0xff]
        %v2626 = vld [vmem:[%s375 + $0x110] sm:$0xff]
        %v2627 = vld [vmem:[%s375 + $0x118] sm:$0xff]
        %v2628 = vld [vmem:[%s375 + $0x120] sm:$0xff]
        %v2629 = vld [vmem:[%s375 + $0x128] sm:$0xff]
        %v2630 = vld [vmem:[%s375 + $0x130] sm:$0xff]
        %v2631 = vld [vmem:[%s375 + $0x138] sm:$0xff]
        %v2632 = vld [vmem:[%s375 + $0x140] sm:$0xff]
        %v2633 = vld [vmem:[%s375 + $0x148] sm:$0xff]
        %v2634 = vld [vmem:[%s375 + $0x150] sm:$0xff]
        %v2635 = vld [vmem:[%s375 + $0x158] sm:$0xff]
        %v2636 = vld [vmem:[%s375 + $0x160] sm:$0xff]
        %v2637 = vld [vmem:[%s375 + $0x168] sm:$0xff]
        %v2638 = vld [vmem:[%s375 + $0x170] sm:$0xff]
        %v2639 = vld [vmem:[%s375 + $0x178] sm:$0xff]
        %v2640 = vld [vmem:[%s375 + $0x180] sm:$0xff]
        %v2641 = vld [vmem:[%s375 + $0x188] sm:$0xff]
        %v2642 = vld [vmem:[%s375 + $0x190] sm:$0xff]
        %v2643 = vld [vmem:[%s375 + $0x198] sm:$0xff]
        %v2644 = vld [vmem:[%s375 + $0x1a0] sm:$0xff]
        %v2645 = vld [vmem:[%s375 + $0x1a8] sm:$0xff]
        %v2646 = vld [vmem:[%s375 + $0x1b0] sm:$0xff]
        %v2647 = vld [vmem:[%s375 + $0x1b8] sm:$0xff]
        %v2648 = vld [vmem:[%s375 + $0x1c0] sm:$0xff]
        %v2649 = vld [vmem:[%s375 + $0x1c8] sm:$0xff]
        %v2650 = vld [vmem:[%s375 + $0x1d0] sm:$0xff]
        %v2651 = vld [vmem:[%s375 + $0x1d8] sm:$0xff]
        %v2652 = vld [vmem:[%s375 + $0x1e0] sm:$0xff]
        %v2653 = vld [vmem:[%s375 + $0x1e8] sm:$0xff]
        %v2654 = vld [vmem:[%s375 + $0x1f0] sm:$0xff]
        %v2655 = vld [vmem:[%s375 + $0x1f8] sm:$0xff]
        %v2656 = vld [vmem:[%s375 + $0x200] sm:$0xff]
        %v2657 = vld [vmem:[%s375 + $0x208] sm:$0xff]
        %v2658 = vld [vmem:[%s375 + $0x210] sm:$0xff]
        %v2659 = vld [vmem:[%s375 + $0x218] sm:$0xff]
        %v2660 = vld [vmem:[%s375 + $0x220] sm:$0xff]
        %v2661 = vld [vmem:[%s375 + $0x228] sm:$0xff]
        %v2662 = vld [vmem:[%s375 + $0x230] sm:$0xff]
        %v2663 = vld [vmem:[%s375 + $0x238] sm:$0xff]
        %vm2664 = vcmp.ge.f32.partialorder %v2592, 0.4
        %vm2665 = vcmp.ge.f32.partialorder %v2593, 0.4
        %vm2666 = vcmp.ge.f32.partialorder %v2594, 0.4
        %vm2667 = vcmp.ge.f32.partialorder %v2595, 0.4
        %vm2668 = vcmp.ge.f32.partialorder %v2596, 0.4
        %vm2669 = vcmp.ge.f32.partialorder %v2597, 0.4
        %vm2670 = vcmp.ge.f32.partialorder %v2598, 0.4
        %vm2671 = vcmp.ge.f32.partialorder %v2599, 0.4
        %vm2672 = vcmp.ge.f32.partialorder %v2600, 0.4
        %vm2673 = vcmp.ge.f32.partialorder %v2601, 0.4
        %vm2674 = vcmp.ge.f32.partialorder %v2602, 0.4
        %vm2675 = vcmp.ge.f32.partialorder %v2603, 0.4
        %vm2676 = vcmp.ge.f32.partialorder %v2604, 0.4
        %vm2677 = vcmp.ge.f32.partialorder %v2605, 0.4
        %vm2678 = vcmp.ge.f32.partialorder %v2606, 0.4
        %vm2679 = vcmp.ge.f32.partialorder %v2607, 0.4
        %vm2680 = vcmp.ge.f32.partialorder %v2608, 0.4
        %vm2681 = vcmp.ge.f32.partialorder %v2609, 0.4
        %vm2682 = vcmp.ge.f32.partialorder %v2610, 0.4
        %vm2683 = vcmp.ge.f32.partialorder %v2611, 0.4
        %vm2684 = vcmp.ge.f32.partialorder %v2612, 0.4
        %vm2685 = vcmp.ge.f32.partialorder %v2613, 0.4
        %vm2686 = vcmp.ge.f32.partialorder %v2614, 0.4
        %vm2687 = vcmp.ge.f32.partialorder %v2615, 0.4
        %vm2688 = vcmp.ge.f32.partialorder %v2616, 0.4
        %vm2689 = vcmp.ge.f32.partialorder %v2617, 0.4
        %vm2690 = vcmp.ge.f32.partialorder %v2618, 0.4
        %vm2691 = vcmp.ge.f32.partialorder %v2619, 0.4
        %vm2692 = vcmp.ge.f32.partialorder %v2620, 0.4
        %vm2693 = vcmp.ge.f32.partialorder %v2621, 0.4
        %vm2694 = vcmp.ge.f32.partialorder %v2622, 0.4
        %vm2695 = vcmp.ge.f32.partialorder %v2623, 0.4
        %vm2696 = vcmp.ge.f32.partialorder %v2624, 0.4
        %vm2697 = vcmp.ge.f32.partialorder %v2625, 0.4
        %vm2698 = vcmp.ge.f32.partialorder %v2626, 0.4
        %vm2699 = vcmp.ge.f32.partialorder %v2627, 0.4
        %vm2700 = vcmp.ge.f32.partialorder %v2628, 0.4
        %vm2701 = vcmp.ge.f32.partialorder %v2629, 0.4
        %vm2702 = vcmp.ge.f32.partialorder %v2630, 0.4
        %vm2703 = vcmp.ge.f32.partialorder %v2631, 0.4
        %vm2704 = vcmp.ge.f32.partialorder %v2632, 0.4
        %vm2705 = vcmp.ge.f32.partialorder %v2633, 0.4
        %vm2706 = vcmp.ge.f32.partialorder %v2634, 0.4
        %vm2707 = vcmp.ge.f32.partialorder %v2635, 0.4
        %vm2708 = vcmp.ge.f32.partialorder %v2636, 0.4
        %vm2709 = vcmp.ge.f32.partialorder %v2637, 0.4
        %vm2710 = vcmp.ge.f32.partialorder %v2638, 0.4
        %vm2711 = vcmp.ge.f32.partialorder %v2639, 0.4
        %vm2712 = vcmp.ge.f32.partialorder %v2640, 0.4
        %vm2713 = vcmp.ge.f32.partialorder %v2641, 0.4
        %vm2714 = vcmp.ge.f32.partialorder %v2642, 0.4
        %vm2715 = vcmp.ge.f32.partialorder %v2643, 0.4
        %vm2716 = vcmp.ge.f32.partialorder %v2644, 0.4
        %vm2717 = vcmp.ge.f32.partialorder %v2645, 0.4
        %vm2718 = vcmp.ge.f32.partialorder %v2646, 0.4
        %vm2719 = vcmp.ge.f32.partialorder %v2647, 0.4
        %vm2720 = vcmp.ge.f32.partialorder %v2648, 0.4
        %vm2721 = vcmp.ge.f32.partialorder %v2649, 0.4
        %vm2722 = vcmp.ge.f32.partialorder %v2650, 0.4
        %vm2723 = vcmp.ge.f32.partialorder %v2651, 0.4
        %vm2724 = vcmp.ge.f32.partialorder %v2652, 0.4
        %vm2725 = vcmp.ge.f32.partialorder %v2653, 0.4
        %vm2726 = vcmp.ge.f32.partialorder %v2654, 0.4
        %vm2727 = vcmp.ge.f32.partialorder %v2655, 0.4
        %vm2728 = vcmp.ge.f32.partialorder %v2656, 0.4
        %vm2729 = vcmp.ge.f32.partialorder %v2657, 0.4
        %vm2730 = vcmp.ge.f32.partialorder %v2658, 0.4
        %vm2731 = vcmp.ge.f32.partialorder %v2659, 0.4
        %vm2732 = vcmp.ge.f32.partialorder %v2660, 0.4
        %vm2733 = vcmp.ge.f32.partialorder %v2661, 0.4
        %vm2734 = vcmp.ge.f32.partialorder %v2662, 0.4
        %vm2735 = vcmp.ge.f32.partialorder %v2663, 0.4
        %v2736 = vsel %vm2664, %v2353, 0.0
        %v2737 = vsel %vm2665, %v2355, 0.0
        %v2738 = vsel %vm2666, %v2357, 0.0
        %v2739 = vsel %vm2667, %v2359, 0.0
        %v2740 = vsel %vm2668, %v2361, 0.0
        %v2741 = vsel %vm2669, %v2363, 0.0
        %v2742 = vsel %vm2670, %v2365, 0.0
        %v2743 = vsel %vm2671, %v2367, 0.0
        %v2744 = vsel %vm2672, %v2369, 0.0
        %v2745 = vsel %vm2673, %v2371, 0.0
        %v2746 = vsel %vm2674, %v2373, 0.0
        %v2747 = vsel %vm2675, %v2375, 0.0
        %v2748 = vsel %vm2676, %v2377, 0.0
        %v2749 = vsel %vm2677, %v2379, 0.0
        %v2750 = vsel %vm2678, %v2381, 0.0
        %v2751 = vsel %vm2679, %v2383, 0.0
        %v2752 = vsel %vm2680, %v2385, 0.0
        %v2753 = vsel %vm2681, %v2387, 0.0
        %v2754 = vsel %vm2682, %v2389, 0.0
        %v2755 = vsel %vm2683, %v2391, 0.0
        %v2756 = vsel %vm2684, %v2393, 0.0
        %v2757 = vsel %vm2685, %v2395, 0.0
        %v2758 = vsel %vm2686, %v2397, 0.0
        %v2759 = vsel %vm2687, %v2399, 0.0
        %v2760 = vsel %vm2688, %v2401, 0.0
        %v2761 = vsel %vm2689, %v2403, 0.0
        %v2762 = vsel %vm2690, %v2405, 0.0
        %v2763 = vsel %vm2691, %v2407, 0.0
        %v2764 = vsel %vm2692, %v2409, 0.0
        %v2765 = vsel %vm2693, %v2411, 0.0
        %v2766 = vsel %vm2694, %v2413, 0.0
        %v2767 = vsel %vm2695, %v2415, 0.0
        %v2768 = vsel %vm2696, %v2417, 0.0
        %v2769 = vsel %vm2697, %v2419, 0.0
        %v2770 = vsel %vm2698, %v2421, 0.0
        %v2771 = vsel %vm2699, %v2423, 0.0
        %v2772 = vsel %vm2700, %v2425, 0.0
        %v2773 = vsel %vm2701, %v2427, 0.0
        %v2774 = vsel %vm2702, %v2429, 0.0
        %v2775 = vsel %vm2703, %v2431, 0.0
        %v2776 = vsel %vm2704, %v2433, 0.0
        %v2777 = vsel %vm2705, %v2435, 0.0
        %v2778 = vsel %vm2706, %v2437, 0.0
        %v2779 = vsel %vm2707, %v2439, 0.0
        %v2780 = vsel %vm2708, %v2441, 0.0
        %v2781 = vsel %vm2709, %v2443, 0.0
        %v2782 = vsel %vm2710, %v2445, 0.0
        %v2783 = vsel %vm2711, %v2447, 0.0
        %v2784 = vsel %vm2712, %v2449, 0.0
        %v2785 = vsel %vm2713, %v2451, 0.0
        %v2786 = vsel %vm2714, %v2453, 0.0
        %v2787 = vsel %vm2715, %v2455, 0.0
        %v2788 = vsel %vm2716, %v2457, 0.0
        %v2789 = vsel %vm2717, %v2459, 0.0
        %v2790 = vsel %vm2718, %v2461, 0.0
        %v2791 = vsel %vm2719, %v2463, 0.0
        %v2792 = vsel %vm2720, %v2465, 0.0
        %v2793 = vsel %vm2721, %v2467, 0.0
        %v2794 = vsel %vm2722, %v2469, 0.0
        %v2795 = vsel %vm2723, %v2471, 0.0
        %v2796 = vsel %vm2724, %v2473, 0.0
        %v2797 = vsel %vm2725, %v2475, 0.0
        %v2798 = vsel %vm2726, %v2477, 0.0
        %v2799 = vsel %vm2727, %v2479, 0.0
        %v2800 = vsel %vm2728, %v2481, 0.0
        %v2801 = vsel %vm2729, %v2483, 0.0
        %v2802 = vsel %vm2730, %v2485, 0.0
        %v2803 = vsel %vm2731, %v2487, 0.0
        %v2804 = vsel %vm2732, %v2489, 0.0
        %v2805 = vsel %vm2733, %v2491, 0.0
        %v2806 = vsel %vm2734, %v2493, 0.0
        %v2807 = vsel %vm2735, %v2495, 0.0
        %v2808 = vld [vmem:[%s357] sm:$0xff]
        %v2809 = vld [vmem:[%s357 + $0x8] sm:$0xff]
        %v2810 = vld [vmem:[%s357 + $0x10] sm:$0xff]
        %v2811 = vld [vmem:[%s357 + $0x18] sm:$0xff]
        %v2812 = vld [vmem:[%s357 + $0x20] sm:$0xff]
        %v2813 = vld [vmem:[%s357 + $0x28] sm:$0xff]
        %v2814 = vld [vmem:[%s357 + $0x30] sm:$0xff]
        %v2815 = vld [vmem:[%s357 + $0x38] sm:$0xff]
        %v2816 = vld [vmem:[%s357 + $0x40] sm:$0xff]
        %v2817 = vld [vmem:[%s357 + $0x48] sm:$0xff]
        %v2818 = vld [vmem:[%s357 + $0x50] sm:$0xff]
        %v2819 = vld [vmem:[%s357 + $0x58] sm:$0xff]
        %v2820 = vld [vmem:[%s357 + $0x60] sm:$0xff]
        %v2821 = vld [vmem:[%s357 + $0x68] sm:$0xff]
        %v2822 = vld [vmem:[%s357 + $0x70] sm:$0xff]
        %v2823 = vld [vmem:[%s357 + $0x78] sm:$0xff]
        %v2824 = vld [vmem:[%s357 + $0x80] sm:$0xff]
        %v2825 = vld [vmem:[%s357 + $0x88] sm:$0xff]
        %v2826 = vld [vmem:[%s357 + $0x90] sm:$0xff]
        %v2827 = vld [vmem:[%s357 + $0x98] sm:$0xff]
        %v2828 = vld [vmem:[%s357 + $0xa0] sm:$0xff]
        %v2829 = vld [vmem:[%s357 + $0xa8] sm:$0xff]
        %v2830 = vld [vmem:[%s357 + $0xb0] sm:$0xff]
        %v2831 = vld [vmem:[%s357 + $0xb8] sm:$0xff]
        %v2832 = vld [vmem:[%s357 + $0xc0] sm:$0xff]
        %v2833 = vld [vmem:[%s357 + $0xc8] sm:$0xff]
        %v2834 = vld [vmem:[%s357 + $0xd0] sm:$0xff]
        %v2835 = vld [vmem:[%s357 + $0xd8] sm:$0xff]
        %v2836 = vld [vmem:[%s357 + $0xe0] sm:$0xff]
        %v2837 = vld [vmem:[%s357 + $0xe8] sm:$0xff]
        %v2838 = vld [vmem:[%s357 + $0xf0] sm:$0xff]
        %v2839 = vld [vmem:[%s357 + $0xf8] sm:$0xff]
        %v2840 = vld [vmem:[%s357 + $0x100] sm:$0xff]
        %v2841 = vld [vmem:[%s357 + $0x108] sm:$0xff]
        %v2842 = vld [vmem:[%s357 + $0x110] sm:$0xff]
        %v2843 = vld [vmem:[%s357 + $0x118] sm:$0xff]
        %v2844 = vld [vmem:[%s357 + $0x120] sm:$0xff]
        %v2845 = vld [vmem:[%s357 + $0x128] sm:$0xff]
        %v2846 = vld [vmem:[%s357 + $0x130] sm:$0xff]
        %v2847 = vld [vmem:[%s357 + $0x138] sm:$0xff]
        %v2848 = vld [vmem:[%s357 + $0x140] sm:$0xff]
        %v2849 = vld [vmem:[%s357 + $0x148] sm:$0xff]
        %v2850 = vld [vmem:[%s357 + $0x150] sm:$0xff]
        %v2851 = vld [vmem:[%s357 + $0x158] sm:$0xff]
        %v2852 = vld [vmem:[%s357 + $0x160] sm:$0xff]
        %v2853 = vld [vmem:[%s357 + $0x168] sm:$0xff]
        %v2854 = vld [vmem:[%s357 + $0x170] sm:$0xff]
        %v2855 = vld [vmem:[%s357 + $0x178] sm:$0xff]
        %v2856 = vld [vmem:[%s357 + $0x180] sm:$0xff]
        %v2857 = vld [vmem:[%s357 + $0x188] sm:$0xff]
        %v2858 = vld [vmem:[%s357 + $0x190] sm:$0xff]
        %v2859 = vld [vmem:[%s357 + $0x198] sm:$0xff]
        %v2860 = vld [vmem:[%s357 + $0x1a0] sm:$0xff]
        %v2861 = vld [vmem:[%s357 + $0x1a8] sm:$0xff]
        %v2862 = vld [vmem:[%s357 + $0x1b0] sm:$0xff]
        %v2863 = vld [vmem:[%s357 + $0x1b8] sm:$0xff]
        %v2864 = vld [vmem:[%s357 + $0x1c0] sm:$0xff]
        %v2865 = vld [vmem:[%s357 + $0x1c8] sm:$0xff]
        %v2866 = vld [vmem:[%s357 + $0x1d0] sm:$0xff]
        %v2867 = vld [vmem:[%s357 + $0x1d8] sm:$0xff]
        %v2868 = vld [vmem:[%s357 + $0x1e0] sm:$0xff]
        %v2869 = vld [vmem:[%s357 + $0x1e8] sm:$0xff]
        %v2870 = vld [vmem:[%s357 + $0x1f0] sm:$0xff]
        %v2871 = vld [vmem:[%s357 + $0x1f8] sm:$0xff]
        %v2872 = vld [vmem:[%s357 + $0x200] sm:$0xff]
        %v2873 = vld [vmem:[%s357 + $0x208] sm:$0xff]
        %v2874 = vld [vmem:[%s357 + $0x210] sm:$0xff]
        %v2875 = vld [vmem:[%s357 + $0x218] sm:$0xff]
        %v2876 = vld [vmem:[%s357 + $0x220] sm:$0xff]
        %v2877 = vld [vmem:[%s357 + $0x228] sm:$0xff]
        %v2878 = vld [vmem:[%s357 + $0x230] sm:$0xff]
        %v2879 = vld [vmem:[%s357 + $0x238] sm:$0xff]
        %v2880 = vld [vmem:[%s357 + $0x240] sm:$0xff]
        %v2881 = vld [vmem:[%s357 + $0x248] sm:$0xff]
        %v2882 = vld [vmem:[%s357 + $0x250] sm:$0xff]
        %v2883 = vld [vmem:[%s357 + $0x258] sm:$0xff]
        %v2884 = vld [vmem:[%s357 + $0x260] sm:$0xff]
        %v2885 = vld [vmem:[%s357 + $0x268] sm:$0xff]
        %v2886 = vld [vmem:[%s357 + $0x270] sm:$0xff]
        %v2887 = vld [vmem:[%s357 + $0x278] sm:$0xff]
        %v2888 = vld [vmem:[%s357 + $0x280] sm:$0xff]
        %v2889 = vld [vmem:[%s357 + $0x288] sm:$0xff]
        %v2890 = vld [vmem:[%s357 + $0x290] sm:$0xff]
        %v2891 = vld [vmem:[%s357 + $0x298] sm:$0xff]
        %v2892 = vld [vmem:[%s357 + $0x2a0] sm:$0xff]
        %v2893 = vld [vmem:[%s357 + $0x2a8] sm:$0xff]
        %v2894 = vld [vmem:[%s357 + $0x2b0] sm:$0xff]
        %v2895 = vld [vmem:[%s357 + $0x2b8] sm:$0xff]
        %v2896 = vld [vmem:[%s357 + $0x2c0] sm:$0xff]
        %v2897 = vld [vmem:[%s357 + $0x2c8] sm:$0xff]
        %v2898 = vld [vmem:[%s357 + $0x2d0] sm:$0xff]
        %v2899 = vld [vmem:[%s357 + $0x2d8] sm:$0xff]
        %v2900 = vld [vmem:[%s357 + $0x2e0] sm:$0xff]
        %v2901 = vld [vmem:[%s357 + $0x2e8] sm:$0xff]
        %v2902 = vld [vmem:[%s357 + $0x2f0] sm:$0xff]
        %v2903 = vld [vmem:[%s357 + $0x2f8] sm:$0xff]
        %v2904 = vld [vmem:[%s357 + $0x300] sm:$0xff]
        %v2905 = vld [vmem:[%s357 + $0x308] sm:$0xff]
        %v2906 = vld [vmem:[%s357 + $0x310] sm:$0xff]
        %v2907 = vld [vmem:[%s357 + $0x318] sm:$0xff]
        %v2908 = vld [vmem:[%s357 + $0x320] sm:$0xff]
        %v2909 = vld [vmem:[%s357 + $0x328] sm:$0xff]
        %v2910 = vld [vmem:[%s357 + $0x330] sm:$0xff]
        %v2911 = vld [vmem:[%s357 + $0x338] sm:$0xff]
        %v2912 = vld [vmem:[%s357 + $0x340] sm:$0xff]
        %v2913 = vld [vmem:[%s357 + $0x348] sm:$0xff]
        %v2914 = vld [vmem:[%s357 + $0x350] sm:$0xff]
        %v2915 = vld [vmem:[%s357 + $0x358] sm:$0xff]
        %v2916 = vld [vmem:[%s357 + $0x360] sm:$0xff]
        %v2917 = vld [vmem:[%s357 + $0x368] sm:$0xff]
        %v2918 = vld [vmem:[%s357 + $0x370] sm:$0xff]
        %v2919 = vld [vmem:[%s357 + $0x378] sm:$0xff]
        %v2920 = vld [vmem:[%s357 + $0x380] sm:$0xff]
        %v2921 = vld [vmem:[%s357 + $0x388] sm:$0xff]
        %v2922 = vld [vmem:[%s357 + $0x390] sm:$0xff]
        %v2923 = vld [vmem:[%s357 + $0x398] sm:$0xff]
        %v2924 = vld [vmem:[%s357 + $0x3a0] sm:$0xff]
        %v2925 = vld [vmem:[%s357 + $0x3a8] sm:$0xff]
        %v2926 = vld [vmem:[%s357 + $0x3b0] sm:$0xff]
        %v2927 = vld [vmem:[%s357 + $0x3b8] sm:$0xff]
        %v2928 = vld [vmem:[%s357 + $0x3c0] sm:$0xff]
        %v2929 = vld [vmem:[%s357 + $0x3c8] sm:$0xff]
        %v2930 = vld [vmem:[%s357 + $0x3d0] sm:$0xff]
        %v2931 = vld [vmem:[%s357 + $0x3d8] sm:$0xff]
        %v2932 = vld [vmem:[%s357 + $0x3e0] sm:$0xff]
        %v2933 = vld [vmem:[%s357 + $0x3e8] sm:$0xff]
        %v2934 = vld [vmem:[%s357 + $0x3f0] sm:$0xff]
        %v2935 = vld [vmem:[%s357 + $0x3f8] sm:$0xff]
        %v2936 = vld [vmem:[%s357 + $0x400] sm:$0xff]
        %v2937 = vld [vmem:[%s357 + $0x408] sm:$0xff]
        %v2938 = vld [vmem:[%s357 + $0x410] sm:$0xff]
        %v2939 = vld [vmem:[%s357 + $0x418] sm:$0xff]
        %v2940 = vld [vmem:[%s357 + $0x420] sm:$0xff]
        %v2941 = vld [vmem:[%s357 + $0x428] sm:$0xff]
        %v2942 = vld [vmem:[%s357 + $0x430] sm:$0xff]
        %v2943 = vld [vmem:[%s357 + $0x438] sm:$0xff]
        %v2944 = vld [vmem:[%s357 + $0x440] sm:$0xff]
        %v2945 = vld [vmem:[%s357 + $0x448] sm:$0xff]
        %v2946 = vld [vmem:[%s357 + $0x450] sm:$0xff]
        %v2947 = vld [vmem:[%s357 + $0x458] sm:$0xff]
        %v2948 = vld [vmem:[%s357 + $0x460] sm:$0xff]
        %v2949 = vld [vmem:[%s357 + $0x468] sm:$0xff]
        %v2950 = vld [vmem:[%s357 + $0x470] sm:$0xff]
        %v2951 = vld [vmem:[%s357 + $0x478] sm:$0xff]
        %v2952 = vld [vmem:[%s357 + $0x480] sm:$0xff]
        %v2953 = vld [vmem:[%s357 + $0x488] sm:$0xff]
        %v2954 = vld [vmem:[%s357 + $0x490] sm:$0xff]
        %v2955 = vld [vmem:[%s357 + $0x498] sm:$0xff]
        %v2956 = vld [vmem:[%s357 + $0x4a0] sm:$0xff]
        %v2957 = vld [vmem:[%s357 + $0x4a8] sm:$0xff]
        %v2958 = vld [vmem:[%s357 + $0x4b0] sm:$0xff]
        %v2959 = vld [vmem:[%s357 + $0x4b8] sm:$0xff]
        %v2960 = vld [vmem:[%s357 + $0x4c0] sm:$0xff]
        %v2961 = vld [vmem:[%s357 + $0x4c8] sm:$0xff]
        %v2962 = vld [vmem:[%s357 + $0x4d0] sm:$0xff]
        %v2963 = vld [vmem:[%s357 + $0x4d8] sm:$0xff]
        %v2964 = vld [vmem:[%s357 + $0x4e0] sm:$0xff]
        %v2965 = vld [vmem:[%s357 + $0x4e8] sm:$0xff]
        %v2966 = vld [vmem:[%s357 + $0x4f0] sm:$0xff]
        %v2967 = vld [vmem:[%s357 + $0x4f8] sm:$0xff]
        %v2968 = vld [vmem:[%s357 + $0x500] sm:$0xff]
        %v2969 = vld [vmem:[%s357 + $0x508] sm:$0xff]
        %v2970 = vld [vmem:[%s357 + $0x510] sm:$0xff]
        %v2971 = vld [vmem:[%s357 + $0x518] sm:$0xff]
        %v2972 = vld [vmem:[%s357 + $0x520] sm:$0xff]
        %v2973 = vld [vmem:[%s357 + $0x528] sm:$0xff]
        %v2974 = vld [vmem:[%s357 + $0x530] sm:$0xff]
        %v2975 = vld [vmem:[%s357 + $0x538] sm:$0xff]
        %v2976 = vld [vmem:[%s357 + $0x540] sm:$0xff]
        %v2977 = vld [vmem:[%s357 + $0x548] sm:$0xff]
        %v2978 = vld [vmem:[%s357 + $0x550] sm:$0xff]
        %v2979 = vld [vmem:[%s357 + $0x558] sm:$0xff]
        %v2980 = vld [vmem:[%s357 + $0x560] sm:$0xff]
        %v2981 = vld [vmem:[%s357 + $0x568] sm:$0xff]
        %v2982 = vld [vmem:[%s357 + $0x570] sm:$0xff]
        %v2983 = vld [vmem:[%s357 + $0x578] sm:$0xff]
        %v2984 = vld [vmem:[%s357 + $0x580] sm:$0xff]
        %v2985 = vld [vmem:[%s357 + $0x588] sm:$0xff]
        %v2986 = vld [vmem:[%s357 + $0x590] sm:$0xff]
        %v2987 = vld [vmem:[%s357 + $0x598] sm:$0xff]
        %v2988 = vld [vmem:[%s357 + $0x5a0] sm:$0xff]
        %v2989 = vld [vmem:[%s357 + $0x5a8] sm:$0xff]
        %v2990 = vld [vmem:[%s357 + $0x5b0] sm:$0xff]
        %v2991 = vld [vmem:[%s357 + $0x5b8] sm:$0xff]
        %v2992 = vld [vmem:[%s357 + $0x5c0] sm:$0xff]
        %v2993 = vld [vmem:[%s357 + $0x5c8] sm:$0xff]
        %v2994 = vld [vmem:[%s357 + $0x5d0] sm:$0xff]
        %v2995 = vld [vmem:[%s357 + $0x5d8] sm:$0xff]
        %v2996 = vld [vmem:[%s357 + $0x5e0] sm:$0xff]
        %v2997 = vld [vmem:[%s357 + $0x5e8] sm:$0xff]
        %v2998 = vld [vmem:[%s357 + $0x5f0] sm:$0xff]
        %v2999 = vld [vmem:[%s357 + $0x5f8] sm:$0xff]
        %v3000 = vld [vmem:[%s357 + $0x600] sm:$0xff]
        %v3001 = vld [vmem:[%s357 + $0x608] sm:$0xff]
        %v3002 = vld [vmem:[%s357 + $0x610] sm:$0xff]
        %v3003 = vld [vmem:[%s357 + $0x618] sm:$0xff]
        %v3004 = vld [vmem:[%s357 + $0x620] sm:$0xff]
        %v3005 = vld [vmem:[%s357 + $0x628] sm:$0xff]
        %v3006 = vld [vmem:[%s357 + $0x630] sm:$0xff]
        %v3007 = vld [vmem:[%s357 + $0x638] sm:$0xff]
        %v3008 = vld [vmem:[%s357 + $0x640] sm:$0xff]
        %v3009 = vld [vmem:[%s357 + $0x648] sm:$0xff]
        %v3010 = vld [vmem:[%s357 + $0x650] sm:$0xff]
        %v3011 = vld [vmem:[%s357 + $0x658] sm:$0xff]
        %v3012 = vld [vmem:[%s357 + $0x660] sm:$0xff]
        %v3013 = vld [vmem:[%s357 + $0x668] sm:$0xff]
        %v3014 = vld [vmem:[%s357 + $0x670] sm:$0xff]
        %v3015 = vld [vmem:[%s357 + $0x678] sm:$0xff]
        %v3016 = vld [vmem:[%s357 + $0x680] sm:$0xff]
        %v3017 = vld [vmem:[%s357 + $0x688] sm:$0xff]
        %v3018 = vld [vmem:[%s357 + $0x690] sm:$0xff]
        %v3019 = vld [vmem:[%s357 + $0x698] sm:$0xff]
        %v3020 = vld [vmem:[%s357 + $0x6a0] sm:$0xff]
        %v3021 = vld [vmem:[%s357 + $0x6a8] sm:$0xff]
        %v3022 = vld [vmem:[%s357 + $0x6b0] sm:$0xff]
        %v3023 = vld [vmem:[%s357 + $0x6b8] sm:$0xff]
        %v3024 = vld [vmem:[%s357 + $0x6c0] sm:$0xff]
        %v3025 = vld [vmem:[%s357 + $0x6c8] sm:$0xff]
        %v3026 = vld [vmem:[%s357 + $0x6d0] sm:$0xff]
        %v3027 = vld [vmem:[%s357 + $0x6d8] sm:$0xff]
        %v3028 = vld [vmem:[%s357 + $0x6e0] sm:$0xff]
        %v3029 = vld [vmem:[%s357 + $0x6e8] sm:$0xff]
        %v3030 = vld [vmem:[%s357 + $0x6f0] sm:$0xff]
        %v3031 = vld [vmem:[%s357 + $0x6f8] sm:$0xff]
        %v3032 = vld [vmem:[%s357 + $0x700] sm:$0xff]
        %v3033 = vld [vmem:[%s357 + $0x708] sm:$0xff]
        %v3034 = vld [vmem:[%s357 + $0x710] sm:$0xff]
        %v3035 = vld [vmem:[%s357 + $0x718] sm:$0xff]
        %v3036 = vld [vmem:[%s357 + $0x720] sm:$0xff]
        %v3037 = vld [vmem:[%s357 + $0x728] sm:$0xff]
        %v3038 = vld [vmem:[%s357 + $0x730] sm:$0xff]
        %v3039 = vld [vmem:[%s357 + $0x738] sm:$0xff]
        %v3040 = vld [vmem:[%s357 + $0x740] sm:$0xff]
        %v3041 = vld [vmem:[%s357 + $0x748] sm:$0xff]
        %v3042 = vld [vmem:[%s357 + $0x750] sm:$0xff]
        %v3043 = vld [vmem:[%s357 + $0x758] sm:$0xff]
        %v3044 = vld [vmem:[%s357 + $0x760] sm:$0xff]
        %v3045 = vld [vmem:[%s357 + $0x768] sm:$0xff]
        %v3046 = vld [vmem:[%s357 + $0x770] sm:$0xff]
        %v3047 = vld [vmem:[%s357 + $0x778] sm:$0xff]
        %3048 = vmatprep.subr.mxu0 %v2884
        %3049 = vmatpush1.msra.mxu0 %v2883
        %3050 = vmatprep.subr.mxu0 %v2879
        %3051 = vmatpush1.msra.mxu0 %v2878
        %3052 = vmatprep.subr.mxu0 %v2874
        %3053 = vmatpush1.msra.mxu0 %v2873
        %3054 = vmatprep.subr.mxu0 %v2869
        %3055 = vmatpush1.msra.mxu0 %v2868
        %3056 = vmatprep.subr.mxu0 %v2864
        %3057 = vmatpush1.msra.mxu0 %v2863
        %3058 = vmatprep.subr.mxu0 %v2859
        %3059 = vmatpush1.msra.mxu0 %v2858
        %3060 = vmatprep.subr.mxu0 %v2854
        %3061 = vmatpush1.msra.mxu0 %v2853
        %3062 = vmatprep.subr.mxu0 %v2849
        %3063 = vmatpush1.msra.mxu0 %v2848
        %3064 = vmatprep.subr.mxu0 %v2844
        %3065 = vmatpush1.msra.mxu0 %v2843
        %3066 = vmatprep.subr.mxu0 %v2839
        %3067 = vmatpush1.msra.mxu0 %v2838
        %3068 = vmatprep.subr.mxu0 %v2834
        %3069 = vmatpush1.msra.mxu0 %v2833
        %3070 = vmatprep.subr.mxu0 %v2829
        %3071 = vmatpush1.msra.mxu0 %v2828
        %3072 = vmatprep.subr.mxu0 %v2824
        %3073 = vmatpush1.msra.mxu0 %v2823
        %3074 = vmatprep.subr.mxu0 %v2819
        %3075 = vmatpush1.msra.mxu0 %v2818
        %3076 = vmatprep.subr.mxu0 %v2814
        %3077 = vmatpush1.msra.mxu0 %v2813
        %3078 = vmatprep.subr.mxu0 %v2809
        %3079 = vmatpush1.msra.mxu0 %v2808
        %3080 = vmatprep.subr.mxu0 %v2964
        %3081 = vmatpush2.msra.mxu0 %v2963
        %3082 = vmatprep.subr.mxu0 %v2959
        %3083 = vmatpush2.msra.mxu0 %v2958
        %3084 = vmatprep.subr.mxu0 %v2954
        %3085 = vmatpush2.msra.mxu0 %v2953
        %3086 = vmatprep.subr.mxu0 %v2949
        %3087 = vmatpush2.msra.mxu0 %v2948
        %3088 = vmatprep.subr.mxu0 %v2944
        %3089 = vmatpush2.msra.mxu0 %v2943
        %3090 = vmatprep.subr.mxu0 %v2939
        %3091 = vmatpush2.msra.mxu0 %v2938
        %3092 = vmatprep.subr.mxu0 %v2934
        %3093 = vmatpush2.msra.mxu0 %v2933
        %3094 = vmatprep.subr.mxu0 %v2929
        %3095 = vmatpush2.msra.mxu0 %v2928
        %3096 = vmatprep.subr.mxu0 %v2924
        %3097 = vmatpush2.msra.mxu0 %v2923
        %3098 = vmatprep.subr.mxu0 %v2919
        %3099 = vmatpush2.msra.mxu0 %v2918
        %3100 = vmatprep.subr.mxu0 %v2914
        %3101 = vmatpush2.msra.mxu0 %v2913
        %3102 = vmatprep.subr.mxu0 %v2909
        %3103 = vmatpush2.msra.mxu0 %v2908
        %3104 = vmatprep.subr.mxu0 %v2904
        %3105 = vmatpush2.msra.mxu0 %v2903
        %3106 = vmatprep.subr.mxu0 %v2899
        %3107 = vmatpush2.msra.mxu0 %v2898
        %3108 = vmatprep.subr.mxu0 %v2894
        %3109 = vmatpush2.msra.mxu0 %v2893
        %3110 = vmatprep.subr.mxu0 %v2889
        %3111 = vmatpush2.msra.mxu0 %v2888
        %3112 = vmatprep.mubr.f32.mxu0 %v2737
        %3113 = vmatmul.mubr.f32.gmra.mxu0 %v2736
        %v3114 = vpop.f32.mrf.mxu0
        %v3115 = vadd.f32 0.0, %v3114
        %v3116 = vpop.f32.mrf.mxu0
        %v3117 = vadd.f32 0.0, %v3116
        %3118 = vmatprep.mubr.f32.mxu0 %v2740
        %3119 = vmatmul.mubr.f32.gmra.mxu0 %v2739
        %v3120 = vpop.f32.mrf.mxu0
        %v3121 = vadd.f32 0.0, %v3120
        %v3122 = vpop.f32.mrf.mxu0
        %v3123 = vadd.f32 0.0, %v3122
        %3124 = vmatprep.mubr.f32.mxu0 %v2743
        %3125 = vmatmul.mubr.f32.gmra.mxu0 %v2742
        %v3126 = vpop.f32.mrf.mxu0
        %v3127 = vadd.f32 0.0, %v3126
        %v3128 = vpop.f32.mrf.mxu0
        %v3129 = vadd.f32 0.0, %v3128
        %3130 = vmatprep.mubr.f32.mxu0 %v2746
        %3131 = vmatmul.mubr.f32.gmra.mxu0 %v2745
        %v3132 = vpop.f32.mrf.mxu0
        %v3133 = vadd.f32 0.0, %v3132
        %v3134 = vpop.f32.mrf.mxu0
        %v3135 = vadd.f32 0.0, %v3134
        %3136 = vmatprep.mubr.f32.mxu0 %v2749
        %3137 = vmatmul.mubr.f32.gmra.mxu0 %v2748
        %v3138 = vpop.f32.mrf.mxu0
        %v3139 = vadd.f32 0.0, %v3138
        %v3140 = vpop.f32.mrf.mxu0
        %v3141 = vadd.f32 0.0, %v3140
        %3142 = vmatprep.mubr.f32.mxu0 %v2752
        %3143 = vmatmul.mubr.f32.gmra.mxu0 %v2751
        %v3144 = vpop.f32.mrf.mxu0
        %v3145 = vadd.f32 0.0, %v3144
        %v3146 = vpop.f32.mrf.mxu0
        %v3147 = vadd.f32 0.0, %v3146
        %3148 = vmatprep.mubr.f32.mxu0 %v2755
        %3149 = vmatmul.mubr.f32.gmra.mxu0 %v2754
        %v3150 = vpop.f32.mrf.mxu0
        %v3151 = vadd.f32 0.0, %v3150
        %v3152 = vpop.f32.mrf.mxu0
        %v3153 = vadd.f32 0.0, %v3152
        %3154 = vmatprep.mubr.f32.mxu0 %v2758
        %3155 = vmatmul.mubr.f32.gmra.mxu0 %v2757
        %v3156 = vpop.f32.mrf.mxu0
        %v3157 = vadd.f32 0.0, %v3156
        %v3158 = vpop.f32.mrf.mxu0
        %v3159 = vadd.f32 0.0, %v3158
        %3160 = vmatprep.mubr.f32.mxu0 %v2761
        %3161 = vmatmul.mubr.f32.gmra.mxu0 %v2760
        %v3162 = vpop.f32.mrf.mxu0
        %v3163 = vadd.f32 0.0, %v3162
        %v3164 = vpop.f32.mrf.mxu0
        %v3165 = vadd.f32 0.0, %v3164
        %3166 = vmatprep.mubr.f32.mxu0 %v2764
        %3167 = vmatmul.mubr.f32.gmra.mxu0 %v2763
        %v3168 = vpop.f32.mrf.mxu0
        %v3169 = vadd.f32 0.0, %v3168
        %v3170 = vpop.f32.mrf.mxu0
        %v3171 = vadd.f32 0.0, %v3170
        %3172 = vmatprep.mubr.f32.mxu0 %v2767
        %3173 = vmatmul.mubr.f32.gmra.mxu0 %v2766
        %v3174 = vpop.f32.mrf.mxu0
        %v3175 = vadd.f32 0.0, %v3174
        %v3176 = vpop.f32.mrf.mxu0
        %v3177 = vadd.f32 0.0, %v3176
        %3178 = vmatprep.mubr.f32.mxu0 %v2770
        %3179 = vmatmul.mubr.f32.gmra.mxu0 %v2769
        %v3180 = vpop.f32.mrf.mxu0
        %v3181 = vadd.f32 0.0, %v3180
        %v3182 = vpop.f32.mrf.mxu0
        %v3183 = vadd.f32 0.0, %v3182
        %3184 = vmatprep.mubr.f32.mxu0 %v2773
        %3185 = vmatmul.mubr.f32.gmra.mxu0 %v2772
        %v3186 = vpop.f32.mrf.mxu0
        %v3187 = vadd.f32 0.0, %v3186
        %v3188 = vpop.f32.mrf.mxu0
        %v3189 = vadd.f32 0.0, %v3188
        %3190 = vmatprep.mubr.f32.mxu0 %v2776
        %3191 = vmatmul.mubr.f32.gmra.mxu0 %v2775
        %v3192 = vpop.f32.mrf.mxu0
        %v3193 = vadd.f32 0.0, %v3192
        %v3194 = vpop.f32.mrf.mxu0
        %v3195 = vadd.f32 0.0, %v3194
        %3196 = vmatprep.mubr.f32.mxu0 %v2779
        %3197 = vmatmul.mubr.f32.gmra.mxu0 %v2778
        %v3198 = vpop.f32.mrf.mxu0
        %v3199 = vadd.f32 0.0, %v3198
        %v3200 = vpop.f32.mrf.mxu0
        %v3201 = vadd.f32 0.0, %v3200
        %3202 = vmatprep.mubr.f32.mxu0 %v2782
        %3203 = vmatmul.mubr.f32.gmra.mxu0 %v2781
        %v3204 = vpop.f32.mrf.mxu0
        %v3205 = vadd.f32 0.0, %v3204
        %v3206 = vpop.f32.mrf.mxu0
        %v3207 = vadd.f32 0.0, %v3206
        %3208 = vmatprep.mubr.f32.mxu0 %v2785
        %3209 = vmatmul.mubr.f32.gmra.mxu0 %v2784
        %v3210 = vpop.f32.mrf.mxu0
        %v3211 = vadd.f32 0.0, %v3210
        %v3212 = vpop.f32.mrf.mxu0
        %v3213 = vadd.f32 0.0, %v3212
        %3214 = vmatprep.mubr.f32.mxu0 %v2788
        %3215 = vmatmul.mubr.f32.gmra.mxu0 %v2787
        %v3216 = vpop.f32.mrf.mxu0
        %v3217 = vadd.f32 0.0, %v3216
        %v3218 = vpop.f32.mrf.mxu0
        %v3219 = vadd.f32 0.0, %v3218
        %3220 = vmatprep.mubr.f32.mxu0 %v2791
        %3221 = vmatmul.mubr.f32.gmra.mxu0 %v2790
        %v3222 = vpop.f32.mrf.mxu0
        %v3223 = vadd.f32 0.0, %v3222
        %v3224 = vpop.f32.mrf.mxu0
        %v3225 = vadd.f32 0.0, %v3224
        %3226 = vmatprep.mubr.f32.mxu0 %v2794
        %3227 = vmatmul.mubr.f32.gmra.mxu0 %v2793
        %v3228 = vpop.f32.mrf.mxu0
        %v3229 = vadd.f32 0.0, %v3228
        %v3230 = vpop.f32.mrf.mxu0
        %v3231 = vadd.f32 0.0, %v3230
        %3232 = vmatprep.mubr.f32.mxu0 %v2797
        %3233 = vmatmul.mubr.f32.gmra.mxu0 %v2796
        %v3234 = vpop.f32.mrf.mxu0
        %v3235 = vadd.f32 0.0, %v3234
        %v3236 = vpop.f32.mrf.mxu0
        %v3237 = vadd.f32 0.0, %v3236
        %3238 = vmatprep.mubr.f32.mxu0 %v2800
        %3239 = vmatmul.mubr.f32.gmra.mxu0 %v2799
        %v3240 = vpop.f32.mrf.mxu0
        %v3241 = vadd.f32 0.0, %v3240
        %v3242 = vpop.f32.mrf.mxu0
        %v3243 = vadd.f32 0.0, %v3242
        %3244 = vmatprep.mubr.f32.mxu0 %v2803
        %3245 = vmatmul.mubr.f32.gmra.mxu0 %v2802
        %v3246 = vpop.f32.mrf.mxu0
        %v3247 = vadd.f32 0.0, %v3246
        %v3248 = vpop.f32.mrf.mxu0
        %v3249 = vadd.f32 0.0, %v3248
        %3250 = vmatprep.mubr.f32.mxu0 %v2806
        %3251 = vmatmul.mubr.f32.gmra.mxu0 %v2805
        %v3252 = vpop.f32.mrf.mxu0
        %v3253 = vadd.f32 0.0, %v3252
        %v3254 = vpop.f32.mrf.mxu0
        %v3255 = vadd.f32 0.0, %v3254
        %3256 = vdwg.mxu0
        %3257 = vmatprep.subr.mxu0 %v3044
        %3258 = vmatpush1.msra.mxu0 %v3043
        %3259 = vmatprep.subr.mxu0 %v3039
        %3260 = vmatpush1.msra.mxu0 %v3038
        %3261 = vmatprep.subr.mxu0 %v3034
        %3262 = vmatpush1.msra.mxu0 %v3033
        %3263 = vmatprep.subr.mxu0 %v3029
        %3264 = vmatpush1.msra.mxu0 %v3028
        %3265 = vmatprep.subr.mxu0 %v3024
        %3266 = vmatpush1.msra.mxu0 %v3023
        %3267 = vmatprep.subr.mxu0 %v3019
        %3268 = vmatpush1.msra.mxu0 %v3018
        %3269 = vmatprep.subr.mxu0 %v3014
        %3270 = vmatpush1.msra.mxu0 %v3013
        %3271 = vmatprep.subr.mxu0 %v3009
        %3272 = vmatpush1.msra.mxu0 %v3008
        %3273 = vmatprep.subr.mxu0 %v3004
        %3274 = vmatpush1.msra.mxu0 %v3003
        %3275 = vmatprep.subr.mxu0 %v2999
        %3276 = vmatpush1.msra.mxu0 %v2998
        %3277 = vmatprep.subr.mxu0 %v2994
        %3278 = vmatpush1.msra.mxu0 %v2993
        %3279 = vmatprep.subr.mxu0 %v2989
        %3280 = vmatpush1.msra.mxu0 %v2988
        %3281 = vmatprep.subr.mxu0 %v2984
        %3282 = vmatpush1.msra.mxu0 %v2983
        %3283 = vmatprep.subr.mxu0 %v2979
        %3284 = vmatpush1.msra.mxu0 %v2978
        %3285 = vmatprep.subr.mxu0 %v2974
        %3286 = vmatpush1.msra.mxu0 %v2973
        %3287 = vmatprep.subr.mxu0 %v2969
        %3288 = vmatpush1.msra.mxu0 %v2968
        %3289 = vmatprep.subr.mxu0 0.0
        %3290 = vmatpush2.msra.mxu0 0.0
        %3291 = vmatprep.subr.mxu0 0.0
        %3292 = vmatpush2.msra.mxu0 0.0
        %3293 = vmatprep.subr.mxu0 0.0
        %3294 = vmatpush2.msra.mxu0 0.0
        %3295 = vmatprep.subr.mxu0 0.0
        %3296 = vmatpush2.msra.mxu0 0.0
        %3297 = vmatprep.subr.mxu0 0.0
        %3298 = vmatpush2.msra.mxu0 0.0
        %3299 = vmatprep.subr.mxu0 0.0
        %3300 = vmatpush2.msra.mxu0 0.0
        %3301 = vmatprep.subr.mxu0 0.0
        %3302 = vmatpush2.msra.mxu0 0.0
        %3303 = vmatprep.subr.mxu0 0.0
        %3304 = vmatpush2.msra.mxu0 0.0
        %3305 = vmatprep.subr.mxu0 0.0
        %3306 = vmatpush2.msra.mxu0 0.0
        %3307 = vmatprep.subr.mxu0 0.0
        %3308 = vmatpush2.msra.mxu0 0.0
        %3309 = vmatprep.subr.mxu0 0.0
        %3310 = vmatpush2.msra.mxu0 0.0
        %3311 = vmatprep.subr.mxu0 0.0
        %3312 = vmatpush2.msra.mxu0 0.0
        %3313 = vmatprep.subr.mxu0 0.0
        %3314 = vmatpush2.msra.mxu0 0.0
        %3315 = vmatprep.subr.mxu0 0.0
        %3316 = vmatpush2.msra.mxu0 0.0
        %3317 = vmatprep.subr.mxu0 0.0
        %3318 = vmatpush2.msra.mxu0 0.0
        %3319 = vmatprep.subr.mxu0 0.0
        %3320 = vmatpush2.msra.mxu0 0.0
        %3321 = vmatprep.mubr.f32.mxu0 0.0
        %3322 = vmatmul.mubr.f32.gmra.mxu0 %v2738
        %v3323 = vpop.f32.mrf.mxu0
        %v3324 = vadd.f32 %v3115, %v3323
        %v3325 = vpop.f32.mrf.mxu0
        %v3326 = vadd.f32 %v3117, %v3325
        %3327 = vmatprep.mubr.f32.mxu0 0.0
        %3328 = vmatmul.mubr.f32.gmra.mxu0 %v2741
        %v3329 = vpop.f32.mrf.mxu0
        %v3330 = vadd.f32 %v3121, %v3329
        %v3331 = vpop.f32.mrf.mxu0
        %v3332 = vadd.f32 %v3123, %v3331
        %3333 = vmatprep.mubr.f32.mxu0 0.0
        %3334 = vmatmul.mubr.f32.gmra.mxu0 %v2744
        %v3335 = vpop.f32.mrf.mxu0
        %v3336 = vadd.f32 %v3127, %v3335
        %v3337 = vpop.f32.mrf.mxu0
        %v3338 = vadd.f32 %v3129, %v3337
        %3339 = vmatprep.mubr.f32.mxu0 0.0
        %3340 = vmatmul.mubr.f32.gmra.mxu0 %v2747
        %v3341 = vpop.f32.mrf.mxu0
        %v3342 = vadd.f32 %v3133, %v3341
        %v3343 = vpop.f32.mrf.mxu0
        %v3344 = vadd.f32 %v3135, %v3343
        %3345 = vmatprep.mubr.f32.mxu0 0.0
        %3346 = vmatmul.mubr.f32.gmra.mxu0 %v2750
        %v3347 = vpop.f32.mrf.mxu0
        %v3348 = vadd.f32 %v3139, %v3347
        %v3349 = vpop.f32.mrf.mxu0
        %v3350 = vadd.f32 %v3141, %v3349
        %3351 = vmatprep.mubr.f32.mxu0 0.0
        %3352 = vmatmul.mubr.f32.gmra.mxu0 %v2753
        %v3353 = vpop.f32.mrf.mxu0
        %v3354 = vadd.f32 %v3145, %v3353
        %v3355 = vpop.f32.mrf.mxu0
        %v3356 = vadd.f32 %v3147, %v3355
        %3357 = vmatprep.mubr.f32.mxu0 0.0
        %3358 = vmatmul.mubr.f32.gmra.mxu0 %v2756
        %v3359 = vpop.f32.mrf.mxu0
        %v3360 = vadd.f32 %v3151, %v3359
        %v3361 = vpop.f32.mrf.mxu0
        %v3362 = vadd.f32 %v3153, %v3361
        %3363 = vmatprep.mubr.f32.mxu0 0.0
        %3364 = vmatmul.mubr.f32.gmra.mxu0 %v2759
        %v3365 = vpop.f32.mrf.mxu0
        %v3366 = vadd.f32 %v3157, %v3365
        %v3367 = vpop.f32.mrf.mxu0
        %v3368 = vadd.f32 %v3159, %v3367
        %3369 = vmatprep.mubr.f32.mxu0 0.0
        %3370 = vmatmul.mubr.f32.gmra.mxu0 %v2762
        %v3371 = vpop.f32.mrf.mxu0
        %v3372 = vadd.f32 %v3163, %v3371
        %v3373 = vpop.f32.mrf.mxu0
        %v3374 = vadd.f32 %v3165, %v3373
        %3375 = vmatprep.mubr.f32.mxu0 0.0
        %3376 = vmatmul.mubr.f32.gmra.mxu0 %v2765
        %v3377 = vpop.f32.mrf.mxu0
        %v3378 = vadd.f32 %v3169, %v3377
        %v3379 = vpop.f32.mrf.mxu0
        %v3380 = vadd.f32 %v3171, %v3379
        %3381 = vmatprep.mubr.f32.mxu0 0.0
        %3382 = vmatmul.mubr.f32.gmra.mxu0 %v2768
        %v3383 = vpop.f32.mrf.mxu0
        %v3384 = vadd.f32 %v3175, %v3383
        %v3385 = vpop.f32.mrf.mxu0
        %v3386 = vadd.f32 %v3177, %v3385
        %3387 = vmatprep.mubr.f32.mxu0 0.0
        %3388 = vmatmul.mubr.f32.gmra.mxu0 %v2771
        %v3389 = vpop.f32.mrf.mxu0
        %v3390 = vadd.f32 %v3181, %v3389
        %v3391 = vpop.f32.mrf.mxu0
        %v3392 = vadd.f32 %v3183, %v3391
        %3393 = vmatprep.mubr.f32.mxu0 0.0
        %3394 = vmatmul.mubr.f32.gmra.mxu0 %v2774
        %v3395 = vpop.f32.mrf.mxu0
        %v3396 = vadd.f32 %v3187, %v3395
        %v3397 = vpop.f32.mrf.mxu0
        %v3398 = vadd.f32 %v3189, %v3397
        %3399 = vmatprep.mubr.f32.mxu0 0.0
        %3400 = vmatmul.mubr.f32.gmra.mxu0 %v2777
        %v3401 = vpop.f32.mrf.mxu0
        %v3402 = vadd.f32 %v3193, %v3401
        %v3403 = vpop.f32.mrf.mxu0
        %v3404 = vadd.f32 %v3195, %v3403
        %3405 = vmatprep.mubr.f32.mxu0 0.0
        %3406 = vmatmul.mubr.f32.gmra.mxu0 %v2780
        %v3407 = vpop.f32.mrf.mxu0
        %v3408 = vadd.f32 %v3199, %v3407
        %v3409 = vpop.f32.mrf.mxu0
        %v3410 = vadd.f32 %v3201, %v3409
        %3411 = vmatprep.mubr.f32.mxu0 0.0
        %3412 = vmatmul.mubr.f32.gmra.mxu0 %v2783
        %v3413 = vpop.f32.mrf.mxu0
        %v3414 = vadd.f32 %v3205, %v3413
        %v3415 = vpop.f32.mrf.mxu0
        %v3416 = vadd.f32 %v3207, %v3415
        %3417 = vmatprep.mubr.f32.mxu0 0.0
        %3418 = vmatmul.mubr.f32.gmra.mxu0 %v2786
        %v3419 = vpop.f32.mrf.mxu0
        %v3420 = vadd.f32 %v3211, %v3419
        %v3421 = vpop.f32.mrf.mxu0
        %v3422 = vadd.f32 %v3213, %v3421
        %3423 = vmatprep.mubr.f32.mxu0 0.0
        %3424 = vmatmul.mubr.f32.gmra.mxu0 %v2789
        %v3425 = vpop.f32.mrf.mxu0
        %v3426 = vadd.f32 %v3217, %v3425
        %v3427 = vpop.f32.mrf.mxu0
        %v3428 = vadd.f32 %v3219, %v3427
        %3429 = vmatprep.mubr.f32.mxu0 0.0
        %3430 = vmatmul.mubr.f32.gmra.mxu0 %v2792
        %v3431 = vpop.f32.mrf.mxu0
        %v3432 = vadd.f32 %v3223, %v3431
        %v3433 = vpop.f32.mrf.mxu0
        %v3434 = vadd.f32 %v3225, %v3433
        %3435 = vmatprep.mubr.f32.mxu0 0.0
        %3436 = vmatmul.mubr.f32.gmra.mxu0 %v2795
        %v3437 = vpop.f32.mrf.mxu0
        %v3438 = vadd.f32 %v3229, %v3437
        %v3439 = vpop.f32.mrf.mxu0
        %v3440 = vadd.f32 %v3231, %v3439
        %3441 = vmatprep.mubr.f32.mxu0 0.0
        %3442 = vmatmul.mubr.f32.gmra.mxu0 %v2798
        %v3443 = vpop.f32.mrf.mxu0
        %v3444 = vadd.f32 %v3235, %v3443
        %v3445 = vpop.f32.mrf.mxu0
        %v3446 = vadd.f32 %v3237, %v3445
        %3447 = vmatprep.mubr.f32.mxu0 0.0
        %3448 = vmatmul.mubr.f32.gmra.mxu0 %v2801
        %v3449 = vpop.f32.mrf.mxu0
        %v3450 = vadd.f32 %v3241, %v3449
        %v3451 = vpop.f32.mrf.mxu0
        %v3452 = vadd.f32 %v3243, %v3451
        %3453 = vmatprep.mubr.f32.mxu0 0.0
        %3454 = vmatmul.mubr.f32.gmra.mxu0 %v2804
        %v3455 = vpop.f32.mrf.mxu0
        %v3456 = vadd.f32 %v3247, %v3455
        %v3457 = vpop.f32.mrf.mxu0
        %v3458 = vadd.f32 %v3249, %v3457
        %3459 = vmatprep.mubr.f32.mxu0 0.0
        %3460 = vmatmul.mubr.f32.gmra.mxu0 %v2807
        %v3461 = vpop.f32.mrf.mxu0
        %v3462 = vadd.f32 %v3253, %v3461
        %v3463 = vpop.f32.mrf.mxu0
        %v3464 = vadd.f32 %v3255, %v3463
        %3465 = vdwg.mxu0
        %3466 = vmatprep.subr.mxu0 %v2886
        %3467 = vmatpush1.msra.mxu0 %v2885
        %3468 = vmatprep.subr.mxu0 %v2881
        %3469 = vmatpush1.msra.mxu0 %v2880
        %3470 = vmatprep.subr.mxu0 %v2876
        %3471 = vmatpush1.msra.mxu0 %v2875
        %3472 = vmatprep.subr.mxu0 %v2871
        %3473 = vmatpush1.msra.mxu0 %v2870
        %3474 = vmatprep.subr.mxu0 %v2866
        %3475 = vmatpush1.msra.mxu0 %v2865
        %3476 = vmatprep.subr.mxu0 %v2861
        %3477 = vmatpush1.msra.mxu0 %v2860
        %3478 = vmatprep.subr.mxu0 %v2856
        %3479 = vmatpush1.msra.mxu0 %v2855
        %3480 = vmatprep.subr.mxu0 %v2851
        %3481 = vmatpush1.msra.mxu0 %v2850
        %3482 = vmatprep.subr.mxu0 %v2846
        %3483 = vmatpush1.msra.mxu0 %v2845
        %3484 = vmatprep.subr.mxu0 %v2841
        %3485 = vmatpush1.msra.mxu0 %v2840
        %3486 = vmatprep.subr.mxu0 %v2836
        %3487 = vmatpush1.msra.mxu0 %v2835
        %3488 = vmatprep.subr.mxu0 %v2831
        %3489 = vmatpush1.msra.mxu0 %v2830
        %3490 = vmatprep.subr.mxu0 %v2826
        %3491 = vmatpush1.msra.mxu0 %v2825
        %3492 = vmatprep.subr.mxu0 %v2821
        %3493 = vmatpush1.msra.mxu0 %v2820
        %3494 = vmatprep.subr.mxu0 %v2816
        %3495 = vmatpush1.msra.mxu0 %v2815
        %3496 = vmatprep.subr.mxu0 %v2811
        %3497 = vmatpush1.msra.mxu0 %v2810
        %3498 = vmatprep.subr.mxu0 %v2966
        %3499 = vmatpush2.msra.mxu0 %v2965
        %3500 = vmatprep.subr.mxu0 %v2961
        %3501 = vmatpush2.msra.mxu0 %v2960
        %3502 = vmatprep.subr.mxu0 %v2956
        %3503 = vmatpush2.msra.mxu0 %v2955
        %3504 = vmatprep.subr.mxu0 %v2951
        %3505 = vmatpush2.msra.mxu0 %v2950
        %3506 = vmatprep.subr.mxu0 %v2946
        %3507 = vmatpush2.msra.mxu0 %v2945
        %3508 = vmatprep.subr.mxu0 %v2941
        %3509 = vmatpush2.msra.mxu0 %v2940
        %3510 = vmatprep.subr.mxu0 %v2936
        %3511 = vmatpush2.msra.mxu0 %v2935
        %3512 = vmatprep.subr.mxu0 %v2931
        %3513 = vmatpush2.msra.mxu0 %v2930
        %3514 = vmatprep.subr.mxu0 %v2926
        %3515 = vmatpush2.msra.mxu0 %v2925
        %3516 = vmatprep.subr.mxu0 %v2921
        %3517 = vmatpush2.msra.mxu0 %v2920
        %3518 = vmatprep.subr.mxu0 %v2916
        %3519 = vmatpush2.msra.mxu0 %v2915
        %3520 = vmatprep.subr.mxu0 %v2911
        %3521 = vmatpush2.msra.mxu0 %v2910
        %3522 = vmatprep.subr.mxu0 %v2906
        %3523 = vmatpush2.msra.mxu0 %v2905
        %3524 = vmatprep.subr.mxu0 %v2901
        %3525 = vmatpush2.msra.mxu0 %v2900
        %3526 = vmatprep.subr.mxu0 %v2896
        %3527 = vmatpush2.msra.mxu0 %v2895
        %3528 = vmatprep.subr.mxu0 %v2891
        %3529 = vmatpush2.msra.mxu0 %v2890
        %3530 = vmatprep.mubr.f32.mxu0 %v2737
        %3531 = vmatmul.mubr.f32.gmra.mxu0 %v2736
        %v3532 = vpop.f32.mrf.mxu0
        %v3533 = vadd.f32 0.0, %v3532
        %v3534 = vpop.f32.mrf.mxu0
        %v3535 = vadd.f32 0.0, %v3534
        %3536 = vmatprep.mubr.f32.mxu0 %v2740
        %3537 = vmatmul.mubr.f32.gmra.mxu0 %v2739
        %v3538 = vpop.f32.mrf.mxu0
        %v3539 = vadd.f32 0.0, %v3538
        %v3540 = vpop.f32.mrf.mxu0
        %v3541 = vadd.f32 0.0, %v3540
        %3542 = vmatprep.mubr.f32.mxu0 %v2743
        %3543 = vmatmul.mubr.f32.gmra.mxu0 %v2742
        %v3544 = vpop.f32.mrf.mxu0
        %v3545 = vadd.f32 0.0, %v3544
        %v3546 = vpop.f32.mrf.mxu0
        %v3547 = vadd.f32 0.0, %v3546
        %3548 = vmatprep.mubr.f32.mxu0 %v2746
        %3549 = vmatmul.mubr.f32.gmra.mxu0 %v2745
        %v3550 = vpop.f32.mrf.mxu0
        %v3551 = vadd.f32 0.0, %v3550
        %v3552 = vpop.f32.mrf.mxu0
        %v3553 = vadd.f32 0.0, %v3552
        %3554 = vmatprep.mubr.f32.mxu0 %v2749
        %3555 = vmatmul.mubr.f32.gmra.mxu0 %v2748
        %v3556 = vpop.f32.mrf.mxu0
        %v3557 = vadd.f32 0.0, %v3556
        %v3558 = vpop.f32.mrf.mxu0
        %v3559 = vadd.f32 0.0, %v3558
        %3560 = vmatprep.mubr.f32.mxu0 %v2752
        %3561 = vmatmul.mubr.f32.gmra.mxu0 %v2751
        %v3562 = vpop.f32.mrf.mxu0
        %v3563 = vadd.f32 0.0, %v3562
        %v3564 = vpop.f32.mrf.mxu0
        %v3565 = vadd.f32 0.0, %v3564
        %3566 = vmatprep.mubr.f32.mxu0 %v2755
        %3567 = vmatmul.mubr.f32.gmra.mxu0 %v2754
        %v3568 = vpop.f32.mrf.mxu0
        %v3569 = vadd.f32 0.0, %v3568
        %v3570 = vpop.f32.mrf.mxu0
        %v3571 = vadd.f32 0.0, %v3570
        %3572 = vmatprep.mubr.f32.mxu0 %v2758
        %3573 = vmatmul.mubr.f32.gmra.mxu0 %v2757
        %v3574 = vpop.f32.mrf.mxu0
        %v3575 = vadd.f32 0.0, %v3574
        %v3576 = vpop.f32.mrf.mxu0
        %v3577 = vadd.f32 0.0, %v3576
        %3578 = vmatprep.mubr.f32.mxu0 %v2761
        %3579 = vmatmul.mubr.f32.gmra.mxu0 %v2760
        %v3580 = vpop.f32.mrf.mxu0
        %v3581 = vadd.f32 0.0, %v3580
        %v3582 = vpop.f32.mrf.mxu0
        %v3583 = vadd.f32 0.0, %v3582
        %3584 = vmatprep.mubr.f32.mxu0 %v2764
        %3585 = vmatmul.mubr.f32.gmra.mxu0 %v2763
        %v3586 = vpop.f32.mrf.mxu0
        %v3587 = vadd.f32 0.0, %v3586
        %v3588 = vpop.f32.mrf.mxu0
        %v3589 = vadd.f32 0.0, %v3588
        %3590 = vmatprep.mubr.f32.mxu0 %v2767
        %3591 = vmatmul.mubr.f32.gmra.mxu0 %v2766
        %v3592 = vpop.f32.mrf.mxu0
        %v3593 = vadd.f32 0.0, %v3592
        %v3594 = vpop.f32.mrf.mxu0
        %v3595 = vadd.f32 0.0, %v3594
        %3596 = vmatprep.mubr.f32.mxu0 %v2770
        %3597 = vmatmul.mubr.f32.gmra.mxu0 %v2769
        %v3598 = vpop.f32.mrf.mxu0
        %v3599 = vadd.f32 0.0, %v3598
        %v3600 = vpop.f32.mrf.mxu0
        %v3601 = vadd.f32 0.0, %v3600
        %3602 = vmatprep.mubr.f32.mxu0 %v2773
        %3603 = vmatmul.mubr.f32.gmra.mxu0 %v2772
        %v3604 = vpop.f32.mrf.mxu0
        %v3605 = vadd.f32 0.0, %v3604
        %v3606 = vpop.f32.mrf.mxu0
        %v3607 = vadd.f32 0.0, %v3606
        %3608 = vmatprep.mubr.f32.mxu0 %v2776
        %3609 = vmatmul.mubr.f32.gmra.mxu0 %v2775
        %v3610 = vpop.f32.mrf.mxu0
        %v3611 = vadd.f32 0.0, %v3610
        %v3612 = vpop.f32.mrf.mxu0
        %v3613 = vadd.f32 0.0, %v3612
        %3614 = vmatprep.mubr.f32.mxu0 %v2779
        %3615 = vmatmul.mubr.f32.gmra.mxu0 %v2778
        %v3616 = vpop.f32.mrf.mxu0
        %v3617 = vadd.f32 0.0, %v3616
        %v3618 = vpop.f32.mrf.mxu0
        %v3619 = vadd.f32 0.0, %v3618
        %3620 = vmatprep.mubr.f32.mxu0 %v2782
        %3621 = vmatmul.mubr.f32.gmra.mxu0 %v2781
        %v3622 = vpop.f32.mrf.mxu0
        %v3623 = vadd.f32 0.0, %v3622
        %v3624 = vpop.f32.mrf.mxu0
        %v3625 = vadd.f32 0.0, %v3624
        %3626 = vmatprep.mubr.f32.mxu0 %v2785
        %3627 = vmatmul.mubr.f32.gmra.mxu0 %v2784
        %v3628 = vpop.f32.mrf.mxu0
        %v3629 = vadd.f32 0.0, %v3628
        %v3630 = vpop.f32.mrf.mxu0
        %v3631 = vadd.f32 0.0, %v3630
        %3632 = vmatprep.mubr.f32.mxu0 %v2788
        %3633 = vmatmul.mubr.f32.gmra.mxu0 %v2787
        %v3634 = vpop.f32.mrf.mxu0
        %v3635 = vadd.f32 0.0, %v3634
        %v3636 = vpop.f32.mrf.mxu0
        %v3637 = vadd.f32 0.0, %v3636
        %3638 = vmatprep.mubr.f32.mxu0 %v2791
        %3639 = vmatmul.mubr.f32.gmra.mxu0 %v2790
        %v3640 = vpop.f32.mrf.mxu0
        %v3641 = vadd.f32 0.0, %v3640
        %v3642 = vpop.f32.mrf.mxu0
        %v3643 = vadd.f32 0.0, %v3642
        %3644 = vmatprep.mubr.f32.mxu0 %v2794
        %3645 = vmatmul.mubr.f32.gmra.mxu0 %v2793
        %v3646 = vpop.f32.mrf.mxu0
        %v3647 = vadd.f32 0.0, %v3646
        %v3648 = vpop.f32.mrf.mxu0
        %v3649 = vadd.f32 0.0, %v3648
        %3650 = vmatprep.mubr.f32.mxu0 %v2797
        %3651 = vmatmul.mubr.f32.gmra.mxu0 %v2796
        %v3652 = vpop.f32.mrf.mxu0
        %v3653 = vadd.f32 0.0, %v3652
        %v3654 = vpop.f32.mrf.mxu0
        %v3655 = vadd.f32 0.0, %v3654
        %3656 = vmatprep.mubr.f32.mxu0 %v2800
        %3657 = vmatmul.mubr.f32.gmra.mxu0 %v2799
        %v3658 = vpop.f32.mrf.mxu0
        %v3659 = vadd.f32 0.0, %v3658
        %v3660 = vpop.f32.mrf.mxu0
        %v3661 = vadd.f32 0.0, %v3660
        %3662 = vmatprep.mubr.f32.mxu0 %v2803
        %3663 = vmatmul.mubr.f32.gmra.mxu0 %v2802
        %v3664 = vpop.f32.mrf.mxu0
        %v3665 = vadd.f32 0.0, %v3664
        %v3666 = vpop.f32.mrf.mxu0
        %v3667 = vadd.f32 0.0, %v3666
        %3668 = vmatprep.mubr.f32.mxu0 %v2806
        %3669 = vmatmul.mubr.f32.gmra.mxu0 %v2805
        %v3670 = vpop.f32.mrf.mxu0
        %v3671 = vadd.f32 0.0, %v3670
        %v3672 = vpop.f32.mrf.mxu0
        %v3673 = vadd.f32 0.0, %v3672
        %3674 = vdwg.mxu0
        %3675 = vmatprep.subr.mxu0 %v3046
        %3676 = vmatpush1.msra.mxu0 %v3045
        %3677 = vmatprep.subr.mxu0 %v3041
        %3678 = vmatpush1.msra.mxu0 %v3040
        %3679 = vmatprep.subr.mxu0 %v3036
        %3680 = vmatpush1.msra.mxu0 %v3035
        %3681 = vmatprep.subr.mxu0 %v3031
        %3682 = vmatpush1.msra.mxu0 %v3030
        %3683 = vmatprep.subr.mxu0 %v3026
        %3684 = vmatpush1.msra.mxu0 %v3025
        %3685 = vmatprep.subr.mxu0 %v3021
        %3686 = vmatpush1.msra.mxu0 %v3020
        %3687 = vmatprep.subr.mxu0 %v3016
        %3688 = vmatpush1.msra.mxu0 %v3015
        %3689 = vmatprep.subr.mxu0 %v3011
        %3690 = vmatpush1.msra.mxu0 %v3010
        %3691 = vmatprep.subr.mxu0 %v3006
        %3692 = vmatpush1.msra.mxu0 %v3005
        %3693 = vmatprep.subr.mxu0 %v3001
        %3694 = vmatpush1.msra.mxu0 %v3000
        %3695 = vmatprep.subr.mxu0 %v2996
        %3696 = vmatpush1.msra.mxu0 %v2995
        %3697 = vmatprep.subr.mxu0 %v2991
        %3698 = vmatpush1.msra.mxu0 %v2990
        %3699 = vmatprep.subr.mxu0 %v2986
        %3700 = vmatpush1.msra.mxu0 %v2985
        %3701 = vmatprep.subr.mxu0 %v2981
        %3702 = vmatpush1.msra.mxu0 %v2980
        %3703 = vmatprep.subr.mxu0 %v2976
        %3704 = vmatpush1.msra.mxu0 %v2975
        %3705 = vmatprep.subr.mxu0 %v2971
        %3706 = vmatpush1.msra.mxu0 %v2970
        %3707 = vmatprep.subr.mxu0 0.0
        %3708 = vmatpush2.msra.mxu0 0.0
        %3709 = vmatprep.subr.mxu0 0.0
        %3710 = vmatpush2.msra.mxu0 0.0
        %3711 = vmatprep.subr.mxu0 0.0
        %3712 = vmatpush2.msra.mxu0 0.0
        %3713 = vmatprep.subr.mxu0 0.0
        %3714 = vmatpush2.msra.mxu0 0.0
        %3715 = vmatprep.subr.mxu0 0.0
        %3716 = vmatpush2.msra.mxu0 0.0
        %3717 = vmatprep.subr.mxu0 0.0
        %3718 = vmatpush2.msra.mxu0 0.0
        %3719 = vmatprep.subr.mxu0 0.0
        %3720 = vmatpush2.msra.mxu0 0.0
        %3721 = vmatprep.subr.mxu0 0.0
        %3722 = vmatpush2.msra.mxu0 0.0
        %3723 = vmatprep.subr.mxu0 0.0
        %3724 = vmatpush2.msra.mxu0 0.0
        %3725 = vmatprep.subr.mxu0 0.0
        %3726 = vmatpush2.msra.mxu0 0.0
        %3727 = vmatprep.subr.mxu0 0.0
        %3728 = vmatpush2.msra.mxu0 0.0
        %3729 = vmatprep.subr.mxu0 0.0
        %3730 = vmatpush2.msra.mxu0 0.0
        %3731 = vmatprep.subr.mxu0 0.0
        %3732 = vmatpush2.msra.mxu0 0.0
        %3733 = vmatprep.subr.mxu0 0.0
        %3734 = vmatpush2.msra.mxu0 0.0
        %3735 = vmatprep.subr.mxu0 0.0
        %3736 = vmatpush2.msra.mxu0 0.0
        %3737 = vmatprep.subr.mxu0 0.0
        %3738 = vmatpush2.msra.mxu0 0.0
        %3739 = vmatprep.mubr.f32.mxu0 0.0
        %3740 = vmatmul.mubr.f32.gmra.mxu0 %v2738
        %v3741 = vpop.f32.mrf.mxu0
        %v3742 = vadd.f32 %v3533, %v3741
        %v3743 = vpop.f32.mrf.mxu0
        %v3744 = vadd.f32 %v3535, %v3743
        %3745 = vmatprep.mubr.f32.mxu0 0.0
        %3746 = vmatmul.mubr.f32.gmra.mxu0 %v2741
        %v3747 = vpop.f32.mrf.mxu0
        %v3748 = vadd.f32 %v3539, %v3747
        %v3749 = vpop.f32.mrf.mxu0
        %v3750 = vadd.f32 %v3541, %v3749
        %3751 = vmatprep.mubr.f32.mxu0 0.0
        %3752 = vmatmul.mubr.f32.gmra.mxu0 %v2744
        %v3753 = vpop.f32.mrf.mxu0
        %v3754 = vadd.f32 %v3545, %v3753
        %v3755 = vpop.f32.mrf.mxu0
        %v3756 = vadd.f32 %v3547, %v3755
        %3757 = vmatprep.mubr.f32.mxu0 0.0
        %3758 = vmatmul.mubr.f32.gmra.mxu0 %v2747
        %v3759 = vpop.f32.mrf.mxu0
        %v3760 = vadd.f32 %v3551, %v3759
        %v3761 = vpop.f32.mrf.mxu0
        %v3762 = vadd.f32 %v3553, %v3761
        %3763 = vmatprep.mubr.f32.mxu0 0.0
        %3764 = vmatmul.mubr.f32.gmra.mxu0 %v2750
        %v3765 = vpop.f32.mrf.mxu0
        %v3766 = vadd.f32 %v3557, %v3765
        %v3767 = vpop.f32.mrf.mxu0
        %v3768 = vadd.f32 %v3559, %v3767
        %3769 = vmatprep.mubr.f32.mxu0 0.0
        %3770 = vmatmul.mubr.f32.gmra.mxu0 %v2753
        %v3771 = vpop.f32.mrf.mxu0
        %v3772 = vadd.f32 %v3563, %v3771
        %v3773 = vpop.f32.mrf.mxu0
        %v3774 = vadd.f32 %v3565, %v3773
        %3775 = vmatprep.mubr.f32.mxu0 0.0
        %3776 = vmatmul.mubr.f32.gmra.mxu0 %v2756
        %v3777 = vpop.f32.mrf.mxu0
        %v3778 = vadd.f32 %v3569, %v3777
        %v3779 = vpop.f32.mrf.mxu0
        %v3780 = vadd.f32 %v3571, %v3779
        %3781 = vmatprep.mubr.f32.mxu0 0.0
        %3782 = vmatmul.mubr.f32.gmra.mxu0 %v2759
        %v3783 = vpop.f32.mrf.mxu0
        %v3784 = vadd.f32 %v3575, %v3783
        %v3785 = vpop.f32.mrf.mxu0
        %v3786 = vadd.f32 %v3577, %v3785
        %3787 = vmatprep.mubr.f32.mxu0 0.0
        %3788 = vmatmul.mubr.f32.gmra.mxu0 %v2762
        %v3789 = vpop.f32.mrf.mxu0
        %v3790 = vadd.f32 %v3581, %v3789
        %v3791 = vpop.f32.mrf.mxu0
        %v3792 = vadd.f32 %v3583, %v3791
        %3793 = vmatprep.mubr.f32.mxu0 0.0
        %3794 = vmatmul.mubr.f32.gmra.mxu0 %v2765
        %v3795 = vpop.f32.mrf.mxu0
        %v3796 = vadd.f32 %v3587, %v3795
        %v3797 = vpop.f32.mrf.mxu0
        %v3798 = vadd.f32 %v3589, %v3797
        %3799 = vmatprep.mubr.f32.mxu0 0.0
        %3800 = vmatmul.mubr.f32.gmra.mxu0 %v2768
        %v3801 = vpop.f32.mrf.mxu0
        %v3802 = vadd.f32 %v3593, %v3801
        %v3803 = vpop.f32.mrf.mxu0
        %v3804 = vadd.f32 %v3595, %v3803
        %3805 = vmatprep.mubr.f32.mxu0 0.0
        %3806 = vmatmul.mubr.f32.gmra.mxu0 %v2771
        %v3807 = vpop.f32.mrf.mxu0
        %v3808 = vadd.f32 %v3599, %v3807
        %v3809 = vpop.f32.mrf.mxu0
        %v3810 = vadd.f32 %v3601, %v3809
        %3811 = vmatprep.mubr.f32.mxu0 0.0
        %3812 = vmatmul.mubr.f32.gmra.mxu0 %v2774
        %v3813 = vpop.f32.mrf.mxu0
        %v3814 = vadd.f32 %v3605, %v3813
        %v3815 = vpop.f32.mrf.mxu0
        %v3816 = vadd.f32 %v3607, %v3815
        %3817 = vmatprep.mubr.f32.mxu0 0.0
        %3818 = vmatmul.mubr.f32.gmra.mxu0 %v2777
        %v3819 = vpop.f32.mrf.mxu0
        %v3820 = vadd.f32 %v3611, %v3819
        %v3821 = vpop.f32.mrf.mxu0
        %v3822 = vadd.f32 %v3613, %v3821
        %3823 = vmatprep.mubr.f32.mxu0 0.0
        %3824 = vmatmul.mubr.f32.gmra.mxu0 %v2780
        %v3825 = vpop.f32.mrf.mxu0
        %v3826 = vadd.f32 %v3617, %v3825
        %v3827 = vpop.f32.mrf.mxu0
        %v3828 = vadd.f32 %v3619, %v3827
        %3829 = vmatprep.mubr.f32.mxu0 0.0
        %3830 = vmatmul.mubr.f32.gmra.mxu0 %v2783
        %v3831 = vpop.f32.mrf.mxu0
        %v3832 = vadd.f32 %v3623, %v3831
        %v3833 = vpop.f32.mrf.mxu0
        %v3834 = vadd.f32 %v3625, %v3833
        %3835 = vmatprep.mubr.f32.mxu0 0.0
        %3836 = vmatmul.mubr.f32.gmra.mxu0 %v2786
        %v3837 = vpop.f32.mrf.mxu0
        %v3838 = vadd.f32 %v3629, %v3837
        %v3839 = vpop.f32.mrf.mxu0
        %v3840 = vadd.f32 %v3631, %v3839
        %3841 = vmatprep.mubr.f32.mxu0 0.0
        %3842 = vmatmul.mubr.f32.gmra.mxu0 %v2789
        %v3843 = vpop.f32.mrf.mxu0
        %v3844 = vadd.f32 %v3635, %v3843
        %v3845 = vpop.f32.mrf.mxu0
        %v3846 = vadd.f32 %v3637, %v3845
        %3847 = vmatprep.mubr.f32.mxu0 0.0
        %3848 = vmatmul.mubr.f32.gmra.mxu0 %v2792
        %v3849 = vpop.f32.mrf.mxu0
        %v3850 = vadd.f32 %v3641, %v3849
        %v3851 = vpop.f32.mrf.mxu0
        %v3852 = vadd.f32 %v3643, %v3851
        %3853 = vmatprep.mubr.f32.mxu0 0.0
        %3854 = vmatmul.mubr.f32.gmra.mxu0 %v2795
        %v3855 = vpop.f32.mrf.mxu0
        %v3856 = vadd.f32 %v3647, %v3855
        %v3857 = vpop.f32.mrf.mxu0
        %v3858 = vadd.f32 %v3649, %v3857
        %3859 = vmatprep.mubr.f32.mxu0 0.0
        %3860 = vmatmul.mubr.f32.gmra.mxu0 %v2798
        %v3861 = vpop.f32.mrf.mxu0
        %v3862 = vadd.f32 %v3653, %v3861
        %v3863 = vpop.f32.mrf.mxu0
        %v3864 = vadd.f32 %v3655, %v3863
        %3865 = vmatprep.mubr.f32.mxu0 0.0
        %3866 = vmatmul.mubr.f32.gmra.mxu0 %v2801
        %v3867 = vpop.f32.mrf.mxu0
        %v3868 = vadd.f32 %v3659, %v3867
        %v3869 = vpop.f32.mrf.mxu0
        %v3870 = vadd.f32 %v3661, %v3869
        %3871 = vmatprep.mubr.f32.mxu0 0.0
        %3872 = vmatmul.mubr.f32.gmra.mxu0 %v2804
        %v3873 = vpop.f32.mrf.mxu0
        %v3874 = vadd.f32 %v3665, %v3873
        %v3875 = vpop.f32.mrf.mxu0
        %v3876 = vadd.f32 %v3667, %v3875
        %3877 = vmatprep.mubr.f32.mxu0 0.0
        %3878 = vmatmul.mubr.f32.gmra.mxu0 %v2807
        %v3879 = vpop.f32.mrf.mxu0
        %v3880 = vadd.f32 %v3671, %v3879
        %v3881 = vpop.f32.mrf.mxu0
        %v3882 = vadd.f32 %v3673, %v3881
        %3883 = vdwg.mxu0
        %3884 = vmatprep.subr.mxu0 0.0
        %3885 = vmatpush1.msra.mxu0 %v2887
        %3886 = vmatprep.subr.mxu0 0.0
        %3887 = vmatpush1.msra.mxu0 %v2882
        %3888 = vmatprep.subr.mxu0 0.0
        %3889 = vmatpush1.msra.mxu0 %v2877
        %3890 = vmatprep.subr.mxu0 0.0
        %3891 = vmatpush1.msra.mxu0 %v2872
        %3892 = vmatprep.subr.mxu0 0.0
        %3893 = vmatpush1.msra.mxu0 %v2867
        %3894 = vmatprep.subr.mxu0 0.0
        %3895 = vmatpush1.msra.mxu0 %v2862
        %3896 = vmatprep.subr.mxu0 0.0
        %3897 = vmatpush1.msra.mxu0 %v2857
        %3898 = vmatprep.subr.mxu0 0.0
        %3899 = vmatpush1.msra.mxu0 %v2852
        %3900 = vmatprep.subr.mxu0 0.0
        %3901 = vmatpush1.msra.mxu0 %v2847
        %3902 = vmatprep.subr.mxu0 0.0
        %3903 = vmatpush1.msra.mxu0 %v2842
        %3904 = vmatprep.subr.mxu0 0.0
        %3905 = vmatpush1.msra.mxu0 %v2837
        %3906 = vmatprep.subr.mxu0 0.0
        %3907 = vmatpush1.msra.mxu0 %v2832
        %3908 = vmatprep.subr.mxu0 0.0
        %3909 = vmatpush1.msra.mxu0 %v2827
        %3910 = vmatprep.subr.mxu0 0.0
        %3911 = vmatpush1.msra.mxu0 %v2822
        %3912 = vmatprep.subr.mxu0 0.0
        %3913 = vmatpush1.msra.mxu0 %v2817
        %3914 = vmatprep.subr.mxu0 0.0
        %3915 = vmatpush1.msra.mxu0 %v2812
        %3916 = vmatprep.subr.mxu0 0.0
        %3917 = vmatpush2.msra.mxu0 %v2967
        %3918 = vmatprep.subr.mxu0 0.0
        %3919 = vmatpush2.msra.mxu0 %v2962
        %3920 = vmatprep.subr.mxu0 0.0
        %3921 = vmatpush2.msra.mxu0 %v2957
        %3922 = vmatprep.subr.mxu0 0.0
        %3923 = vmatpush2.msra.mxu0 %v2952
        %3924 = vmatprep.subr.mxu0 0.0
        %3925 = vmatpush2.msra.mxu0 %v2947
        %3926 = vmatprep.subr.mxu0 0.0
        %3927 = vmatpush2.msra.mxu0 %v2942
        %3928 = vmatprep.subr.mxu0 0.0
        %3929 = vmatpush2.msra.mxu0 %v2937
        %3930 = vmatprep.subr.mxu0 0.0
        %3931 = vmatpush2.msra.mxu0 %v2932
        %3932 = vmatprep.subr.mxu0 0.0
        %3933 = vmatpush2.msra.mxu0 %v2927
        %3934 = vmatprep.subr.mxu0 0.0
        %3935 = vmatpush2.msra.mxu0 %v2922
        %3936 = vmatprep.subr.mxu0 0.0
        %3937 = vmatpush2.msra.mxu0 %v2917
        %3938 = vmatprep.subr.mxu0 0.0
        %3939 = vmatpush2.msra.mxu0 %v2912
        %3940 = vmatprep.subr.mxu0 0.0
        %3941 = vmatpush2.msra.mxu0 %v2907
        %3942 = vmatprep.subr.mxu0 0.0
        %3943 = vmatpush2.msra.mxu0 %v2902
        %3944 = vmatprep.subr.mxu0 0.0
        %3945 = vmatpush2.msra.mxu0 %v2897
        %3946 = vmatprep.subr.mxu0 0.0
        %3947 = vmatpush2.msra.mxu0 %v2892
        %3948 = vmatprep.mubr.f32.mxu0 %v2737
        %3949 = vmatmul.mubr.f32.gmra.mxu0 %v2736
        %v3950 = vpop.f32.mrf.mxu0
        %v3951 = vadd.f32 0.0, %v3950
        %v3952 = vpop.f32.mrf.mxu0
        %3953 = vmatprep.mubr.f32.mxu0 %v2740
        %3954 = vmatmul.mubr.f32.gmra.mxu0 %v2739
        %v3955 = vpop.f32.mrf.mxu0
        %v3956 = vadd.f32 0.0, %v3955
        %v3957 = vpop.f32.mrf.mxu0
        %3958 = vmatprep.mubr.f32.mxu0 %v2743
        %3959 = vmatmul.mubr.f32.gmra.mxu0 %v2742
        %v3960 = vpop.f32.mrf.mxu0
        %v3961 = vadd.f32 0.0, %v3960
        %v3962 = vpop.f32.mrf.mxu0
        %3963 = vmatprep.mubr.f32.mxu0 %v2746
        %3964 = vmatmul.mubr.f32.gmra.mxu0 %v2745
        %v3965 = vpop.f32.mrf.mxu0
        %v3966 = vadd.f32 0.0, %v3965
        %v3967 = vpop.f32.mrf.mxu0
        %3968 = vmatprep.mubr.f32.mxu0 %v2749
        %3969 = vmatmul.mubr.f32.gmra.mxu0 %v2748
        %v3970 = vpop.f32.mrf.mxu0
        %v3971 = vadd.f32 0.0, %v3970
        %v3972 = vpop.f32.mrf.mxu0
        %3973 = vmatprep.mubr.f32.mxu0 %v2752
        %3974 = vmatmul.mubr.f32.gmra.mxu0 %v2751
        %v3975 = vpop.f32.mrf.mxu0
        %v3976 = vadd.f32 0.0, %v3975
        %v3977 = vpop.f32.mrf.mxu0
        %3978 = vmatprep.mubr.f32.mxu0 %v2755
        %3979 = vmatmul.mubr.f32.gmra.mxu0 %v2754
        %v3980 = vpop.f32.mrf.mxu0
        %v3981 = vadd.f32 0.0, %v3980
        %v3982 = vpop.f32.mrf.mxu0
        %3983 = vmatprep.mubr.f32.mxu0 %v2758
        %3984 = vmatmul.mubr.f32.gmra.mxu0 %v2757
        %v3985 = vpop.f32.mrf.mxu0
        %v3986 = vadd.f32 0.0, %v3985
        %v3987 = vpop.f32.mrf.mxu0
        %3988 = vmatprep.mubr.f32.mxu0 %v2761
        %3989 = vmatmul.mubr.f32.gmra.mxu0 %v2760
        %v3990 = vpop.f32.mrf.mxu0
        %v3991 = vadd.f32 0.0, %v3990
        %v3992 = vpop.f32.mrf.mxu0
        %3993 = vmatprep.mubr.f32.mxu0 %v2764
        %3994 = vmatmul.mubr.f32.gmra.mxu0 %v2763
        %v3995 = vpop.f32.mrf.mxu0
        %v3996 = vadd.f32 0.0, %v3995
        %v3997 = vpop.f32.mrf.mxu0
        %3998 = vmatprep.mubr.f32.mxu0 %v2767
        %3999 = vmatmul.mubr.f32.gmra.mxu0 %v2766
        %v4000 = vpop.f32.mrf.mxu0
        %v4001 = vadd.f32 0.0, %v4000
        %v4002 = vpop.f32.mrf.mxu0
        %4003 = vmatprep.mubr.f32.mxu0 %v2770
        %4004 = vmatmul.mubr.f32.gmra.mxu0 %v2769
        %v4005 = vpop.f32.mrf.mxu0
        %v4006 = vadd.f32 0.0, %v4005
        %v4007 = vpop.f32.mrf.mxu0
        %4008 = vmatprep.mubr.f32.mxu0 %v2773
        %4009 = vmatmul.mubr.f32.gmra.mxu0 %v2772
        %v4010 = vpop.f32.mrf.mxu0
        %v4011 = vadd.f32 0.0, %v4010
        %v4012 = vpop.f32.mrf.mxu0
        %4013 = vmatprep.mubr.f32.mxu0 %v2776
        %4014 = vmatmul.mubr.f32.gmra.mxu0 %v2775
        %v4015 = vpop.f32.mrf.mxu0
        %v4016 = vadd.f32 0.0, %v4015
        %v4017 = vpop.f32.mrf.mxu0
        %4018 = vmatprep.mubr.f32.mxu0 %v2779
        %4019 = vmatmul.mubr.f32.gmra.mxu0 %v2778
        %v4020 = vpop.f32.mrf.mxu0
        %v4021 = vadd.f32 0.0, %v4020
        %v4022 = vpop.f32.mrf.mxu0
        %4023 = vmatprep.mubr.f32.mxu0 %v2782
        %4024 = vmatmul.mubr.f32.gmra.mxu0 %v2781
        %v4025 = vpop.f32.mrf.mxu0
        %v4026 = vadd.f32 0.0, %v4025
        %v4027 = vpop.f32.mrf.mxu0
        %4028 = vmatprep.mubr.f32.mxu0 %v2785
        %4029 = vmatmul.mubr.f32.gmra.mxu0 %v2784
        %v4030 = vpop.f32.mrf.mxu0
        %v4031 = vadd.f32 0.0, %v4030
        %v4032 = vpop.f32.mrf.mxu0
        %4033 = vmatprep.mubr.f32.mxu0 %v2788
        %4034 = vmatmul.mubr.f32.gmra.mxu0 %v2787
        %v4035 = vpop.f32.mrf.mxu0
        %v4036 = vadd.f32 0.0, %v4035
        %v4037 = vpop.f32.mrf.mxu0
        %4038 = vmatprep.mubr.f32.mxu0 %v2791
        %4039 = vmatmul.mubr.f32.gmra.mxu0 %v2790
        %v4040 = vpop.f32.mrf.mxu0
        %v4041 = vadd.f32 0.0, %v4040
        %v4042 = vpop.f32.mrf.mxu0
        %4043 = vmatprep.mubr.f32.mxu0 %v2794
        %4044 = vmatmul.mubr.f32.gmra.mxu0 %v2793
        %v4045 = vpop.f32.mrf.mxu0
        %v4046 = vadd.f32 0.0, %v4045
        %v4047 = vpop.f32.mrf.mxu0
        %4048 = vmatprep.mubr.f32.mxu0 %v2797
        %4049 = vmatmul.mubr.f32.gmra.mxu0 %v2796
        %v4050 = vpop.f32.mrf.mxu0
        %v4051 = vadd.f32 0.0, %v4050
        %v4052 = vpop.f32.mrf.mxu0
        %4053 = vmatprep.mubr.f32.mxu0 %v2800
        %4054 = vmatmul.mubr.f32.gmra.mxu0 %v2799
        %v4055 = vpop.f32.mrf.mxu0
        %v4056 = vadd.f32 0.0, %v4055
        %v4057 = vpop.f32.mrf.mxu0
        %4058 = vmatprep.mubr.f32.mxu0 %v2803
        %4059 = vmatmul.mubr.f32.gmra.mxu0 %v2802
        %v4060 = vpop.f32.mrf.mxu0
        %v4061 = vadd.f32 0.0, %v4060
        %v4062 = vpop.f32.mrf.mxu0
        %4063 = vmatprep.mubr.f32.mxu0 %v2806
        %4064 = vmatmul.mubr.f32.gmra.mxu0 %v2805
        %v4065 = vpop.f32.mrf.mxu0
        %v4066 = vadd.f32 0.0, %v4065
        %v4067 = vpop.f32.mrf.mxu0
        %4068 = vdwg.mxu0
        %4069 = vmatprep.subr.mxu0 0.0
        %4070 = vmatpush1.msra.mxu0 %v3047
        %4071 = vmatprep.subr.mxu0 0.0
        %4072 = vmatpush1.msra.mxu0 %v3042
        %4073 = vmatprep.subr.mxu0 0.0
        %4074 = vmatpush1.msra.mxu0 %v3037
        %4075 = vmatprep.subr.mxu0 0.0
        %4076 = vmatpush1.msra.mxu0 %v3032
        %4077 = vmatprep.subr.mxu0 0.0
        %4078 = vmatpush1.msra.mxu0 %v3027
        %4079 = vmatprep.subr.mxu0 0.0
        %4080 = vmatpush1.msra.mxu0 %v3022
        %4081 = vmatprep.subr.mxu0 0.0
        %4082 = vmatpush1.msra.mxu0 %v3017
        %4083 = vmatprep.subr.mxu0 0.0
        %4084 = vmatpush1.msra.mxu0 %v3012
        %4085 = vmatprep.subr.mxu0 0.0
        %4086 = vmatpush1.msra.mxu0 %v3007
        %4087 = vmatprep.subr.mxu0 0.0
        %4088 = vmatpush1.msra.mxu0 %v3002
        %4089 = vmatprep.subr.mxu0 0.0
        %4090 = vmatpush1.msra.mxu0 %v2997
        %4091 = vmatprep.subr.mxu0 0.0
        %4092 = vmatpush1.msra.mxu0 %v2992
        %4093 = vmatprep.subr.mxu0 0.0
        %4094 = vmatpush1.msra.mxu0 %v2987
        %4095 = vmatprep.subr.mxu0 0.0
        %4096 = vmatpush1.msra.mxu0 %v2982
        %4097 = vmatprep.subr.mxu0 0.0
        %4098 = vmatpush1.msra.mxu0 %v2977
        %4099 = vmatprep.subr.mxu0 0.0
        %4100 = vmatpush1.msra.mxu0 %v2972
        %4101 = vmatprep.subr.mxu0 0.0
        %4102 = vmatpush2.msra.mxu0 0.0
        %4103 = vmatprep.subr.mxu0 0.0
        %4104 = vmatpush2.msra.mxu0 0.0
        %4105 = vmatprep.subr.mxu0 0.0
        %4106 = vmatpush2.msra.mxu0 0.0
        %4107 = vmatprep.subr.mxu0 0.0
        %4108 = vmatpush2.msra.mxu0 0.0
        %4109 = vmatprep.subr.mxu0 0.0
        %4110 = vmatpush2.msra.mxu0 0.0
        %4111 = vmatprep.subr.mxu0 0.0
        %4112 = vmatpush2.msra.mxu0 0.0
        %4113 = vmatprep.subr.mxu0 0.0
        %4114 = vmatpush2.msra.mxu0 0.0
        %4115 = vmatprep.subr.mxu0 0.0
        %4116 = vmatpush2.msra.mxu0 0.0
        %4117 = vmatprep.subr.mxu0 0.0
        %4118 = vmatpush2.msra.mxu0 0.0
        %4119 = vmatprep.subr.mxu0 0.0
        %4120 = vmatpush2.msra.mxu0 0.0
        %4121 = vmatprep.subr.mxu0 0.0
        %4122 = vmatpush2.msra.mxu0 0.0
        %4123 = vmatprep.subr.mxu0 0.0
        %4124 = vmatpush2.msra.mxu0 0.0
        %4125 = vmatprep.subr.mxu0 0.0
        %4126 = vmatpush2.msra.mxu0 0.0
        %4127 = vmatprep.subr.mxu0 0.0
        %4128 = vmatpush2.msra.mxu0 0.0
        %4129 = vmatprep.subr.mxu0 0.0
        %4130 = vmatpush2.msra.mxu0 0.0
        %4131 = vmatprep.subr.mxu0 0.0
        %4132 = vmatpush2.msra.mxu0 0.0
        %4133 = vmatprep.mubr.f32.mxu0 0.0
        %4134 = vmatmul.mubr.f32.gmra.mxu0 %v2738
        %v4135 = vpop.f32.mrf.mxu0
        %v4136 = vadd.f32 %v3951, %v4135
        %v4137 = vpop.f32.mrf.mxu0
        %4138 = vmatprep.mubr.f32.mxu0 0.0
        %4139 = vmatmul.mubr.f32.gmra.mxu0 %v2741
        %v4140 = vpop.f32.mrf.mxu0
        %v4141 = vadd.f32 %v3956, %v4140
        %v4142 = vpop.f32.mrf.mxu0
        %4143 = vmatprep.mubr.f32.mxu0 0.0
        %4144 = vmatmul.mubr.f32.gmra.mxu0 %v2744
        %v4145 = vpop.f32.mrf.mxu0
        %v4146 = vadd.f32 %v3961, %v4145
        %v4147 = vpop.f32.mrf.mxu0
        %4148 = vmatprep.mubr.f32.mxu0 0.0
        %4149 = vmatmul.mubr.f32.gmra.mxu0 %v2747
        %v4150 = vpop.f32.mrf.mxu0
        %v4151 = vadd.f32 %v3966, %v4150
        %v4152 = vpop.f32.mrf.mxu0
        %4153 = vmatprep.mubr.f32.mxu0 0.0
        %4154 = vmatmul.mubr.f32.gmra.mxu0 %v2750
        %v4155 = vpop.f32.mrf.mxu0
        %v4156 = vadd.f32 %v3971, %v4155
        %v4157 = vpop.f32.mrf.mxu0
        %4158 = vmatprep.mubr.f32.mxu0 0.0
        %4159 = vmatmul.mubr.f32.gmra.mxu0 %v2753
        %v4160 = vpop.f32.mrf.mxu0
        %v4161 = vadd.f32 %v3976, %v4160
        %v4162 = vpop.f32.mrf.mxu0
        %4163 = vmatprep.mubr.f32.mxu0 0.0
        %4164 = vmatmul.mubr.f32.gmra.mxu0 %v2756
        %v4165 = vpop.f32.mrf.mxu0
        %v4166 = vadd.f32 %v3981, %v4165
        %v4167 = vpop.f32.mrf.mxu0
        %4168 = vmatprep.mubr.f32.mxu0 0.0
        %4169 = vmatmul.mubr.f32.gmra.mxu0 %v2759
        %v4170 = vpop.f32.mrf.mxu0
        %v4171 = vadd.f32 %v3986, %v4170
        %v4172 = vpop.f32.mrf.mxu0
        %4173 = vmatprep.mubr.f32.mxu0 0.0
        %4174 = vmatmul.mubr.f32.gmra.mxu0 %v2762
        %v4175 = vpop.f32.mrf.mxu0
        %v4176 = vadd.f32 %v3991, %v4175
        %v4177 = vpop.f32.mrf.mxu0
        %4178 = vmatprep.mubr.f32.mxu0 0.0
        %4179 = vmatmul.mubr.f32.gmra.mxu0 %v2765
        %v4180 = vpop.f32.mrf.mxu0
        %v4181 = vadd.f32 %v3996, %v4180
        %v4182 = vpop.f32.mrf.mxu0
        %4183 = vmatprep.mubr.f32.mxu0 0.0
        %4184 = vmatmul.mubr.f32.gmra.mxu0 %v2768
        %v4185 = vpop.f32.mrf.mxu0
        %v4186 = vadd.f32 %v4001, %v4185
        %v4187 = vpop.f32.mrf.mxu0
        %4188 = vmatprep.mubr.f32.mxu0 0.0
        %4189 = vmatmul.mubr.f32.gmra.mxu0 %v2771
        %v4190 = vpop.f32.mrf.mxu0
        %v4191 = vadd.f32 %v4006, %v4190
        %v4192 = vpop.f32.mrf.mxu0
        %4193 = vmatprep.mubr.f32.mxu0 0.0
        %4194 = vmatmul.mubr.f32.gmra.mxu0 %v2774
        %v4195 = vpop.f32.mrf.mxu0
        %v4196 = vadd.f32 %v4011, %v4195
        %v4197 = vpop.f32.mrf.mxu0
        %4198 = vmatprep.mubr.f32.mxu0 0.0
        %4199 = vmatmul.mubr.f32.gmra.mxu0 %v2777
        %v4200 = vpop.f32.mrf.mxu0
        %v4201 = vadd.f32 %v4016, %v4200
        %v4202 = vpop.f32.mrf.mxu0
        %4203 = vmatprep.mubr.f32.mxu0 0.0
        %4204 = vmatmul.mubr.f32.gmra.mxu0 %v2780
        %v4205 = vpop.f32.mrf.mxu0
        %v4206 = vadd.f32 %v4021, %v4205
        %v4207 = vpop.f32.mrf.mxu0
        %4208 = vmatprep.mubr.f32.mxu0 0.0
        %4209 = vmatmul.mubr.f32.gmra.mxu0 %v2783
        %v4210 = vpop.f32.mrf.mxu0
        %v4211 = vadd.f32 %v4026, %v4210
        %v4212 = vpop.f32.mrf.mxu0
        %4213 = vmatprep.mubr.f32.mxu0 0.0
        %4214 = vmatmul.mubr.f32.gmra.mxu0 %v2786
        %v4215 = vpop.f32.mrf.mxu0
        %v4216 = vadd.f32 %v4031, %v4215
        %v4217 = vpop.f32.mrf.mxu0
        %4218 = vmatprep.mubr.f32.mxu0 0.0
        %4219 = vmatmul.mubr.f32.gmra.mxu0 %v2789
        %v4220 = vpop.f32.mrf.mxu0
        %v4221 = vadd.f32 %v4036, %v4220
        %v4222 = vpop.f32.mrf.mxu0
        %4223 = vmatprep.mubr.f32.mxu0 0.0
        %4224 = vmatmul.mubr.f32.gmra.mxu0 %v2792
        %v4225 = vpop.f32.mrf.mxu0
        %v4226 = vadd.f32 %v4041, %v4225
        %v4227 = vpop.f32.mrf.mxu0
        %4228 = vmatprep.mubr.f32.mxu0 0.0
        %4229 = vmatmul.mubr.f32.gmra.mxu0 %v2795
        %v4230 = vpop.f32.mrf.mxu0
        %v4231 = vadd.f32 %v4046, %v4230
        %v4232 = vpop.f32.mrf.mxu0
        %4233 = vmatprep.mubr.f32.mxu0 0.0
        %4234 = vmatmul.mubr.f32.gmra.mxu0 %v2798
        %v4235 = vpop.f32.mrf.mxu0
        %v4236 = vadd.f32 %v4051, %v4235
        %v4237 = vpop.f32.mrf.mxu0
        %4238 = vmatprep.mubr.f32.mxu0 0.0
        %4239 = vmatmul.mubr.f32.gmra.mxu0 %v2801
        %v4240 = vpop.f32.mrf.mxu0
        %v4241 = vadd.f32 %v4056, %v4240
        %v4242 = vpop.f32.mrf.mxu0
        %4243 = vmatprep.mubr.f32.mxu0 0.0
        %4244 = vmatmul.mubr.f32.gmra.mxu0 %v2804
        %v4245 = vpop.f32.mrf.mxu0
        %v4246 = vadd.f32 %v4061, %v4245
        %v4247 = vpop.f32.mrf.mxu0
        %4248 = vmatprep.mubr.f32.mxu0 0.0
        %4249 = vmatmul.mubr.f32.gmra.mxu0 %v2807
        %v4250 = vpop.f32.mrf.mxu0
        %v4251 = vadd.f32 %v4066, %v4250
        %v4252 = vpop.f32.mrf.mxu0
        %4253 = vdwg.mxu0
        %v4254 = vrcp.pop %v2499
        %v4255 = vrcp.pop %v2503
        %v4256 = vrcp.pop %v2507
        %v4257 = vrcp.pop %v2511
        %v4258 = vrcp.pop %v2515
        %v4259 = vrcp.pop %v2519
        %v4260 = vrcp.pop %v2523
        %v4261 = vrcp.pop %v2527
        %v4262 = vrcp.pop %v2531
        %v4263 = vrcp.pop %v2535
        %v4264 = vrcp.pop %v2539
        %v4265 = vrcp.pop %v2543
        %v4266 = vrcp.pop %v2547
        %v4267 = vrcp.pop %v2551
        %v4268 = vrcp.pop %v2555
        %v4269 = vrcp.pop %v2559
        %v4270 = vrcp.pop %v2563
        %v4271 = vrcp.pop %v2567
        %v4272 = vrcp.pop %v2571
        %v4273 = vrcp.pop %v2575
        %v4274 = vrcp.pop %v2579
        %v4275 = vrcp.pop %v2583
        %v4276 = vrcp.pop %v2587
        %v4277 = vrcp.pop %v2591
        %v4278 = vmul.f32 %v4254, 1.6666666
        %v4279 = vmul.f32 %v4255, 1.6666666
        %v4280 = vmul.f32 %v4256, 1.6666666
        %v4281 = vmul.f32 %v4257, 1.6666666
        %v4282 = vmul.f32 %v4258, 1.6666666
        %v4283 = vmul.f32 %v4259, 1.6666666
        %v4284 = vmul.f32 %v4260, 1.6666666
        %v4285 = vmul.f32 %v4261, 1.6666666
        %v4286 = vmul.f32 %v4262, 1.6666666
        %v4287 = vmul.f32 %v4263, 1.6666666
        %v4288 = vmul.f32 %v4264, 1.6666666
        %v4289 = vmul.f32 %v4265, 1.6666666
        %v4290 = vmul.f32 %v4266, 1.6666666
        %v4291 = vmul.f32 %v4267, 1.6666666
        %v4292 = vmul.f32 %v4268, 1.6666666
        %v4293 = vmul.f32 %v4269, 1.6666666
        %v4294 = vmul.f32 %v4270, 1.6666666
        %v4295 = vmul.f32 %v4271, 1.6666666
        %v4296 = vmul.f32 %v4272, 1.6666666
        %v4297 = vmul.f32 %v4273, 1.6666666
        %v4298 = vmul.f32 %v4274, 1.6666666
        %v4299 = vmul.f32 %v4275, 1.6666666
        %v4300 = vmul.f32 %v4276, 1.6666666
        %v4301 = vmul.f32 %v4277, 1.6666666
        %v4302 = vmul.f32 %v3324, %v4278
        %v4303 = vmul.f32 %v3326, %v4278
        %v4304 = vmul.f32 %v3742, %v4278
        %v4305 = vmul.f32 %v3744, %v4278
        %v4306 = vmul.f32 %v4136, %v4278
        %v4307 = vmul.f32 %v3330, %v4279
        %v4308 = vmul.f32 %v3332, %v4279
        %v4309 = vmul.f32 %v3748, %v4279
        %v4310 = vmul.f32 %v3750, %v4279
        %v4311 = vmul.f32 %v4141, %v4279
        %v4312 = vmul.f32 %v3336, %v4280
        %v4313 = vmul.f32 %v3338, %v4280
        %v4314 = vmul.f32 %v3754, %v4280
        %v4315 = vmul.f32 %v3756, %v4280
        %v4316 = vmul.f32 %v4146, %v4280
        %v4317 = vmul.f32 %v3342, %v4281
        %v4318 = vmul.f32 %v3344, %v4281
        %v4319 = vmul.f32 %v3760, %v4281
        %v4320 = vmul.f32 %v3762, %v4281
        %v4321 = vmul.f32 %v4151, %v4281
        %v4322 = vmul.f32 %v3348, %v4282
        %v4323 = vmul.f32 %v3350, %v4282
        %v4324 = vmul.f32 %v3766, %v4282
        %v4325 = vmul.f32 %v3768, %v4282
        %v4326 = vmul.f32 %v4156, %v4282
        %v4327 = vmul.f32 %v3354, %v4283
        %v4328 = vmul.f32 %v3356, %v4283
        %v4329 = vmul.f32 %v3772, %v4283
        %v4330 = vmul.f32 %v3774, %v4283
        %v4331 = vmul.f32 %v4161, %v4283
        %v4332 = vmul.f32 %v3360, %v4284
        %v4333 = vmul.f32 %v3362, %v4284
        %v4334 = vmul.f32 %v3778, %v4284
        %v4335 = vmul.f32 %v3780, %v4284
        %v4336 = vmul.f32 %v4166, %v4284
        %v4337 = vmul.f32 %v3366, %v4285
        %v4338 = vmul.f32 %v3368, %v4285
        %v4339 = vmul.f32 %v3784, %v4285
        %v4340 = vmul.f32 %v3786, %v4285
        %v4341 = vmul.f32 %v4171, %v4285
        %v4342 = vmul.f32 %v3372, %v4286
        %v4343 = vmul.f32 %v3374, %v4286
        %v4344 = vmul.f32 %v3790, %v4286
        %v4345 = vmul.f32 %v3792, %v4286
        %v4346 = vmul.f32 %v4176, %v4286
        %v4347 = vmul.f32 %v3378, %v4287
        %v4348 = vmul.f32 %v3380, %v4287
        %v4349 = vmul.f32 %v3796, %v4287
        %v4350 = vmul.f32 %v3798, %v4287
        %v4351 = vmul.f32 %v4181, %v4287
        %v4352 = vmul.f32 %v3384, %v4288
        %v4353 = vmul.f32 %v3386, %v4288
        %v4354 = vmul.f32 %v3802, %v4288
        %v4355 = vmul.f32 %v3804, %v4288
        %v4356 = vmul.f32 %v4186, %v4288
        %v4357 = vmul.f32 %v3390, %v4289
        %v4358 = vmul.f32 %v3392, %v4289
        %v4359 = vmul.f32 %v3808, %v4289
        %v4360 = vmul.f32 %v3810, %v4289
        %v4361 = vmul.f32 %v4191, %v4289
        %v4362 = vmul.f32 %v3396, %v4290
        %v4363 = vmul.f32 %v3398, %v4290
        %v4364 = vmul.f32 %v3814, %v4290
        %v4365 = vmul.f32 %v3816, %v4290
        %v4366 = vmul.f32 %v4196, %v4290
        %v4367 = vmul.f32 %v3402, %v4291
        %v4368 = vmul.f32 %v3404, %v4291
        %v4369 = vmul.f32 %v3820, %v4291
        %v4370 = vmul.f32 %v3822, %v4291
        %v4371 = vmul.f32 %v4201, %v4291
        %v4372 = vmul.f32 %v3408, %v4292
        %v4373 = vmul.f32 %v3410, %v4292
        %v4374 = vmul.f32 %v3826, %v4292
        %v4375 = vmul.f32 %v3828, %v4292
        %v4376 = vmul.f32 %v4206, %v4292
        %v4377 = vmul.f32 %v3414, %v4293
        %v4378 = vmul.f32 %v3416, %v4293
        %v4379 = vmul.f32 %v3832, %v4293
        %v4380 = vmul.f32 %v3834, %v4293
        %v4381 = vmul.f32 %v4211, %v4293
        %v4382 = vmul.f32 %v3420, %v4294
        %v4383 = vmul.f32 %v3422, %v4294
        %v4384 = vmul.f32 %v3838, %v4294
        %v4385 = vmul.f32 %v3840, %v4294
        %v4386 = vmul.f32 %v4216, %v4294
        %v4387 = vmul.f32 %v3426, %v4295
        %v4388 = vmul.f32 %v3428, %v4295
        %v4389 = vmul.f32 %v3844, %v4295
        %v4390 = vmul.f32 %v3846, %v4295
        %v4391 = vmul.f32 %v4221, %v4295
        %v4392 = vmul.f32 %v3432, %v4296
        %v4393 = vmul.f32 %v3434, %v4296
        %v4394 = vmul.f32 %v3850, %v4296
        %v4395 = vmul.f32 %v3852, %v4296
        %v4396 = vmul.f32 %v4226, %v4296
        %v4397 = vmul.f32 %v3438, %v4297
        %v4398 = vmul.f32 %v3440, %v4297
        %v4399 = vmul.f32 %v3856, %v4297
        %v4400 = vmul.f32 %v3858, %v4297
        %v4401 = vmul.f32 %v4231, %v4297
        %v4402 = vmul.f32 %v3444, %v4298
        %v4403 = vmul.f32 %v3446, %v4298
        %v4404 = vmul.f32 %v3862, %v4298
        %v4405 = vmul.f32 %v3864, %v4298
        %v4406 = vmul.f32 %v4236, %v4298
        %v4407 = vmul.f32 %v3450, %v4299
        %v4408 = vmul.f32 %v3452, %v4299
        %v4409 = vmul.f32 %v3868, %v4299
        %v4410 = vmul.f32 %v3870, %v4299
        %v4411 = vmul.f32 %v4241, %v4299
        %v4412 = vmul.f32 %v3456, %v4300
        %v4413 = vmul.f32 %v3458, %v4300
        %v4414 = vmul.f32 %v3874, %v4300
        %v4415 = vmul.f32 %v3876, %v4300
        %v4416 = vmul.f32 %v4246, %v4300
        %v4417 = vmul.f32 %v3462, %v4301
        %v4418 = vmul.f32 %v3464, %v4301
        %v4419 = vmul.f32 %v3880, %v4301
        %v4420 = vmul.f32 %v3882, %v4301
        %v4421 = vmul.f32 %v4251, %v4301
        %4422 = vst [vmem:[%s421] sm:$0xff] %v4302
        %4423 = vst [vmem:[%s421 + $0x8] sm:$0xff] %v4303
        %4424 = vst [vmem:[%s421 + $0x10] sm:$0xff] %v4304
        %4425 = vst [vmem:[%s421 + $0x18] sm:$0xff] %v4305
        %4426 = vst [vmem:[%s421 + $0x20] sm:$0xff] %v4306
        %4427 = vst [vmem:[%s421 + $0x28] sm:$0xff] %v4307
        %4428 = vst [vmem:[%s421 + $0x30] sm:$0xff] %v4308
        %4429 = vst [vmem:[%s421 + $0x38] sm:$0xff] %v4309
        %4430 = vst [vmem:[%s421 + $0x40] sm:$0xff] %v4310
        %4431 = vst [vmem:[%s421 + $0x48] sm:$0xff] %v4311
        %4432 = vst [vmem:[%s421 + $0x50] sm:$0xff] %v4312
        %4433 = vst [vmem:[%s421 + $0x58] sm:$0xff] %v4313
        %4434 = vst [vmem:[%s421 + $0x60] sm:$0xff] %v4314
        %4435 = vst [vmem:[%s421 + $0x68] sm:$0xff] %v4315
        %4436 = vst [vmem:[%s421 + $0x70] sm:$0xff] %v4316
        %4437 = vst [vmem:[%s421 + $0x78] sm:$0xff] %v4317
        %4438 = vst [vmem:[%s421 + $0x80] sm:$0xff] %v4318
        %4439 = vst [vmem:[%s421 + $0x88] sm:$0xff] %v4319
        %4440 = vst [vmem:[%s421 + $0x90] sm:$0xff] %v4320
        %4441 = vst [vmem:[%s421 + $0x98] sm:$0xff] %v4321
        %4442 = vst [vmem:[%s421 + $0xa0] sm:$0xff] %v4322
        %4443 = vst [vmem:[%s421 + $0xa8] sm:$0xff] %v4323
        %4444 = vst [vmem:[%s421 + $0xb0] sm:$0xff] %v4324
        %4445 = vst [vmem:[%s421 + $0xb8] sm:$0xff] %v4325
        %4446 = vst [vmem:[%s421 + $0xc0] sm:$0xff] %v4326
        %4447 = vst [vmem:[%s421 + $0xc8] sm:$0xff] %v4327
        %4448 = vst [vmem:[%s421 + $0xd0] sm:$0xff] %v4328
        %4449 = vst [vmem:[%s421 + $0xd8] sm:$0xff] %v4329
        %4450 = vst [vmem:[%s421 + $0xe0] sm:$0xff] %v4330
        %4451 = vst [vmem:[%s421 + $0xe8] sm:$0xff] %v4331
        %4452 = vst [vmem:[%s421 + $0xf0] sm:$0xff] %v4332
        %4453 = vst [vmem:[%s421 + $0xf8] sm:$0xff] %v4333
        %4454 = vst [vmem:[%s421 + $0x100] sm:$0xff] %v4334
        %4455 = vst [vmem:[%s421 + $0x108] sm:$0xff] %v4335
        %4456 = vst [vmem:[%s421 + $0x110] sm:$0xff] %v4336
        %4457 = vst [vmem:[%s421 + $0x118] sm:$0xff] %v4337
        %4458 = vst [vmem:[%s421 + $0x120] sm:$0xff] %v4338
        %4459 = vst [vmem:[%s421 + $0x128] sm:$0xff] %v4339
        %4460 = vst [vmem:[%s421 + $0x130] sm:$0xff] %v4340
        %4461 = vst [vmem:[%s421 + $0x138] sm:$0xff] %v4341
        %4462 = vst [vmem:[%s421 + $0x140] sm:$0xff] %v4342
        %4463 = vst [vmem:[%s421 + $0x148] sm:$0xff] %v4343
        %4464 = vst [vmem:[%s421 + $0x150] sm:$0xff] %v4344
        %4465 = vst [vmem:[%s421 + $0x158] sm:$0xff] %v4345
        %4466 = vst [vmem:[%s421 + $0x160] sm:$0xff] %v4346
        %4467 = vst [vmem:[%s421 + $0x168] sm:$0xff] %v4347
        %4468 = vst [vmem:[%s421 + $0x170] sm:$0xff] %v4348
        %4469 = vst [vmem:[%s421 + $0x178] sm:$0xff] %v4349
        %4470 = vst [vmem:[%s421 + $0x180] sm:$0xff] %v4350
        %4471 = vst [vmem:[%s421 + $0x188] sm:$0xff] %v4351
        %4472 = vst [vmem:[%s421 + $0x190] sm:$0xff] %v4352
        %4473 = vst [vmem:[%s421 + $0x198] sm:$0xff] %v4353
        %4474 = vst [vmem:[%s421 + $0x1a0] sm:$0xff] %v4354
        %4475 = vst [vmem:[%s421 + $0x1a8] sm:$0xff] %v4355
        %4476 = vst [vmem:[%s421 + $0x1b0] sm:$0xff] %v4356
        %4477 = vst [vmem:[%s421 + $0x1b8] sm:$0xff] %v4357
        %4478 = vst [vmem:[%s421 + $0x1c0] sm:$0xff] %v4358
        %4479 = vst [vmem:[%s421 + $0x1c8] sm:$0xff] %v4359
        %4480 = vst [vmem:[%s421 + $0x1d0] sm:$0xff] %v4360
        %4481 = vst [vmem:[%s421 + $0x1d8] sm:$0xff] %v4361
        %4482 = vst [vmem:[%s421 + $0x1e0] sm:$0xff] %v4362
        %4483 = vst [vmem:[%s421 + $0x1e8] sm:$0xff] %v4363
        %4484 = vst [vmem:[%s421 + $0x1f0] sm:$0xff] %v4364
        %4485 = vst [vmem:[%s421 + $0x1f8] sm:$0xff] %v4365
        %4486 = vst [vmem:[%s421 + $0x200] sm:$0xff] %v4366
        %4487 = vst [vmem:[%s421 + $0x208] sm:$0xff] %v4367
        %4488 = vst [vmem:[%s421 + $0x210] sm:$0xff] %v4368
        %4489 = vst [vmem:[%s421 + $0x218] sm:$0xff] %v4369
        %4490 = vst [vmem:[%s421 + $0x220] sm:$0xff] %v4370
        %4491 = vst [vmem:[%s421 + $0x228] sm:$0xff] %v4371
        %4492 = vst [vmem:[%s421 + $0x230] sm:$0xff] %v4372
        %4493 = vst [vmem:[%s421 + $0x238] sm:$0xff] %v4373
        %4494 = vst [vmem:[%s421 + $0x240] sm:$0xff] %v4374
        %4495 = vst [vmem:[%s421 + $0x248] sm:$0xff] %v4375
        %4496 = vst [vmem:[%s421 + $0x250] sm:$0xff] %v4376
        %4497 = vst [vmem:[%s421 + $0x258] sm:$0xff] %v4377
        %4498 = vst [vmem:[%s421 + $0x260] sm:$0xff] %v4378
        %4499 = vst [vmem:[%s421 + $0x268] sm:$0xff] %v4379
        %4500 = vst [vmem:[%s421 + $0x270] sm:$0xff] %v4380
        %4501 = vst [vmem:[%s421 + $0x278] sm:$0xff] %v4381
        %4502 = vst [vmem:[%s421 + $0x280] sm:$0xff] %v4382
        %4503 = vst [vmem:[%s421 + $0x288] sm:$0xff] %v4383
        %4504 = vst [vmem:[%s421 + $0x290] sm:$0xff] %v4384
        %4505 = vst [vmem:[%s421 + $0x298] sm:$0xff] %v4385
        %4506 = vst [vmem:[%s421 + $0x2a0] sm:$0xff] %v4386
        %4507 = vst [vmem:[%s421 + $0x2a8] sm:$0xff] %v4387
        %4508 = vst [vmem:[%s421 + $0x2b0] sm:$0xff] %v4388
        %4509 = vst [vmem:[%s421 + $0x2b8] sm:$0xff] %v4389
        %4510 = vst [vmem:[%s421 + $0x2c0] sm:$0xff] %v4390
        %4511 = vst [vmem:[%s421 + $0x2c8] sm:$0xff] %v4391
        %4512 = vst [vmem:[%s421 + $0x2d0] sm:$0xff] %v4392
        %4513 = vst [vmem:[%s421 + $0x2d8] sm:$0xff] %v4393
        %4514 = vst [vmem:[%s421 + $0x2e0] sm:$0xff] %v4394
        %4515 = vst [vmem:[%s421 + $0x2e8] sm:$0xff] %v4395
        %4516 = vst [vmem:[%s421 + $0x2f0] sm:$0xff] %v4396
        %4517 = vst [vmem:[%s421 + $0x2f8] sm:$0xff] %v4397
        %4518 = vst [vmem:[%s421 + $0x300] sm:$0xff] %v4398
        %4519 = vst [vmem:[%s421 + $0x308] sm:$0xff] %v4399
        %4520 = vst [vmem:[%s421 + $0x310] sm:$0xff] %v4400
        %4521 = vst [vmem:[%s421 + $0x318] sm:$0xff] %v4401
        %4522 = vst [vmem:[%s421 + $0x320] sm:$0xff] %v4402
        %4523 = vst [vmem:[%s421 + $0x328] sm:$0xff] %v4403
        %4524 = vst [vmem:[%s421 + $0x330] sm:$0xff] %v4404
        %4525 = vst [vmem:[%s421 + $0x338] sm:$0xff] %v4405
        %4526 = vst [vmem:[%s421 + $0x340] sm:$0xff] %v4406
        %4527 = vst [vmem:[%s421 + $0x348] sm:$0xff] %v4407
        %4528 = vst [vmem:[%s421 + $0x350] sm:$0xff] %v4408
        %4529 = vst [vmem:[%s421 + $0x358] sm:$0xff] %v4409
        %4530 = vst [vmem:[%s421 + $0x360] sm:$0xff] %v4410
        %4531 = vst [vmem:[%s421 + $0x368] sm:$0xff] %v4411
        %4532 = vst [vmem:[%s421 + $0x370] sm:$0xff] %v4412
        %4533 = vst [vmem:[%s421 + $0x378] sm:$0xff] %v4413
        %4534 = vst [vmem:[%s421 + $0x380] sm:$0xff] %v4414
        %4535 = vst [vmem:[%s421 + $0x388] sm:$0xff] %v4415
        %4536 = vst [vmem:[%s421 + $0x390] sm:$0xff] %v4416
        %4537 = vst [vmem:[%s421 + $0x398] sm:$0xff] %v4417
        %4538 = vst [vmem:[%s421 + $0x3a0] sm:$0xff] %v4418
        %4539 = vst [vmem:[%s421 + $0x3a8] sm:$0xff] %v4419
        %4540 = vst [vmem:[%s421 + $0x3b0] sm:$0xff] %v4420
        %4541 = vst [vmem:[%s421 + $0x3b8] sm:$0xff] %v4421
        %s4542 = sand.u32 %s184, 1
        %s4543 = scalar_lea.sflag [#allocation4], %s4542
        %s4544 = sand.u32 %s184, 1
        %s4545 = smul.addr %s4544, 960
        %s4546 = scalar_lea.vmem [#allocation11], %s4545
        // Predicated region
        $region61: #{attention_dropout.1} parent=39 // pred_check
          %p4547 = pneg %p194
        $region62: #{attention_dropout.1} parent=39 // pred_check_branch
          %4549 = sbr.rel (%p4547) target = $region64
        $region63: #{attention_dropout.1} parent=39 // pred_region
          %s4550 = smul.u32 24, %s33
          %s4552 = ssub.s32 15360, 15360
          %4553 = vsyncadd %s4543, %s4552
          %s4554 = smul.addr %s4550, 5
          %s4555 = smul.addr %s32, 240
          %s4556 = sadd.s32 %s4554, %s4555
          %s4557 = smul.addr %s4556, 128
          %s4558 = scalar_lea.hbm %s5, %s4557
          %s4559 = sshll.u32 %s4546, 4
          %s4560 = int_to_ptr.vmem [resolvable:$true] %s4559
          %4565 = dma.vmem_to_hbm [thread:$0]  %s4560, 15360, %s4558, %s4543, 640, 640, 40
        $region64: #{attention_dropout.1} parent=39 // pred_fallthru
          _
      $region40: #{attention_dropout.1} parent=5 // pred_fallthru
        _
      %p4566 = scmp.le.s32.totalorder 2, %s23
      // Predicated region
      $region65: #{attention_dropout.1} parent=5 // pred_check
        %p4567 = pneg %p4566
      $region66: #{attention_dropout.1} parent=5 // pred_check_branch
        %4569 = sbr.rel (%p4567) target = $region68
      $region67: #{attention_dropout.1} parent=5 // pred_region
        %s4570 = ssub.s32 %s23, 2
        // Predicated region
        $region69: #{attention_dropout.1} parent=67 // pred_check
          %p4571 = pneg %p200
        $region70: #{attention_dropout.1} parent=67 // pred_check_branch
          %4573 = sbr.rel (%p4571) target = $region72
        $region71: #{attention_dropout.1} parent=67 // pred_region
          %s4574 = sand.u32 %s185, 1
          %s4575 = scalar_lea.sflag [#allocation4], %s4574
          %s4576 = sand.u32 %s185, 1
          %s4577 = smul.addr %s4576, 960
          %s4578 = scalar_lea.vmem [#allocation11], %s4577
          %4579 = dma.done %s4575, 15360
        $region72: #{attention_dropout.1} parent=67 // pred_fallthru
          _
      $region68: #{attention_dropout.1} parent=5 // pred_fallthru
        _
    $region6: #{attention_dropout.1} parent=1 // loop_footer
      %s27 = sadd.s32 1, %s23
    $region7: #{attention_dropout.1} parent=1 // loop_footer_branch
      %22 = sbr.rel target = $region3
    $region8: #{attention_dropout.1} parent=1 // loop_exit
      _
    %4580 = vsyncpa [#allocation3], 1
    %s4581 = scalar_lea.sflag [#allocation3], 1
    %4582 = vsyncpa %s4581, 1
    %4583 = vsyncpa [#allocation6], 1
    %s4584 = scalar_lea.sflag [#allocation6], 1
    %4585 = vsyncpa %s4584, 1
    %4586 = vsyncpa [#allocation9], 1
    %s4587 = scalar_lea.sflag [#allocation9], 1
    %4588 = vsyncpa %s4587, 1
    %4589 = vsyncpa [#allocation4], 1
    %s4590 = scalar_lea.sflag [#allocation4], 1
    %4591 = vsyncpa %s4590, 1

</llo_original>
